<compile_context>
chip_gen: v5e
topology: v5e:2x2
jax: 0.10.0
libtpu: 0.0.40
codegen_flags: <defaults>
</compile_context>

<pallas_src>
import jax
import jax.numpy as jnp
from jax.experimental import pallas as pl
from jax.experimental.pallas import tpu as pltpu

# ----------------------------- config ---------------------------------------
VOCAB = 512
D_MODEL = 128
N_HEADS = 4
HEAD_DIM = D_MODEL // N_HEADS
FFN_DIM = 256
MAX_POS = 64
PAD_ID = 1
DECODER_START_ID = 2
LN_EPS = 1e-5
NEG_INF = -1e9
POS_OFFSET = 2  # HF BartLearnedPositionalEmbedding offset


# ----------------------------- in-kernel helpers -----------------------------
def _mm(x_f32, w_bf16):
    """MXU matmul: cast activation to bf16, keep f32 accumulation."""
    return jnp.dot(x_f32.astype(jnp.bfloat16), w_bf16,
                   preferred_element_type=jnp.float32)


def _ln(x, g, b):
    """LayerNorm over the last dim (f32)."""
    mu = jnp.mean(x, axis=-1, keepdims=True)
    xc = x - mu
    var = jnp.mean(xc * xc, axis=-1, keepdims=True)
    return xc * jax.lax.rsqrt(var + LN_EPS) * g.astype(jnp.float32) + b.astype(jnp.float32)


def _mha(q, k, v, mask_add, wo_bf16):
    """Multi-head attention with the output projection folded into the head loop.

    q:(Tq,D) k,v:(Tk,D) f32, mask_add broadcastable to (Tq,Tk) f32,
    wo_bf16:(D,D) bf16.  Returns (Tq, D) f32 (output projection applied, bias not).
    concat_h(o_h) @ Wo == sum_h o_h @ Wo[h*dh:(h+1)*dh, :]  -> no concatenate needed.
    """
    scale = 1.0 / (HEAD_DIM ** 0.5)
    acc = None
    for hi in range(N_HEADS):
        sl = slice(hi * HEAD_DIM, (hi + 1) * HEAD_DIM)
        qh = q[:, sl].astype(jnp.bfloat16)
        kh = k[:, sl].astype(jnp.bfloat16)
        vh = v[:, sl].astype(jnp.bfloat16)
        # scores in f32 (mask / max-subtraction must stay f32)
        s = jax.lax.dot_general(qh, kh, (((1,), (1,)), ((), ())),
                                preferred_element_type=jnp.float32) * scale
        s = s + mask_add
        s = s - jnp.max(s, axis=-1, keepdims=True)
        p = jnp.exp(s)
        p = p * pl.reciprocal(jnp.sum(p, axis=-1, keepdims=True), approx=True)
        oh = jnp.dot(p.astype(jnp.bfloat16), vh,
                     preferred_element_type=jnp.float32)                 # (Tq, dh)
        contrib = jnp.dot(oh.astype(jnp.bfloat16), wo_bf16[sl, :],
                          preferred_element_type=jnp.float32)            # (Tq, D)
        acc = contrib if acc is None else acc + contrib
    return acc


# -------------------- fully fused encoder+decoder+LM-head+CE -----------------
def _bart_fused_kernel(
    # per-batch data
    pad_ref, x_ref, d_ref, lab_ref,
    # encoder layer params
    eg_ref, eb_ref, ewqkv_ref, ebqkv_ref, ewo_ref, ebo_ref,
    eln1g_ref, eln1b_ref, ew1_ref, eb1_ref, ew2_ref, eb2_ref,
    eln2g_ref, eln2b_ref,
    # decoder layer params
    dg_ref, db_ref, swqkv_ref, sbqkv_ref, swo_ref, sbo_ref,
    dln1g_ref, dln1b_ref, cwq_ref, cbq_ref, cwkv_ref, cbkv_ref,
    cwo_ref, cbo_ref, dln2g_ref, dln2b_ref,
    dw1_ref, db1_ref, dw2_ref, db2_ref, dln3g_ref, dln3b_ref,
    # tied LM head
    emb_ref, lbias_ref,
    # output: per-token masked CE loss
    loss_ref,
):
    # ---------------- encoder layer ----------------
    x = x_ref[0].astype(jnp.float32)                                   # (S, D)
    pad_add = (1.0 - pad_ref[0].astype(jnp.float32)) * NEG_INF         # (1, S)

    h = _ln(x, eg_ref[...], eb_ref[...])                               # embedding LN
    qkv = _mm(h, ewqkv_ref[...]) + ebqkv_ref[...]                      # (S, 3D)
    a = _mha(qkv[:, :D_MODEL], qkv[:, D_MODEL:2 * D_MODEL], qkv[:, 2 * D_MODEL:],
             pad_add, ewo_ref[...]) + ebo_ref[...]
    h = _ln(h + a, eln1g_ref[...], eln1b_ref[...])                     # residual in LN
    f = jax.nn.gelu(_mm(h, ew1_ref[...]) + eb1_ref[...])
    f = _mm(f, ew2_ref[...]) + eb2_ref[...]
    e_hidden = _ln(h + f, eln2g_ref[...], eln2b_ref[...])              # (S, D), stays in VMEM

    # ---------------- decoder layer ----------------
    T = d_ref.shape[1]
    d = d_ref[0].astype(jnp.float32)                                   # (T, D)
    h = _ln(d, dg_ref[...], db_ref[...])                               # embedding LN

    # causal self-attention (mask generated in-kernel via iota)
    qkv = _mm(h, swqkv_ref[...]) + sbqkv_ref[...]
    row = jax.lax.broadcasted_iota(jnp.int32, (T, T), 0)
    col = jax.lax.broadcasted_iota(jnp.int32, (T, T), 1)
    causal_add = jnp.where(col <= row, 0.0, NEG_INF).astype(jnp.float32)
    a = _mha(qkv[:, :D_MODEL], qkv[:, D_MODEL:2 * D_MODEL], qkv[:, 2 * D_MODEL:],
             causal_add, swo_ref[...]) + sbo_ref[...]
    h = _ln(h + a, dln1g_ref[...], dln1b_ref[...])

    # cross-attention over encoder states (same padding mask)
    q = _mm(h, cwq_ref[...]) + cbq_ref[...]
    kv = _mm(e_hidden, cwkv_ref[...]) + cbkv_ref[...]                  # (S, 2D) fused K,V
    a = _mha(q, kv[:, :D_MODEL], kv[:, D_MODEL:], pad_add,
             cwo_ref[...]) + cbo_ref[...]
    h = _ln(h + a, dln2g_ref[...], dln2b_ref[...])

    # FFN
    f = jax.nn.gelu(_mm(h, dw1_ref[...]) + db1_ref[...])
    f = _mm(f, dw2_ref[...]) + db2_ref[...]
    h = _ln(h + f, dln3g_ref[...], dln3b_ref[...])                     # (T, D)

    # ------------- tied LM head + per-token cross-entropy -------------
    logits = jax.lax.dot_general(h.astype(jnp.bfloat16), emb_ref[...],
                                 (((1,), (1,)), ((), ())),
                                 preferred_element_type=jnp.float32)   # (T, V)
    logits = logits + lbias_ref[...].astype(jnp.float32)

    m = jnp.max(logits, axis=-1, keepdims=True)
    lse = m + jnp.log(jnp.sum(jnp.exp(logits - m), axis=-1, keepdims=True))   # (T, 1)

    labels = lab_ref[0]                                                # (T, 1) int32
    col_v = jax.lax.broadcasted_iota(jnp.int32, logits.shape, 1)
    gold = jnp.sum(jnp.where(col_v == labels, logits, 0.0),
                   axis=-1, keepdims=True)                             # (T, 1)
    valid = (labels != -100).astype(jnp.float32)                       # HF ignore_index
    loss_ref[0] = ((lse - gold) * valid).astype(loss_ref.dtype)        # masked per-token loss


def bart_fused_per_token_loss(params, x, d, padmask, labels3):
    """x:(B,S,D) f32, d:(B,T,D) f32, padmask:(B,1,S) f32, labels3:(B,T,1) int32
    -> (B,T,1) f32 masked per-token CE loss."""
    B, S, D = x.shape
    T = d.shape[1]
    V = params["tok_emb"].shape[0]
    bf = jnp.bfloat16
    enc, dec = params["enc"], params["dec"]

    inputs, specs = [], []

    def add(arr, spec):
        inputs.append(arr)
        specs.append(spec)

    def add_full(arr):
        n = arr.ndim
        add(arr, pl.BlockSpec(arr.shape, lambda b, _n=n: (0,) * _n))

    # per-batch data
    add(padmask, pl.BlockSpec((1, 1, S), lambda b: (b, 0, 0)))
    add(x,       pl.BlockSpec((1, S, D), lambda b: (b, 0, 0)))
    add(d,       pl.BlockSpec((1, T, D), lambda b: (b, 0, 0)))
    add(labels3, pl.BlockSpec((1, T, 1), lambda b: (b, 0, 0)))

    # encoder layer params
    add_full(enc["emb_ln"]["g"].reshape(1, D)); add_full(enc["emb_ln"]["b"].reshape(1, D))
    add_full(enc["attn"]["wqkv"].astype(bf));   add_full(enc["attn"]["bqkv"].reshape(1, 3 * D))
    add_full(enc["attn"]["wo"].astype(bf));     add_full(enc["attn"]["bo"].reshape(1, D))
    add_full(enc["ln1"]["g"].reshape(1, D));    add_full(enc["ln1"]["b"].reshape(1, D))
    add_full(enc["ffn"]["w1"].astype(bf));      add_full(enc["ffn"]["b1"].reshape(1, FFN_DIM))
    add_full(enc["ffn"]["w2"].astype(bf));      add_full(enc["ffn"]["b2"].reshape(1, D))
    add_full(enc["ln2"]["g"].reshape(1, D));    add_full(enc["ln2"]["b"].reshape(1, D))

    # decoder layer params
    add_full(dec["emb_ln"]["g"].reshape(1, D)); add_full(dec["emb_ln"]["b"].reshape(1, D))
    add_full(dec["self_attn"]["wqkv"].astype(bf))
    add_full(dec["self_attn"]["bqkv"].reshape(1, 3 * D))
    add_full(dec["self_attn"]["wo"].astype(bf))
    add_full(dec["self_attn"]["bo"].reshape(1, D))
    add_full(dec["ln1"]["g"].reshape(1, D));    add_full(dec["ln1"]["b"].reshape(1, D))
    add_full(dec["cross_attn"]["wq"].astype(bf)); add_full(dec["cross_attn"]["bq"].reshape(1, D))
    add_full(dec["cross_attn"]["wkv"].astype(bf)); add_full(dec["cross_attn"]["bkv"].reshape(1, 2 * D))
    add_full(dec["cross_attn"]["wo"].astype(bf));  add_full(dec["cross_attn"]["bo"].reshape(1, D))
    add_full(dec["ln2"]["g"].reshape(1, D));    add_full(dec["ln2"]["b"].reshape(1, D))
    add_full(dec["ffn"]["w1"].astype(bf));      add_full(dec["ffn"]["b1"].reshape(1, FFN_DIM))
    add_full(dec["ffn"]["w2"].astype(bf));      add_full(dec["ffn"]["b2"].reshape(1, D))
    add_full(dec["ln3"]["g"].reshape(1, D));    add_full(dec["ln3"]["b"].reshape(1, D))

    # tied LM head (untransposed embedding, contraction on D) + bias
    add_full(params["tok_emb"].astype(bf))
    add_full(params["final_logits_bias"].reshape(1, V))

    return pl.pallas_call(
        _bart_fused_kernel,
        out_shape=jax.ShapeDtypeStruct((B, T, 1), jnp.float32),
        grid=(B,),
        in_specs=specs,
        out_specs=pl.BlockSpec((1, T, 1), lambda b: (b, 0, 0)),
        compiler_params=pltpu.CompilerParams(dimension_semantics=("parallel",)),
    )(*inputs)


# ----------------------------- parameters ------------------------------------
def init_params(key):
    ks = iter(jax.random.split(key, 16))
    nrm = lambda k, shape: jax.random.normal(k, shape, jnp.float32) * 0.02
    ln = lambda: {"g": jnp.ones((D_MODEL,), jnp.float32),
                  "b": jnp.zeros((D_MODEL,), jnp.float32)}

    def attn_fused():
        return {"wqkv": nrm(next(ks), (D_MODEL, 3 * D_MODEL)),
                "bqkv": jnp.zeros((3 * D_MODEL,), jnp.float32),
                "wo": nrm(next(ks), (D_MODEL, D_MODEL)),
                "bo": jnp.zeros((D_MODEL,), jnp.float32)}

    def ffn_block():
        return {"w1": nrm(next(ks), (D_MODEL, FFN_DIM)),
                "b1": jnp.zeros((FFN_DIM,), jnp.float32),
                "w2": nrm(next(ks), (FFN_DIM, D_MODEL)),
                "b2": jnp.zeros((D_MODEL,), jnp.float32)}

    return {
        "tok_emb": nrm(next(ks), (VOCAB, D_MODEL)),
        # +POS_OFFSET rows: HF BartLearnedPositionalEmbedding indexes with +2 offset
        "pos_emb": nrm(next(ks), (MAX_POS + POS_OFFSET, D_MODEL)),
        "final_logits_bias": jnp.zeros((VOCAB,), jnp.float32),
        "enc": {"emb_ln": ln(), "attn": attn_fused(), "ln1": ln(),
                "ffn": ffn_block(), "ln2": ln()},
        "dec": {"emb_ln": ln(), "self_attn": attn_fused(), "ln1": ln(),
                "cross_attn": {"wq": nrm(next(ks), (D_MODEL, D_MODEL)),
                               "bq": jnp.zeros((D_MODEL,), jnp.float32),
                               "wkv": nrm(next(ks), (D_MODEL, 2 * D_MODEL)),
                               "bkv": jnp.zeros((2 * D_MODEL,), jnp.float32),
                               "wo": nrm(next(ks), (D_MODEL, D_MODEL)),
                               "bo": jnp.zeros((D_MODEL,), jnp.float32)},
                "ln2": ln(), "ffn": ffn_block(), "ln3": ln()},
    }


# ----------------------------- model glue ------------------------------------
def shift_tokens_right(labels, pad_id, start_id):
    dec = jnp.full_like(labels, pad_id)
    dec = dec.at[:, 1:].set(labels[:, :-1])
    dec = dec.at[:, 0].set(start_id)
    dec = jnp.where(dec == -100, pad_id, dec)
    return dec


def bart_forward_loss(params, input_ids, attention_mask, labels):
    """Replicates BartDecodeModel.forward(..., labels=labels) -> scalar loss."""
    B, S = input_ids.shape
    _, T = labels.shape

    # global_attention_mask is built in the reference forward but unused for BART.
    global_attention_mask = jnp.zeros_like(input_ids).at[:, 0].set(1)
    del global_attention_mask

    padmask = attention_mask.astype(jnp.float32).reshape(B, 1, S)

    # embedding lookups (gather) kept in XLA; embedding LayerNorm is in-kernel
    pos = jnp.arange(S) + POS_OFFSET
    x = params["tok_emb"][input_ids] + params["pos_emb"][pos][None, :, :]      # (B, S, D)

    decoder_input_ids = shift_tokens_right(labels, PAD_ID, DECODER_START_ID)
    dpos = jnp.arange(T) + POS_OFFSET
    d = params["tok_emb"][decoder_input_ids] + params["pos_emb"][dpos][None, :, :]  # (B, T, D)

    labels3 = labels.reshape(B, T, 1).astype(jnp.int32)

    # fully fused encoder + decoder + tied LM head + per-token CE
    per_tok = bart_fused_per_token_loss(params, x, d, padmask, labels3)        # (B, T, 1)

    valid = (labels != -100).astype(jnp.float32)                               # ignore_index
    loss = jnp.sum(per_tok) / jnp.maximum(jnp.sum(valid), 1.0)
    return loss

    # TODO(synk): labels=None branch (beam-search generate + tokenizer decode) has
    # no Pallas equivalent and is intentionally not implemented.


# ----------------------------- main ------------------------------------------
if __name__ == "__main__":
    key = jax.random.PRNGKey(0)
    k_param, k_ids, k_lab = jax.random.split(key, 3)

    params = init_params(k_param)

    B, S_ENC, S_DEC = 2, 16, 16
    input_ids = jax.random.randint(k_ids, (B, S_ENC), 0, VOCAB, dtype=jnp.int32)
    attention_mask = jnp.ones((B, S_ENC), jnp.int32).at[1, S_ENC - 4:].set(0)
    labels = jax.random.randint(k_lab, (B, S_DEC), 0, VOCAB, dtype=jnp.int32)

    loss = jax.jit(bart_forward_loss)(params, input_ids, attention_mask, labels)
    loss = jax.block_until_ready(loss)
    assert loss.shape == () and jnp.isfinite(loss)
    print("KERNEL_OK")
</pallas_src>

<mosaic_0001>
module attributes {stable_mosaic.version = 11 : i64} {
  func.func @_bart_fused_kernel(%arg0: i32, %arg1: memref<1x1x16xf32, #tpu.memory_space<vmem>>, %arg2: memref<1x16x128xf32, #tpu.memory_space<vmem>>, %arg3: memref<1x16x128xf32, #tpu.memory_space<vmem>>, %arg4: memref<1x16x1xi32, #tpu.memory_space<vmem>>, %arg5: memref<1x128xf32, #tpu.memory_space<vmem>>, %arg6: memref<1x128xf32, #tpu.memory_space<vmem>>, %arg7: memref<128x384xbf16, #tpu.memory_space<vmem>>, %arg8: memref<1x384xf32, #tpu.memory_space<vmem>>, %arg9: memref<128x128xbf16, #tpu.memory_space<vmem>>, %arg10: memref<1x128xf32, #tpu.memory_space<vmem>>, %arg11: memref<1x128xf32, #tpu.memory_space<vmem>>, %arg12: memref<1x128xf32, #tpu.memory_space<vmem>>, %arg13: memref<128x256xbf16, #tpu.memory_space<vmem>>, %arg14: memref<1x256xf32, #tpu.memory_space<vmem>>, %arg15: memref<256x128xbf16, #tpu.memory_space<vmem>>, %arg16: memref<1x128xf32, #tpu.memory_space<vmem>>, %arg17: memref<1x128xf32, #tpu.memory_space<vmem>>, %arg18: memref<1x128xf32, #tpu.memory_space<vmem>>, %arg19: memref<1x128xf32, #tpu.memory_space<vmem>>, %arg20: memref<1x128xf32, #tpu.memory_space<vmem>>, %arg21: memref<128x384xbf16, #tpu.memory_space<vmem>>, %arg22: memref<1x384xf32, #tpu.memory_space<vmem>>, %arg23: memref<128x128xbf16, #tpu.memory_space<vmem>>, %arg24: memref<1x128xf32, #tpu.memory_space<vmem>>, %arg25: memref<1x128xf32, #tpu.memory_space<vmem>>, %arg26: memref<1x128xf32, #tpu.memory_space<vmem>>, %arg27: memref<128x128xbf16, #tpu.memory_space<vmem>>, %arg28: memref<1x128xf32, #tpu.memory_space<vmem>>, %arg29: memref<128x256xbf16, #tpu.memory_space<vmem>>, %arg30: memref<1x256xf32, #tpu.memory_space<vmem>>, %arg31: memref<128x128xbf16, #tpu.memory_space<vmem>>, %arg32: memref<1x128xf32, #tpu.memory_space<vmem>>, %arg33: memref<1x128xf32, #tpu.memory_space<vmem>>, %arg34: memref<1x128xf32, #tpu.memory_space<vmem>>, %arg35: memref<128x256xbf16, #tpu.memory_space<vmem>>, %arg36: memref<1x256xf32, #tpu.memory_space<vmem>>, %arg37: memref<256x128xbf16, #tpu.memory_space<vmem>>, %arg38: memref<1x128xf32, #tpu.memory_space<vmem>>, %arg39: memref<1x128xf32, #tpu.memory_space<vmem>>, %arg40: memref<1x128xf32, #tpu.memory_space<vmem>>, %arg41: memref<512x128xbf16, #tpu.memory_space<vmem>>, %arg42: memref<1x512xf32, #tpu.memory_space<vmem>>, %arg43: memref<1x16x1xf32, #tpu.memory_space<vmem>>) attributes {dimension_semantics = [#tpu.dimension_semantics<parallel>], iteration_bounds = array<i64: 2>, scalar_prefetch = 0 : i64, scratch_operands = 0 : i64, tpu.core_type = #tpu.core_type<tc>, window_params = [{transform_indices = @transform_0, window_bounds = array<i64: 1, 1, 16>}, {transform_indices = @transform_1, window_bounds = array<i64: 1, 16, 128>}, {transform_indices = @transform_2, window_bounds = array<i64: 1, 16, 128>}, {transform_indices = @transform_3, window_bounds = array<i64: 1, 16, 1>}, {pipeline_mode = #tpu.pipeline_mode<synchronous>, transform_indices = @transform_4, window_bounds = array<i64: 1, 128>}, {pipeline_mode = #tpu.pipeline_mode<synchronous>, transform_indices = @transform_5, window_bounds = array<i64: 1, 128>}, {pipeline_mode = #tpu.pipeline_mode<synchronous>, transform_indices = @transform_6, window_bounds = array<i64: 128, 384>}, {pipeline_mode = #tpu.pipeline_mode<synchronous>, transform_indices = @transform_7, window_bounds = array<i64: 1, 384>}, {pipeline_mode = #tpu.pipeline_mode<synchronous>, transform_indices = @transform_8, window_bounds = array<i64: 128, 128>}, {pipeline_mode = #tpu.pipeline_mode<synchronous>, transform_indices = @transform_9, window_bounds = array<i64: 1, 128>}, {pipeline_mode = #tpu.pipeline_mode<synchronous>, transform_indices = @transform_10, window_bounds = array<i64: 1, 128>}, {pipeline_mode = #tpu.pipeline_mode<synchronous>, transform_indices = @transform_11, window_bounds = array<i64: 1, 128>}, {pipeline_mode = #tpu.pipeline_mode<synchronous>, transform_indices = @transform_12, window_bounds = array<i64: 128, 256>}, {pipeline_mode = #tpu.pipeline_mode<synchronous>, transform_indices = @transform_13, window_bounds = array<i64: 1, 256>}, {pipeline_mode = #tpu.pipeline_mode<synchronous>, transform_indices = @transform_14, window_bounds = array<i64: 256, 128>}, {pipeline_mode = #tpu.pipeline_mode<synchronous>, transform_indices = @transform_15, window_bounds = array<i64: 1, 128>}, {pipeline_mode = #tpu.pipeline_mode<synchronous>, transform_indices = @transform_16, window_bounds = array<i64: 1, 128>}, {pipeline_mode = #tpu.pipeline_mode<synchronous>, transform_indices = @transform_17, window_bounds = array<i64: 1, 128>}, {pipeline_mode = #tpu.pipeline_mode<synchronous>, transform_indices = @transform_18, window_bounds = array<i64: 1, 128>}, {pipeline_mode = #tpu.pipeline_mode<synchronous>, transform_indices = @transform_19, window_bounds = array<i64: 1, 128>}, {pipeline_mode = #tpu.pipeline_mode<synchronous>, transform_indices = @transform_20, window_bounds = array<i64: 128, 384>}, {pipeline_mode = #tpu.pipeline_mode<synchronous>, transform_indices = @transform_21, window_bounds = array<i64: 1, 384>}, {pipeline_mode = #tpu.pipeline_mode<synchronous>, transform_indices = @transform_22, window_bounds = array<i64: 128, 128>}, {pipeline_mode = #tpu.pipeline_mode<synchronous>, transform_indices = @transform_23, window_bounds = array<i64: 1, 128>}, {pipeline_mode = #tpu.pipeline_mode<synchronous>, transform_indices = @transform_24, window_bounds = array<i64: 1, 128>}, {pipeline_mode = #tpu.pipeline_mode<synchronous>, transform_indices = @transform_25, window_bounds = array<i64: 1, 128>}, {pipeline_mode = #tpu.pipeline_mode<synchronous>, transform_indices = @transform_26, window_bounds = array<i64: 128, 128>}, {pipeline_mode = #tpu.pipeline_mode<synchronous>, transform_indices = @transform_27, window_bounds = array<i64: 1, 128>}, {pipeline_mode = #tpu.pipeline_mode<synchronous>, transform_indices = @transform_28, window_bounds = array<i64: 128, 256>}, {pipeline_mode = #tpu.pipeline_mode<synchronous>, transform_indices = @transform_29, window_bounds = array<i64: 1, 256>}, {pipeline_mode = #tpu.pipeline_mode<synchronous>, transform_indices = @transform_30, window_bounds = array<i64: 128, 128>}, {pipeline_mode = #tpu.pipeline_mode<synchronous>, transform_indices = @transform_31, window_bounds = array<i64: 1, 128>}, {pipeline_mode = #tpu.pipeline_mode<synchronous>, transform_indices = @transform_32, window_bounds = array<i64: 1, 128>}, {pipeline_mode = #tpu.pipeline_mode<synchronous>, transform_indices = @transform_33, window_bounds = array<i64: 1, 128>}, {pipeline_mode = #tpu.pipeline_mode<synchronous>, transform_indices = @transform_34, window_bounds = array<i64: 128, 256>}, {pipeline_mode = #tpu.pipeline_mode<synchronous>, transform_indices = @transform_35, window_bounds = array<i64: 1, 256>}, {pipeline_mode = #tpu.pipeline_mode<synchronous>, transform_indices = @transform_36, window_bounds = array<i64: 256, 128>}, {pipeline_mode = #tpu.pipeline_mode<synchronous>, transform_indices = @transform_37, window_bounds = array<i64: 1, 128>}, {pipeline_mode = #tpu.pipeline_mode<synchronous>, transform_indices = @transform_38, window_bounds = array<i64: 1, 128>}, {pipeline_mode = #tpu.pipeline_mode<synchronous>, transform_indices = @transform_39, window_bounds = array<i64: 1, 128>}, {pipeline_mode = #tpu.pipeline_mode<synchronous>, transform_indices = @transform_40, window_bounds = array<i64: 512, 128>}, {pipeline_mode = #tpu.pipeline_mode<synchronous>, transform_indices = @transform_41, window_bounds = array<i64: 1, 512>}, {transform_indices = @transform_42, window_bounds = array<i64: 1, 16, 1>}]} {
    %c0 = arith.constant 0 : index
    %c0_0 = arith.constant 0 : index
    %c0_1 = arith.constant 0 : index
    %0 = vector.load %arg2[%c0, %c0_0, %c0_1] : memref<1x16x128xf32, #tpu.memory_space<vmem>>, vector<1x16x128xf32>
    %1 = vector.shape_cast %0 : vector<1x16x128xf32> to vector<16x128xf32>
    %c0_2 = arith.constant 0 : index
    %c0_3 = arith.constant 0 : index
    %c0_4 = arith.constant 0 : index
    %2 = vector.load %arg1[%c0_2, %c0_3, %c0_4] : memref<1x1x16xf32, #tpu.memory_space<vmem>>, vector<1x1x16xf32>
    %3 = vector.shape_cast %2 : vector<1x1x16xf32> to vector<1x16xf32>
    %cst = arith.constant 1.000000e+00 : f32
    %4 = vector.broadcast %cst : f32 to vector<1x16xf32>
    %5 = arith.subf %4, %3 : vector<1x16xf32>
    %cst_5 = arith.constant -1.000000e+09 : f32
    %6 = vector.broadcast %cst_5 : f32 to vector<1x16xf32>
    %7 = arith.mulf %5, %6 : vector<1x16xf32>
    %c0_6 = arith.constant 0 : index
    %c0_7 = arith.constant 0 : index
    %8 = vector.load %arg5[%c0_6, %c0_7] : memref<1x128xf32, #tpu.memory_space<vmem>>, vector<1x128xf32>
    %c0_8 = arith.constant 0 : index
    %c0_9 = arith.constant 0 : index
    %9 = vector.load %arg6[%c0_8, %c0_9] : memref<1x128xf32, #tpu.memory_space<vmem>>, vector<1x128xf32>
    %cst_10 = arith.constant dense<0.000000e+00> : vector<16xf32>
    %10 = vector.multi_reduction <add>, %1, %cst_10 [1] : vector<16x128xf32> to vector<16xf32>
    %11 = vector.shape_cast %10 : vector<16xf32> to vector<16x1xf32>
    %cst_11 = arith.constant 1.280000e+02 : f32
    %12 = vector.broadcast %cst_11 : f32 to vector<16x1xf32>
    %13 = arith.divf %11, %12 : vector<16x1xf32>
    %14 = vector.broadcast %13 : vector<16x1xf32> to vector<16x128xf32>
    %15 = arith.subf %1, %14 : vector<16x128xf32>
    %16 = arith.mulf %15, %15 : vector<16x128xf32>
    %cst_12 = arith.constant dense<0.000000e+00> : vector<16xf32>
    %17 = vector.multi_reduction <add>, %16, %cst_12 [1] : vector<16x128xf32> to vector<16xf32>
    %18 = vector.shape_cast %17 : vector<16xf32> to vector<16x1xf32>
    %cst_13 = arith.constant 1.280000e+02 : f32
    %19 = vector.broadcast %cst_13 : f32 to vector<16x1xf32>
    %20 = arith.divf %18, %19 : vector<16x1xf32>
    %cst_14 = arith.constant 9.99999974E-6 : f32
    %21 = vector.broadcast %cst_14 : f32 to vector<16x1xf32>
    %22 = arith.addf %20, %21 : vector<16x1xf32>
    %23 = math.rsqrt %22 : vector<16x1xf32>
    %24 = vector.broadcast %23 : vector<16x1xf32> to vector<16x128xf32>
    %25 = arith.mulf %15, %24 : vector<16x128xf32>
    %26 = vector.broadcast %8 : vector<1x128xf32> to vector<16x128xf32>
    %27 = arith.mulf %25, %26 : vector<16x128xf32>
    %28 = vector.broadcast %9 : vector<1x128xf32> to vector<16x128xf32>
    %29 = arith.addf %27, %28 : vector<16x128xf32>
    %c0_15 = arith.constant 0 : index
    %c0_16 = arith.constant 0 : index
    %30 = vector.load %arg7[%c0_15, %c0_16] : memref<128x384xbf16, #tpu.memory_space<vmem>>, vector<128x384xbf16>
    %31 = arith.truncf %29 : vector<16x128xf32> to vector<16x128xbf16>
    %cst_17 = arith.constant dense<0.000000e+00> : vector<16x384xf32>
    %32 = tpu.matmul %31, %30, %cst_17 {dimension_numbers = #tpu.dot_dimension_numbers<[1], [0], [0], [1], [0, 0, 1, 1], [], []>} : vector<16x128xbf16>, vector<128x384xbf16>, vector<16x384xf32> -> vector<16x384xf32>
    %c0_18 = arith.constant 0 : index
    %c0_19 = arith.constant 0 : index
    %33 = vector.load %arg8[%c0_18, %c0_19] : memref<1x384xf32, #tpu.memory_space<vmem>>, vector<1x384xf32>
    %34 = vector.broadcast %33 : vector<1x384xf32> to vector<16x384xf32>
    %35 = arith.addf %32, %34 : vector<16x384xf32>
    %36 = vector.extract_strided_slice %35 {offsets = [0, 0], sizes = [16, 128], strides = [1, 1]} : vector<16x384xf32> to vector<16x128xf32>
    %37 = vector.extract_strided_slice %35 {offsets = [0, 128], sizes = [16, 128], strides = [1, 1]} : vector<16x384xf32> to vector<16x128xf32>
    %38 = vector.extract_strided_slice %35 {offsets = [0, 256], sizes = [16, 128], strides = [1, 1]} : vector<16x384xf32> to vector<16x128xf32>
    %c0_20 = arith.constant 0 : index
    %c0_21 = arith.constant 0 : index
    %39 = vector.load %arg9[%c0_20, %c0_21] : memref<128x128xbf16, #tpu.memory_space<vmem>>, vector<128x128xbf16>
    %40 = vector.extract_strided_slice %36 {offsets = [0, 0], sizes = [16, 32], strides = [1, 1]} : vector<16x128xf32> to vector<16x32xf32>
    %41 = arith.truncf %40 : vector<16x32xf32> to vector<16x32xbf16>
    %42 = vector.extract_strided_slice %37 {offsets = [0, 0], sizes = [16, 32], strides = [1, 1]} : vector<16x128xf32> to vector<16x32xf32>
    %43 = arith.truncf %42 : vector<16x32xf32> to vector<16x32xbf16>
    %44 = vector.extract_strided_slice %38 {offsets = [0, 0], sizes = [16, 32], strides = [1, 1]} : vector<16x128xf32> to vector<16x32xf32>
    %45 = arith.truncf %44 : vector<16x32xf32> to vector<16x32xbf16>
    %cst_22 = arith.constant dense<0.000000e+00> : vector<16x16xf32>
    %46 = tpu.matmul %41, %43, %cst_22 {dimension_numbers = #tpu.dot_dimension_numbers<[1], [1], [0], [0], [0, 0, 1, 0], [], []>} : vector<16x32xbf16>, vector<16x32xbf16>, vector<16x16xf32> -> vector<16x16xf32>
    %cst_23 = arith.constant 0.176776692 : f32
    %47 = vector.broadcast %cst_23 : f32 to vector<16x16xf32>
    %48 = arith.mulf %46, %47 : vector<16x16xf32>
    %49 = vector.broadcast %7 : vector<1x16xf32> to vector<16x16xf32>
    %50 = arith.addf %48, %49 : vector<16x16xf32>
    %cst_24 = arith.constant dense<0xFF800000> : vector<16xf32>
    %51 = vector.multi_reduction <maximumf>, %50, %cst_24 [1] : vector<16x16xf32> to vector<16xf32>
    %52 = vector.shape_cast %51 : vector<16xf32> to vector<16x1xf32>
    %53 = vector.broadcast %52 : vector<16x1xf32> to vector<16x16xf32>
    %54 = arith.subf %50, %53 : vector<16x16xf32>
    %55 = math.exp %54 : vector<16x16xf32>
    %cst_25 = arith.constant dense<0.000000e+00> : vector<16xf32>
    %56 = vector.multi_reduction <add>, %55, %cst_25 [1] : vector<16x16xf32> to vector<16xf32>
    %57 = vector.shape_cast %56 : vector<16xf32> to vector<16x1xf32>
    %58 = tpu.reciprocal %57 {approx = true} : vector<16x1xf32> -> vector<16x1xf32>
    %59 = vector.broadcast %58 : vector<16x1xf32> to vector<16x16xf32>
    %60 = arith.mulf %55, %59 : vector<16x16xf32>
    %61 = arith.truncf %60 : vector<16x16xf32> to vector<16x16xbf16>
    %cst_26 = arith.constant dense<0.000000e+00> : vector<16x32xf32>
    %62 = tpu.matmul %61, %45, %cst_26 {dimension_numbers = #tpu.dot_dimension_numbers<[1], [0], [0], [1], [0, 0, 1, 1], [], []>} : vector<16x16xbf16>, vector<16x32xbf16>, vector<16x32xf32> -> vector<16x32xf32>
    %63 = arith.truncf %62 : vector<16x32xf32> to vector<16x32xbf16>
    %64 = vector.extract_strided_slice %39 {offsets = [0, 0], sizes = [32, 128], strides = [1, 1]} : vector<128x128xbf16> to vector<32x128xbf16>
    %cst_27 = arith.constant dense<0.000000e+00> : vector<16x128xf32>
    %65 = tpu.matmul %63, %64, %cst_27 {dimension_numbers = #tpu.dot_dimension_numbers<[1], [0], [0], [1], [0, 0, 1, 1], [], []>} : vector<16x32xbf16>, vector<32x128xbf16>, vector<16x128xf32> -> vector<16x128xf32>
    %66 = vector.extract_strided_slice %36 {offsets = [0, 32], sizes = [16, 32], strides = [1, 1]} : vector<16x128xf32> to vector<16x32xf32>
    %67 = arith.truncf %66 : vector<16x32xf32> to vector<16x32xbf16>
    %68 = vector.extract_strided_slice %37 {offsets = [0, 32], sizes = [16, 32], strides = [1, 1]} : vector<16x128xf32> to vector<16x32xf32>
    %69 = arith.truncf %68 : vector<16x32xf32> to vector<16x32xbf16>
    %70 = vector.extract_strided_slice %38 {offsets = [0, 32], sizes = [16, 32], strides = [1, 1]} : vector<16x128xf32> to vector<16x32xf32>
    %71 = arith.truncf %70 : vector<16x32xf32> to vector<16x32xbf16>
    %cst_28 = arith.constant dense<0.000000e+00> : vector<16x16xf32>
    %72 = tpu.matmul %67, %69, %cst_28 {dimension_numbers = #tpu.dot_dimension_numbers<[1], [1], [0], [0], [0, 0, 1, 0], [], []>} : vector<16x32xbf16>, vector<16x32xbf16>, vector<16x16xf32> -> vector<16x16xf32>
    %cst_29 = arith.constant 0.176776692 : f32
    %73 = vector.broadcast %cst_29 : f32 to vector<16x16xf32>
    %74 = arith.mulf %72, %73 : vector<16x16xf32>
    %75 = vector.broadcast %7 : vector<1x16xf32> to vector<16x16xf32>
    %76 = arith.addf %74, %75 : vector<16x16xf32>
    %cst_30 = arith.constant dense<0xFF800000> : vector<16xf32>
    %77 = vector.multi_reduction <maximumf>, %76, %cst_30 [1] : vector<16x16xf32> to vector<16xf32>
    %78 = vector.shape_cast %77 : vector<16xf32> to vector<16x1xf32>
    %79 = vector.broadcast %78 : vector<16x1xf32> to vector<16x16xf32>
    %80 = arith.subf %76, %79 : vector<16x16xf32>
    %81 = math.exp %80 : vector<16x16xf32>
    %cst_31 = arith.constant dense<0.000000e+00> : vector<16xf32>
    %82 = vector.multi_reduction <add>, %81, %cst_31 [1] : vector<16x16xf32> to vector<16xf32>
    %83 = vector.shape_cast %82 : vector<16xf32> to vector<16x1xf32>
    %84 = tpu.reciprocal %83 {approx = true} : vector<16x1xf32> -> vector<16x1xf32>
    %85 = vector.broadcast %84 : vector<16x1xf32> to vector<16x16xf32>
    %86 = arith.mulf %81, %85 : vector<16x16xf32>
    %87 = arith.truncf %86 : vector<16x16xf32> to vector<16x16xbf16>
    %cst_32 = arith.constant dense<0.000000e+00> : vector<16x32xf32>
    %88 = tpu.matmul %87, %71, %cst_32 {dimension_numbers = #tpu.dot_dimension_numbers<[1], [0], [0], [1], [0, 0, 1, 1], [], []>} : vector<16x16xbf16>, vector<16x32xbf16>, vector<16x32xf32> -> vector<16x32xf32>
    %89 = arith.truncf %88 : vector<16x32xf32> to vector<16x32xbf16>
    %90 = vector.extract_strided_slice %39 {offsets = [32, 0], sizes = [32, 128], strides = [1, 1]} : vector<128x128xbf16> to vector<32x128xbf16>
    %cst_33 = arith.constant dense<0.000000e+00> : vector<16x128xf32>
    %91 = tpu.matmul %89, %90, %cst_33 {dimension_numbers = #tpu.dot_dimension_numbers<[1], [0], [0], [1], [0, 0, 1, 1], [], []>} : vector<16x32xbf16>, vector<32x128xbf16>, vector<16x128xf32> -> vector<16x128xf32>
    %92 = arith.addf %65, %91 : vector<16x128xf32>
    %93 = vector.extract_strided_slice %36 {offsets = [0, 64], sizes = [16, 32], strides = [1, 1]} : vector<16x128xf32> to vector<16x32xf32>
    %94 = arith.truncf %93 : vector<16x32xf32> to vector<16x32xbf16>
    %95 = vector.extract_strided_slice %37 {offsets = [0, 64], sizes = [16, 32], strides = [1, 1]} : vector<16x128xf32> to vector<16x32xf32>
    %96 = arith.truncf %95 : vector<16x32xf32> to vector<16x32xbf16>
    %97 = vector.extract_strided_slice %38 {offsets = [0, 64], sizes = [16, 32], strides = [1, 1]} : vector<16x128xf32> to vector<16x32xf32>
    %98 = arith.truncf %97 : vector<16x32xf32> to vector<16x32xbf16>
    %cst_34 = arith.constant dense<0.000000e+00> : vector<16x16xf32>
    %99 = tpu.matmul %94, %96, %cst_34 {dimension_numbers = #tpu.dot_dimension_numbers<[1], [1], [0], [0], [0, 0, 1, 0], [], []>} : vector<16x32xbf16>, vector<16x32xbf16>, vector<16x16xf32> -> vector<16x16xf32>
    %cst_35 = arith.constant 0.176776692 : f32
    %100 = vector.broadcast %cst_35 : f32 to vector<16x16xf32>
    %101 = arith.mulf %99, %100 : vector<16x16xf32>
    %102 = vector.broadcast %7 : vector<1x16xf32> to vector<16x16xf32>
    %103 = arith.addf %101, %102 : vector<16x16xf32>
    %cst_36 = arith.constant dense<0xFF800000> : vector<16xf32>
    %104 = vector.multi_reduction <maximumf>, %103, %cst_36 [1] : vector<16x16xf32> to vector<16xf32>
    %105 = vector.shape_cast %104 : vector<16xf32> to vector<16x1xf32>
    %106 = vector.broadcast %105 : vector<16x1xf32> to vector<16x16xf32>
    %107 = arith.subf %103, %106 : vector<16x16xf32>
    %108 = math.exp %107 : vector<16x16xf32>
    %cst_37 = arith.constant dense<0.000000e+00> : vector<16xf32>
    %109 = vector.multi_reduction <add>, %108, %cst_37 [1] : vector<16x16xf32> to vector<16xf32>
    %110 = vector.shape_cast %109 : vector<16xf32> to vector<16x1xf32>
    %111 = tpu.reciprocal %110 {approx = true} : vector<16x1xf32> -> vector<16x1xf32>
    %112 = vector.broadcast %111 : vector<16x1xf32> to vector<16x16xf32>
    %113 = arith.mulf %108, %112 : vector<16x16xf32>
    %114 = arith.truncf %113 : vector<16x16xf32> to vector<16x16xbf16>
    %cst_38 = arith.constant dense<0.000000e+00> : vector<16x32xf32>
    %115 = tpu.matmul %114, %98, %cst_38 {dimension_numbers = #tpu.dot_dimension_numbers<[1], [0], [0], [1], [0, 0, 1, 1], [], []>} : vector<16x16xbf16>, vector<16x32xbf16>, vector<16x32xf32> -> vector<16x32xf32>
    %116 = arith.truncf %115 : vector<16x32xf32> to vector<16x32xbf16>
    %117 = vector.extract_strided_slice %39 {offsets = [64, 0], sizes = [32, 128], strides = [1, 1]} : vector<128x128xbf16> to vector<32x128xbf16>
    %cst_39 = arith.constant dense<0.000000e+00> : vector<16x128xf32>
    %118 = tpu.matmul %116, %117, %cst_39 {dimension_numbers = #tpu.dot_dimension_numbers<[1], [0], [0], [1], [0, 0, 1, 1], [], []>} : vector<16x32xbf16>, vector<32x128xbf16>, vector<16x128xf32> -> vector<16x128xf32>
    %119 = arith.addf %92, %118 : vector<16x128xf32>
    %120 = vector.extract_strided_slice %36 {offsets = [0, 96], sizes = [16, 32], strides = [1, 1]} : vector<16x128xf32> to vector<16x32xf32>
    %121 = arith.truncf %120 : vector<16x32xf32> to vector<16x32xbf16>
    %122 = vector.extract_strided_slice %37 {offsets = [0, 96], sizes = [16, 32], strides = [1, 1]} : vector<16x128xf32> to vector<16x32xf32>
    %123 = arith.truncf %122 : vector<16x32xf32> to vector<16x32xbf16>
    %124 = vector.extract_strided_slice %38 {offsets = [0, 96], sizes = [16, 32], strides = [1, 1]} : vector<16x128xf32> to vector<16x32xf32>
    %125 = arith.truncf %124 : vector<16x32xf32> to vector<16x32xbf16>
    %cst_40 = arith.constant dense<0.000000e+00> : vector<16x16xf32>
    %126 = tpu.matmul %121, %123, %cst_40 {dimension_numbers = #tpu.dot_dimension_numbers<[1], [1], [0], [0], [0, 0, 1, 0], [], []>} : vector<16x32xbf16>, vector<16x32xbf16>, vector<16x16xf32> -> vector<16x16xf32>
    %cst_41 = arith.constant 0.176776692 : f32
    %127 = vector.broadcast %cst_41 : f32 to vector<16x16xf32>
    %128 = arith.mulf %126, %127 : vector<16x16xf32>
    %129 = vector.broadcast %7 : vector<1x16xf32> to vector<16x16xf32>
    %130 = arith.addf %128, %129 : vector<16x16xf32>
    %cst_42 = arith.constant dense<0xFF800000> : vector<16xf32>
    %131 = vector.multi_reduction <maximumf>, %130, %cst_42 [1] : vector<16x16xf32> to vector<16xf32>
    %132 = vector.shape_cast %131 : vector<16xf32> to vector<16x1xf32>
    %133 = vector.broadcast %132 : vector<16x1xf32> to vector<16x16xf32>
    %134 = arith.subf %130, %133 : vector<16x16xf32>
    %135 = math.exp %134 : vector<16x16xf32>
    %cst_43 = arith.constant dense<0.000000e+00> : vector<16xf32>
    %136 = vector.multi_reduction <add>, %135, %cst_43 [1] : vector<16x16xf32> to vector<16xf32>
    %137 = vector.shape_cast %136 : vector<16xf32> to vector<16x1xf32>
    %138 = tpu.reciprocal %137 {approx = true} : vector<16x1xf32> -> vector<16x1xf32>
    %139 = vector.broadcast %138 : vector<16x1xf32> to vector<16x16xf32>
    %140 = arith.mulf %135, %139 : vector<16x16xf32>
    %141 = arith.truncf %140 : vector<16x16xf32> to vector<16x16xbf16>
    %cst_44 = arith.constant dense<0.000000e+00> : vector<16x32xf32>
    %142 = tpu.matmul %141, %125, %cst_44 {dimension_numbers = #tpu.dot_dimension_numbers<[1], [0], [0], [1], [0, 0, 1, 1], [], []>} : vector<16x16xbf16>, vector<16x32xbf16>, vector<16x32xf32> -> vector<16x32xf32>
    %143 = arith.truncf %142 : vector<16x32xf32> to vector<16x32xbf16>
    %144 = vector.extract_strided_slice %39 {offsets = [96, 0], sizes = [32, 128], strides = [1, 1]} : vector<128x128xbf16> to vector<32x128xbf16>
    %cst_45 = arith.constant dense<0.000000e+00> : vector<16x128xf32>
    %145 = tpu.matmul %143, %144, %cst_45 {dimension_numbers = #tpu.dot_dimension_numbers<[1], [0], [0], [1], [0, 0, 1, 1], [], []>} : vector<16x32xbf16>, vector<32x128xbf16>, vector<16x128xf32> -> vector<16x128xf32>
    %146 = arith.addf %119, %145 : vector<16x128xf32>
    %c0_46 = arith.constant 0 : index
    %c0_47 = arith.constant 0 : index
    %147 = vector.load %arg10[%c0_46, %c0_47] : memref<1x128xf32, #tpu.memory_space<vmem>>, vector<1x128xf32>
    %148 = vector.broadcast %147 : vector<1x128xf32> to vector<16x128xf32>
    %149 = arith.addf %146, %148 : vector<16x128xf32>
    %150 = arith.addf %29, %149 : vector<16x128xf32>
    %c0_48 = arith.constant 0 : index
    %c0_49 = arith.constant 0 : index
    %151 = vector.load %arg11[%c0_48, %c0_49] : memref<1x128xf32, #tpu.memory_space<vmem>>, vector<1x128xf32>
    %c0_50 = arith.constant 0 : index
    %c0_51 = arith.constant 0 : index
    %152 = vector.load %arg12[%c0_50, %c0_51] : memref<1x128xf32, #tpu.memory_space<vmem>>, vector<1x128xf32>
    %cst_52 = arith.constant dense<0.000000e+00> : vector<16xf32>
    %153 = vector.multi_reduction <add>, %150, %cst_52 [1] : vector<16x128xf32> to vector<16xf32>
    %154 = vector.shape_cast %153 : vector<16xf32> to vector<16x1xf32>
    %cst_53 = arith.constant 1.280000e+02 : f32
    %155 = vector.broadcast %cst_53 : f32 to vector<16x1xf32>
    %156 = arith.divf %154, %155 : vector<16x1xf32>
    %157 = vector.broadcast %156 : vector<16x1xf32> to vector<16x128xf32>
    %158 = arith.subf %150, %157 : vector<16x128xf32>
    %159 = arith.mulf %158, %158 : vector<16x128xf32>
    %cst_54 = arith.constant dense<0.000000e+00> : vector<16xf32>
    %160 = vector.multi_reduction <add>, %159, %cst_54 [1] : vector<16x128xf32> to vector<16xf32>
    %161 = vector.shape_cast %160 : vector<16xf32> to vector<16x1xf32>
    %cst_55 = arith.constant 1.280000e+02 : f32
    %162 = vector.broadcast %cst_55 : f32 to vector<16x1xf32>
    %163 = arith.divf %161, %162 : vector<16x1xf32>
    %cst_56 = arith.constant 9.99999974E-6 : f32
    %164 = vector.broadcast %cst_56 : f32 to vector<16x1xf32>
    %165 = arith.addf %163, %164 : vector<16x1xf32>
    %166 = math.rsqrt %165 : vector<16x1xf32>
    %167 = vector.broadcast %166 : vector<16x1xf32> to vector<16x128xf32>
    %168 = arith.mulf %158, %167 : vector<16x128xf32>
    %169 = vector.broadcast %151 : vector<1x128xf32> to vector<16x128xf32>
    %170 = arith.mulf %168, %169 : vector<16x128xf32>
    %171 = vector.broadcast %152 : vector<1x128xf32> to vector<16x128xf32>
    %172 = arith.addf %170, %171 : vector<16x128xf32>
    %c0_57 = arith.constant 0 : index
    %c0_58 = arith.constant 0 : index
    %173 = vector.load %arg13[%c0_57, %c0_58] : memref<128x256xbf16, #tpu.memory_space<vmem>>, vector<128x256xbf16>
    %174 = arith.truncf %172 : vector<16x128xf32> to vector<16x128xbf16>
    %cst_59 = arith.constant dense<0.000000e+00> : vector<16x256xf32>
    %175 = tpu.matmul %174, %173, %cst_59 {dimension_numbers = #tpu.dot_dimension_numbers<[1], [0], [0], [1], [0, 0, 1, 1], [], []>} : vector<16x128xbf16>, vector<128x256xbf16>, vector<16x256xf32> -> vector<16x256xf32>
    %c0_60 = arith.constant 0 : index
    %c0_61 = arith.constant 0 : index
    %176 = vector.load %arg14[%c0_60, %c0_61] : memref<1x256xf32, #tpu.memory_space<vmem>>, vector<1x256xf32>
    %177 = vector.broadcast %176 : vector<1x256xf32> to vector<16x256xf32>
    %178 = arith.addf %175, %177 : vector<16x256xf32>
    %179 = arith.mulf %178, %178 : vector<16x256xf32>
    %180 = arith.mulf %178, %179 : vector<16x256xf32>
    %cst_62 = arith.constant 4.471500e-02 : f32
    %181 = vector.broadcast %cst_62 : f32 to vector<16x256xf32>
    %182 = arith.mulf %181, %180 : vector<16x256xf32>
    %183 = arith.addf %178, %182 : vector<16x256xf32>
    %cst_63 = arith.constant 0.797884583 : f32
    %184 = vector.broadcast %cst_63 : f32 to vector<16x256xf32>
    %185 = arith.mulf %184, %183 : vector<16x256xf32>
    %186 = math.tanh %185 : vector<16x256xf32>
    %cst_64 = arith.constant 1.000000e+00 : f32
    %187 = vector.broadcast %cst_64 : f32 to vector<16x256xf32>
    %188 = arith.addf %187, %186 : vector<16x256xf32>
    %cst_65 = arith.constant 5.000000e-01 : f32
    %189 = vector.broadcast %cst_65 : f32 to vector<16x256xf32>
    %190 = arith.mulf %189, %188 : vector<16x256xf32>
    %191 = arith.mulf %178, %190 : vector<16x256xf32>
    %c0_66 = arith.constant 0 : index
    %c0_67 = arith.constant 0 : index
    %192 = vector.load %arg15[%c0_66, %c0_67] : memref<256x128xbf16, #tpu.memory_space<vmem>>, vector<256x128xbf16>
    %193 = arith.truncf %191 : vector<16x256xf32> to vector<16x256xbf16>
    %cst_68 = arith.constant dense<0.000000e+00> : vector<16x128xf32>
    %194 = tpu.matmul %193, %192, %cst_68 {dimension_numbers = #tpu.dot_dimension_numbers<[1], [0], [0], [1], [0, 0, 1, 1], [], []>} : vector<16x256xbf16>, vector<256x128xbf16>, vector<16x128xf32> -> vector<16x128xf32>
    %c0_69 = arith.constant 0 : index
    %c0_70 = arith.constant 0 : index
    %195 = vector.load %arg16[%c0_69, %c0_70] : memref<1x128xf32, #tpu.memory_space<vmem>>, vector<1x128xf32>
    %196 = vector.broadcast %195 : vector<1x128xf32> to vector<16x128xf32>
    %197 = arith.addf %194, %196 : vector<16x128xf32>
    %198 = arith.addf %172, %197 : vector<16x128xf32>
    %c0_71 = arith.constant 0 : index
    %c0_72 = arith.constant 0 : index
    %199 = vector.load %arg17[%c0_71, %c0_72] : memref<1x128xf32, #tpu.memory_space<vmem>>, vector<1x128xf32>
    %c0_73 = arith.constant 0 : index
    %c0_74 = arith.constant 0 : index
    %200 = vector.load %arg18[%c0_73, %c0_74] : memref<1x128xf32, #tpu.memory_space<vmem>>, vector<1x128xf32>
    %cst_75 = arith.constant dense<0.000000e+00> : vector<16xf32>
    %201 = vector.multi_reduction <add>, %198, %cst_75 [1] : vector<16x128xf32> to vector<16xf32>
    %202 = vector.shape_cast %201 : vector<16xf32> to vector<16x1xf32>
    %cst_76 = arith.constant 1.280000e+02 : f32
    %203 = vector.broadcast %cst_76 : f32 to vector<16x1xf32>
    %204 = arith.divf %202, %203 : vector<16x1xf32>
    %205 = vector.broadcast %204 : vector<16x1xf32> to vector<16x128xf32>
    %206 = arith.subf %198, %205 : vector<16x128xf32>
    %207 = arith.mulf %206, %206 : vector<16x128xf32>
    %cst_77 = arith.constant dense<0.000000e+00> : vector<16xf32>
    %208 = vector.multi_reduction <add>, %207, %cst_77 [1] : vector<16x128xf32> to vector<16xf32>
    %209 = vector.shape_cast %208 : vector<16xf32> to vector<16x1xf32>
    %cst_78 = arith.constant 1.280000e+02 : f32
    %210 = vector.broadcast %cst_78 : f32 to vector<16x1xf32>
    %211 = arith.divf %209, %210 : vector<16x1xf32>
    %cst_79 = arith.constant 9.99999974E-6 : f32
    %212 = vector.broadcast %cst_79 : f32 to vector<16x1xf32>
    %213 = arith.addf %211, %212 : vector<16x1xf32>
    %214 = math.rsqrt %213 : vector<16x1xf32>
    %215 = vector.broadcast %214 : vector<16x1xf32> to vector<16x128xf32>
    %216 = arith.mulf %206, %215 : vector<16x128xf32>
    %217 = vector.broadcast %199 : vector<1x128xf32> to vector<16x128xf32>
    %218 = arith.mulf %216, %217 : vector<16x128xf32>
    %219 = vector.broadcast %200 : vector<1x128xf32> to vector<16x128xf32>
    %220 = arith.addf %218, %219 : vector<16x128xf32>
    %c0_80 = arith.constant 0 : index
    %c0_81 = arith.constant 0 : index
    %c0_82 = arith.constant 0 : index
    %221 = vector.load %arg3[%c0_80, %c0_81, %c0_82] : memref<1x16x128xf32, #tpu.memory_space<vmem>>, vector<1x16x128xf32>
    %222 = vector.shape_cast %221 : vector<1x16x128xf32> to vector<16x128xf32>
    %c0_83 = arith.constant 0 : index
    %c0_84 = arith.constant 0 : index
    %223 = vector.load %arg19[%c0_83, %c0_84] : memref<1x128xf32, #tpu.memory_space<vmem>>, vector<1x128xf32>
    %c0_85 = arith.constant 0 : index
    %c0_86 = arith.constant 0 : index
    %224 = vector.load %arg20[%c0_85, %c0_86] : memref<1x128xf32, #tpu.memory_space<vmem>>, vector<1x128xf32>
    %cst_87 = arith.constant dense<0.000000e+00> : vector<16xf32>
    %225 = vector.multi_reduction <add>, %222, %cst_87 [1] : vector<16x128xf32> to vector<16xf32>
    %226 = vector.shape_cast %225 : vector<16xf32> to vector<16x1xf32>
    %cst_88 = arith.constant 1.280000e+02 : f32
    %227 = vector.broadcast %cst_88 : f32 to vector<16x1xf32>
    %228 = arith.divf %226, %227 : vector<16x1xf32>
    %229 = vector.broadcast %228 : vector<16x1xf32> to vector<16x128xf32>
    %230 = arith.subf %222, %229 : vector<16x128xf32>
    %231 = arith.mulf %230, %230 : vector<16x128xf32>
    %cst_89 = arith.constant dense<0.000000e+00> : vector<16xf32>
    %232 = vector.multi_reduction <add>, %231, %cst_89 [1] : vector<16x128xf32> to vector<16xf32>
    %233 = vector.shape_cast %232 : vector<16xf32> to vector<16x1xf32>
    %cst_90 = arith.constant 1.280000e+02 : f32
    %234 = vector.broadcast %cst_90 : f32 to vector<16x1xf32>
    %235 = arith.divf %233, %234 : vector<16x1xf32>
    %cst_91 = arith.constant 9.99999974E-6 : f32
    %236 = vector.broadcast %cst_91 : f32 to vector<16x1xf32>
    %237 = arith.addf %235, %236 : vector<16x1xf32>
    %238 = math.rsqrt %237 : vector<16x1xf32>
    %239 = vector.broadcast %238 : vector<16x1xf32> to vector<16x128xf32>
    %240 = arith.mulf %230, %239 : vector<16x128xf32>
    %241 = vector.broadcast %223 : vector<1x128xf32> to vector<16x128xf32>
    %242 = arith.mulf %240, %241 : vector<16x128xf32>
    %243 = vector.broadcast %224 : vector<1x128xf32> to vector<16x128xf32>
    %244 = arith.addf %242, %243 : vector<16x128xf32>
    %c0_92 = arith.constant 0 : index
    %c0_93 = arith.constant 0 : index
    %245 = vector.load %arg21[%c0_92, %c0_93] : memref<128x384xbf16, #tpu.memory_space<vmem>>, vector<128x384xbf16>
    %246 = arith.truncf %244 : vector<16x128xf32> to vector<16x128xbf16>
    %cst_94 = arith.constant dense<0.000000e+00> : vector<16x384xf32>
    %247 = tpu.matmul %246, %245, %cst_94 {dimension_numbers = #tpu.dot_dimension_numbers<[1], [0], [0], [1], [0, 0, 1, 1], [], []>} : vector<16x128xbf16>, vector<128x384xbf16>, vector<16x384xf32> -> vector<16x384xf32>
    %c0_95 = arith.constant 0 : index
    %c0_96 = arith.constant 0 : index
    %248 = vector.load %arg22[%c0_95, %c0_96] : memref<1x384xf32, #tpu.memory_space<vmem>>, vector<1x384xf32>
    %249 = vector.broadcast %248 : vector<1x384xf32> to vector<16x384xf32>
    %250 = arith.addf %247, %249 : vector<16x384xf32>
    %251 = tpu.iota {dimensions = array<i32: 0>} : vector<16x16xi32>
    %252 = tpu.iota {dimensions = array<i32: 1>} : vector<16x16xi32>
    %253 = arith.cmpi sle, %252, %251 : vector<16x16xi32>
    %cst_97 = arith.constant 0.000000e+00 : f32
    %cst_98 = arith.constant -1.000000e+09 : f32
    %254 = vector.broadcast %cst_97 : f32 to vector<16x16xf32>
    %255 = vector.broadcast %cst_98 : f32 to vector<16x16xf32>
    %256 = arith.select %253, %254, %255 : vector<16x16xi1>, vector<16x16xf32>
    %257 = vector.extract_strided_slice %250 {offsets = [0, 0], sizes = [16, 128], strides = [1, 1]} : vector<16x384xf32> to vector<16x128xf32>
    %258 = vector.extract_strided_slice %250 {offsets = [0, 128], sizes = [16, 128], strides = [1, 1]} : vector<16x384xf32> to vector<16x128xf32>
    %259 = vector.extract_strided_slice %250 {offsets = [0, 256], sizes = [16, 128], strides = [1, 1]} : vector<16x384xf32> to vector<16x128xf32>
    %c0_99 = arith.constant 0 : index
    %c0_100 = arith.constant 0 : index
    %260 = vector.load %arg23[%c0_99, %c0_100] : memref<128x128xbf16, #tpu.memory_space<vmem>>, vector<128x128xbf16>
    %261 = vector.extract_strided_slice %257 {offsets = [0, 0], sizes = [16, 32], strides = [1, 1]} : vector<16x128xf32> to vector<16x32xf32>
    %262 = arith.truncf %261 : vector<16x32xf32> to vector<16x32xbf16>
    %263 = vector.extract_strided_slice %258 {offsets = [0, 0], sizes = [16, 32], strides = [1, 1]} : vector<16x128xf32> to vector<16x32xf32>
    %264 = arith.truncf %263 : vector<16x32xf32> to vector<16x32xbf16>
    %265 = vector.extract_strided_slice %259 {offsets = [0, 0], sizes = [16, 32], strides = [1, 1]} : vector<16x128xf32> to vector<16x32xf32>
    %266 = arith.truncf %265 : vector<16x32xf32> to vector<16x32xbf16>
    %cst_101 = arith.constant dense<0.000000e+00> : vector<16x16xf32>
    %267 = tpu.matmul %262, %264, %cst_101 {dimension_numbers = #tpu.dot_dimension_numbers<[1], [1], [0], [0], [0, 0, 1, 0], [], []>} : vector<16x32xbf16>, vector<16x32xbf16>, vector<16x16xf32> -> vector<16x16xf32>
    %cst_102 = arith.constant 0.176776692 : f32
    %268 = vector.broadcast %cst_102 : f32 to vector<16x16xf32>
    %269 = arith.mulf %267, %268 : vector<16x16xf32>
    %270 = arith.addf %269, %256 : vector<16x16xf32>
    %cst_103 = arith.constant dense<0xFF800000> : vector<16xf32>
    %271 = vector.multi_reduction <maximumf>, %270, %cst_103 [1] : vector<16x16xf32> to vector<16xf32>
    %272 = vector.shape_cast %271 : vector<16xf32> to vector<16x1xf32>
    %273 = vector.broadcast %272 : vector<16x1xf32> to vector<16x16xf32>
    %274 = arith.subf %270, %273 : vector<16x16xf32>
    %275 = math.exp %274 : vector<16x16xf32>
    %cst_104 = arith.constant dense<0.000000e+00> : vector<16xf32>
    %276 = vector.multi_reduction <add>, %275, %cst_104 [1] : vector<16x16xf32> to vector<16xf32>
    %277 = vector.shape_cast %276 : vector<16xf32> to vector<16x1xf32>
    %278 = tpu.reciprocal %277 {approx = true} : vector<16x1xf32> -> vector<16x1xf32>
    %279 = vector.broadcast %278 : vector<16x1xf32> to vector<16x16xf32>
    %280 = arith.mulf %275, %279 : vector<16x16xf32>
    %281 = arith.truncf %280 : vector<16x16xf32> to vector<16x16xbf16>
    %cst_105 = arith.constant dense<0.000000e+00> : vector<16x32xf32>
    %282 = tpu.matmul %281, %266, %cst_105 {dimension_numbers = #tpu.dot_dimension_numbers<[1], [0], [0], [1], [0, 0, 1, 1], [], []>} : vector<16x16xbf16>, vector<16x32xbf16>, vector<16x32xf32> -> vector<16x32xf32>
    %283 = arith.truncf %282 : vector<16x32xf32> to vector<16x32xbf16>
    %284 = vector.extract_strided_slice %260 {offsets = [0, 0], sizes = [32, 128], strides = [1, 1]} : vector<128x128xbf16> to vector<32x128xbf16>
    %cst_106 = arith.constant dense<0.000000e+00> : vector<16x128xf32>
    %285 = tpu.matmul %283, %284, %cst_106 {dimension_numbers = #tpu.dot_dimension_numbers<[1], [0], [0], [1], [0, 0, 1, 1], [], []>} : vector<16x32xbf16>, vector<32x128xbf16>, vector<16x128xf32> -> vector<16x128xf32>
    %286 = vector.extract_strided_slice %257 {offsets = [0, 32], sizes = [16, 32], strides = [1, 1]} : vector<16x128xf32> to vector<16x32xf32>
    %287 = arith.truncf %286 : vector<16x32xf32> to vector<16x32xbf16>
    %288 = vector.extract_strided_slice %258 {offsets = [0, 32], sizes = [16, 32], strides = [1, 1]} : vector<16x128xf32> to vector<16x32xf32>
    %289 = arith.truncf %288 : vector<16x32xf32> to vector<16x32xbf16>
    %290 = vector.extract_strided_slice %259 {offsets = [0, 32], sizes = [16, 32], strides = [1, 1]} : vector<16x128xf32> to vector<16x32xf32>
    %291 = arith.truncf %290 : vector<16x32xf32> to vector<16x32xbf16>
    %cst_107 = arith.constant dense<0.000000e+00> : vector<16x16xf32>
    %292 = tpu.matmul %287, %289, %cst_107 {dimension_numbers = #tpu.dot_dimension_numbers<[1], [1], [0], [0], [0, 0, 1, 0], [], []>} : vector<16x32xbf16>, vector<16x32xbf16>, vector<16x16xf32> -> vector<16x16xf32>
    %cst_108 = arith.constant 0.176776692 : f32
    %293 = vector.broadcast %cst_108 : f32 to vector<16x16xf32>
    %294 = arith.mulf %292, %293 : vector<16x16xf32>
    %295 = arith.addf %294, %256 : vector<16x16xf32>
    %cst_109 = arith.constant dense<0xFF800000> : vector<16xf32>
    %296 = vector.multi_reduction <maximumf>, %295, %cst_109 [1] : vector<16x16xf32> to vector<16xf32>
    %297 = vector.shape_cast %296 : vector<16xf32> to vector<16x1xf32>
    %298 = vector.broadcast %297 : vector<16x1xf32> to vector<16x16xf32>
    %299 = arith.subf %295, %298 : vector<16x16xf32>
    %300 = math.exp %299 : vector<16x16xf32>
    %cst_110 = arith.constant dense<0.000000e+00> : vector<16xf32>
    %301 = vector.multi_reduction <add>, %300, %cst_110 [1] : vector<16x16xf32> to vector<16xf32>
    %302 = vector.shape_cast %301 : vector<16xf32> to vector<16x1xf32>
    %303 = tpu.reciprocal %302 {approx = true} : vector<16x1xf32> -> vector<16x1xf32>
    %304 = vector.broadcast %303 : vector<16x1xf32> to vector<16x16xf32>
    %305 = arith.mulf %300, %304 : vector<16x16xf32>
    %306 = arith.truncf %305 : vector<16x16xf32> to vector<16x16xbf16>
    %cst_111 = arith.constant dense<0.000000e+00> : vector<16x32xf32>
    %307 = tpu.matmul %306, %291, %cst_111 {dimension_numbers = #tpu.dot_dimension_numbers<[1], [0], [0], [1], [0, 0, 1, 1], [], []>} : vector<16x16xbf16>, vector<16x32xbf16>, vector<16x32xf32> -> vector<16x32xf32>
    %308 = arith.truncf %307 : vector<16x32xf32> to vector<16x32xbf16>
    %309 = vector.extract_strided_slice %260 {offsets = [32, 0], sizes = [32, 128], strides = [1, 1]} : vector<128x128xbf16> to vector<32x128xbf16>
    %cst_112 = arith.constant dense<0.000000e+00> : vector<16x128xf32>
    %310 = tpu.matmul %308, %309, %cst_112 {dimension_numbers = #tpu.dot_dimension_numbers<[1], [0], [0], [1], [0, 0, 1, 1], [], []>} : vector<16x32xbf16>, vector<32x128xbf16>, vector<16x128xf32> -> vector<16x128xf32>
    %311 = arith.addf %285, %310 : vector<16x128xf32>
    %312 = vector.extract_strided_slice %257 {offsets = [0, 64], sizes = [16, 32], strides = [1, 1]} : vector<16x128xf32> to vector<16x32xf32>
    %313 = arith.truncf %312 : vector<16x32xf32> to vector<16x32xbf16>
    %314 = vector.extract_strided_slice %258 {offsets = [0, 64], sizes = [16, 32], strides = [1, 1]} : vector<16x128xf32> to vector<16x32xf32>
    %315 = arith.truncf %314 : vector<16x32xf32> to vector<16x32xbf16>
    %316 = vector.extract_strided_slice %259 {offsets = [0, 64], sizes = [16, 32], strides = [1, 1]} : vector<16x128xf32> to vector<16x32xf32>
    %317 = arith.truncf %316 : vector<16x32xf32> to vector<16x32xbf16>
    %cst_113 = arith.constant dense<0.000000e+00> : vector<16x16xf32>
    %318 = tpu.matmul %313, %315, %cst_113 {dimension_numbers = #tpu.dot_dimension_numbers<[1], [1], [0], [0], [0, 0, 1, 0], [], []>} : vector<16x32xbf16>, vector<16x32xbf16>, vector<16x16xf32> -> vector<16x16xf32>
    %cst_114 = arith.constant 0.176776692 : f32
    %319 = vector.broadcast %cst_114 : f32 to vector<16x16xf32>
    %320 = arith.mulf %318, %319 : vector<16x16xf32>
    %321 = arith.addf %320, %256 : vector<16x16xf32>
    %cst_115 = arith.constant dense<0xFF800000> : vector<16xf32>
    %322 = vector.multi_reduction <maximumf>, %321, %cst_115 [1] : vector<16x16xf32> to vector<16xf32>
    %323 = vector.shape_cast %322 : vector<16xf32> to vector<16x1xf32>
    %324 = vector.broadcast %323 : vector<16x1xf32> to vector<16x16xf32>
    %325 = arith.subf %321, %324 : vector<16x16xf32>
    %326 = math.exp %325 : vector<16x16xf32>
    %cst_116 = arith.constant dense<0.000000e+00> : vector<16xf32>
    %327 = vector.multi_reduction <add>, %326, %cst_116 [1] : vector<16x16xf32> to vector<16xf32>
    %328 = vector.shape_cast %327 : vector<16xf32> to vector<16x1xf32>
    %329 = tpu.reciprocal %328 {approx = true} : vector<16x1xf32> -> vector<16x1xf32>
    %330 = vector.broadcast %329 : vector<16x1xf32> to vector<16x16xf32>
    %331 = arith.mulf %326, %330 : vector<16x16xf32>
    %332 = arith.truncf %331 : vector<16x16xf32> to vector<16x16xbf16>
    %cst_117 = arith.constant dense<0.000000e+00> : vector<16x32xf32>
    %333 = tpu.matmul %332, %317, %cst_117 {dimension_numbers = #tpu.dot_dimension_numbers<[1], [0], [0], [1], [0, 0, 1, 1], [], []>} : vector<16x16xbf16>, vector<16x32xbf16>, vector<16x32xf32> -> vector<16x32xf32>
    %334 = arith.truncf %333 : vector<16x32xf32> to vector<16x32xbf16>
    %335 = vector.extract_strided_slice %260 {offsets = [64, 0], sizes = [32, 128], strides = [1, 1]} : vector<128x128xbf16> to vector<32x128xbf16>
    %cst_118 = arith.constant dense<0.000000e+00> : vector<16x128xf32>
    %336 = tpu.matmul %334, %335, %cst_118 {dimension_numbers = #tpu.dot_dimension_numbers<[1], [0], [0], [1], [0, 0, 1, 1], [], []>} : vector<16x32xbf16>, vector<32x128xbf16>, vector<16x128xf32> -> vector<16x128xf32>
    %337 = arith.addf %311, %336 : vector<16x128xf32>
    %338 = vector.extract_strided_slice %257 {offsets = [0, 96], sizes = [16, 32], strides = [1, 1]} : vector<16x128xf32> to vector<16x32xf32>
    %339 = arith.truncf %338 : vector<16x32xf32> to vector<16x32xbf16>
    %340 = vector.extract_strided_slice %258 {offsets = [0, 96], sizes = [16, 32], strides = [1, 1]} : vector<16x128xf32> to vector<16x32xf32>
    %341 = arith.truncf %340 : vector<16x32xf32> to vector<16x32xbf16>
    %342 = vector.extract_strided_slice %259 {offsets = [0, 96], sizes = [16, 32], strides = [1, 1]} : vector<16x128xf32> to vector<16x32xf32>
    %343 = arith.truncf %342 : vector<16x32xf32> to vector<16x32xbf16>
    %cst_119 = arith.constant dense<0.000000e+00> : vector<16x16xf32>
    %344 = tpu.matmul %339, %341, %cst_119 {dimension_numbers = #tpu.dot_dimension_numbers<[1], [1], [0], [0], [0, 0, 1, 0], [], []>} : vector<16x32xbf16>, vector<16x32xbf16>, vector<16x16xf32> -> vector<16x16xf32>
    %cst_120 = arith.constant 0.176776692 : f32
    %345 = vector.broadcast %cst_120 : f32 to vector<16x16xf32>
    %346 = arith.mulf %344, %345 : vector<16x16xf32>
    %347 = arith.addf %346, %256 : vector<16x16xf32>
    %cst_121 = arith.constant dense<0xFF800000> : vector<16xf32>
    %348 = vector.multi_reduction <maximumf>, %347, %cst_121 [1] : vector<16x16xf32> to vector<16xf32>
    %349 = vector.shape_cast %348 : vector<16xf32> to vector<16x1xf32>
    %350 = vector.broadcast %349 : vector<16x1xf32> to vector<16x16xf32>
    %351 = arith.subf %347, %350 : vector<16x16xf32>
    %352 = math.exp %351 : vector<16x16xf32>
    %cst_122 = arith.constant dense<0.000000e+00> : vector<16xf32>
    %353 = vector.multi_reduction <add>, %352, %cst_122 [1] : vector<16x16xf32> to vector<16xf32>
    %354 = vector.shape_cast %353 : vector<16xf32> to vector<16x1xf32>
    %355 = tpu.reciprocal %354 {approx = true} : vector<16x1xf32> -> vector<16x1xf32>
    %356 = vector.broadcast %355 : vector<16x1xf32> to vector<16x16xf32>
    %357 = arith.mulf %352, %356 : vector<16x16xf32>
    %358 = arith.truncf %357 : vector<16x16xf32> to vector<16x16xbf16>
    %cst_123 = arith.constant dense<0.000000e+00> : vector<16x32xf32>
    %359 = tpu.matmul %358, %343, %cst_123 {dimension_numbers = #tpu.dot_dimension_numbers<[1], [0], [0], [1], [0, 0, 1, 1], [], []>} : vector<16x16xbf16>, vector<16x32xbf16>, vector<16x32xf32> -> vector<16x32xf32>
    %360 = arith.truncf %359 : vector<16x32xf32> to vector<16x32xbf16>
    %361 = vector.extract_strided_slice %260 {offsets = [96, 0], sizes = [32, 128], strides = [1, 1]} : vector<128x128xbf16> to vector<32x128xbf16>
    %cst_124 = arith.constant dense<0.000000e+00> : vector<16x128xf32>
    %362 = tpu.matmul %360, %361, %cst_124 {dimension_numbers = #tpu.dot_dimension_numbers<[1], [0], [0], [1], [0, 0, 1, 1], [], []>} : vector<16x32xbf16>, vector<32x128xbf16>, vector<16x128xf32> -> vector<16x128xf32>
    %363 = arith.addf %337, %362 : vector<16x128xf32>
    %c0_125 = arith.constant 0 : index
    %c0_126 = arith.constant 0 : index
    %364 = vector.load %arg24[%c0_125, %c0_126] : memref<1x128xf32, #tpu.memory_space<vmem>>, vector<1x128xf32>
    %365 = vector.broadcast %364 : vector<1x128xf32> to vector<16x128xf32>
    %366 = arith.addf %363, %365 : vector<16x128xf32>
    %367 = arith.addf %244, %366 : vector<16x128xf32>
    %c0_127 = arith.constant 0 : index
    %c0_128 = arith.constant 0 : index
    %368 = vector.load %arg25[%c0_127, %c0_128] : memref<1x128xf32, #tpu.memory_space<vmem>>, vector<1x128xf32>
    %c0_129 = arith.constant 0 : index
    %c0_130 = arith.constant 0 : index
    %369 = vector.load %arg26[%c0_129, %c0_130] : memref<1x128xf32, #tpu.memory_space<vmem>>, vector<1x128xf32>
    %cst_131 = arith.constant dense<0.000000e+00> : vector<16xf32>
    %370 = vector.multi_reduction <add>, %367, %cst_131 [1] : vector<16x128xf32> to vector<16xf32>
    %371 = vector.shape_cast %370 : vector<16xf32> to vector<16x1xf32>
    %cst_132 = arith.constant 1.280000e+02 : f32
    %372 = vector.broadcast %cst_132 : f32 to vector<16x1xf32>
    %373 = arith.divf %371, %372 : vector<16x1xf32>
    %374 = vector.broadcast %373 : vector<16x1xf32> to vector<16x128xf32>
    %375 = arith.subf %367, %374 : vector<16x128xf32>
    %376 = arith.mulf %375, %375 : vector<16x128xf32>
    %cst_133 = arith.constant dense<0.000000e+00> : vector<16xf32>
    %377 = vector.multi_reduction <add>, %376, %cst_133 [1] : vector<16x128xf32> to vector<16xf32>
    %378 = vector.shape_cast %377 : vector<16xf32> to vector<16x1xf32>
    %cst_134 = arith.constant 1.280000e+02 : f32
    %379 = vector.broadcast %cst_134 : f32 to vector<16x1xf32>
    %380 = arith.divf %378, %379 : vector<16x1xf32>
    %cst_135 = arith.constant 9.99999974E-6 : f32
    %381 = vector.broadcast %cst_135 : f32 to vector<16x1xf32>
    %382 = arith.addf %380, %381 : vector<16x1xf32>
    %383 = math.rsqrt %382 : vector<16x1xf32>
    %384 = vector.broadcast %383 : vector<16x1xf32> to vector<16x128xf32>
    %385 = arith.mulf %375, %384 : vector<16x128xf32>
    %386 = vector.broadcast %368 : vector<1x128xf32> to vector<16x128xf32>
    %387 = arith.mulf %385, %386 : vector<16x128xf32>
    %388 = vector.broadcast %369 : vector<1x128xf32> to vector<16x128xf32>
    %389 = arith.addf %387, %388 : vector<16x128xf32>
    %c0_136 = arith.constant 0 : index
    %c0_137 = arith.constant 0 : index
    %390 = vector.load %arg27[%c0_136, %c0_137] : memref<128x128xbf16, #tpu.memory_space<vmem>>, vector<128x128xbf16>
    %391 = arith.truncf %389 : vector<16x128xf32> to vector<16x128xbf16>
    %cst_138 = arith.constant dense<0.000000e+00> : vector<16x128xf32>
    %392 = tpu.matmul %391, %390, %cst_138 {dimension_numbers = #tpu.dot_dimension_numbers<[1], [0], [0], [1], [0, 0, 1, 1], [], []>} : vector<16x128xbf16>, vector<128x128xbf16>, vector<16x128xf32> -> vector<16x128xf32>
    %c0_139 = arith.constant 0 : index
    %c0_140 = arith.constant 0 : index
    %393 = vector.load %arg28[%c0_139, %c0_140] : memref<1x128xf32, #tpu.memory_space<vmem>>, vector<1x128xf32>
    %394 = vector.broadcast %393 : vector<1x128xf32> to vector<16x128xf32>
    %395 = arith.addf %392, %394 : vector<16x128xf32>
    %c0_141 = arith.constant 0 : index
    %c0_142 = arith.constant 0 : index
    %396 = vector.load %arg29[%c0_141, %c0_142] : memref<128x256xbf16, #tpu.memory_space<vmem>>, vector<128x256xbf16>
    %397 = arith.truncf %220 : vector<16x128xf32> to vector<16x128xbf16>
    %cst_143 = arith.constant dense<0.000000e+00> : vector<16x256xf32>
    %398 = tpu.matmul %397, %396, %cst_143 {dimension_numbers = #tpu.dot_dimension_numbers<[1], [0], [0], [1], [0, 0, 1, 1], [], []>} : vector<16x128xbf16>, vector<128x256xbf16>, vector<16x256xf32> -> vector<16x256xf32>
    %c0_144 = arith.constant 0 : index
    %c0_145 = arith.constant 0 : index
    %399 = vector.load %arg30[%c0_144, %c0_145] : memref<1x256xf32, #tpu.memory_space<vmem>>, vector<1x256xf32>
    %400 = vector.broadcast %399 : vector<1x256xf32> to vector<16x256xf32>
    %401 = arith.addf %398, %400 : vector<16x256xf32>
    %402 = vector.extract_strided_slice %401 {offsets = [0, 0], sizes = [16, 128], strides = [1, 1]} : vector<16x256xf32> to vector<16x128xf32>
    %403 = vector.extract_strided_slice %401 {offsets = [0, 128], sizes = [16, 128], strides = [1, 1]} : vector<16x256xf32> to vector<16x128xf32>
    %c0_146 = arith.constant 0 : index
    %c0_147 = arith.constant 0 : index
    %404 = vector.load %arg31[%c0_146, %c0_147] : memref<128x128xbf16, #tpu.memory_space<vmem>>, vector<128x128xbf16>
    %405 = vector.extract_strided_slice %395 {offsets = [0, 0], sizes = [16, 32], strides = [1, 1]} : vector<16x128xf32> to vector<16x32xf32>
    %406 = arith.truncf %405 : vector<16x32xf32> to vector<16x32xbf16>
    %407 = vector.extract_strided_slice %402 {offsets = [0, 0], sizes = [16, 32], strides = [1, 1]} : vector<16x128xf32> to vector<16x32xf32>
    %408 = arith.truncf %407 : vector<16x32xf32> to vector<16x32xbf16>
    %409 = vector.extract_strided_slice %403 {offsets = [0, 0], sizes = [16, 32], strides = [1, 1]} : vector<16x128xf32> to vector<16x32xf32>
    %410 = arith.truncf %409 : vector<16x32xf32> to vector<16x32xbf16>
    %cst_148 = arith.constant dense<0.000000e+00> : vector<16x16xf32>
    %411 = tpu.matmul %406, %408, %cst_148 {dimension_numbers = #tpu.dot_dimension_numbers<[1], [1], [0], [0], [0, 0, 1, 0], [], []>} : vector<16x32xbf16>, vector<16x32xbf16>, vector<16x16xf32> -> vector<16x16xf32>
    %cst_149 = arith.constant 0.176776692 : f32
    %412 = vector.broadcast %cst_149 : f32 to vector<16x16xf32>
    %413 = arith.mulf %411, %412 : vector<16x16xf32>
    %414 = vector.broadcast %7 : vector<1x16xf32> to vector<16x16xf32>
    %415 = arith.addf %413, %414 : vector<16x16xf32>
    %cst_150 = arith.constant dense<0xFF800000> : vector<16xf32>
    %416 = vector.multi_reduction <maximumf>, %415, %cst_150 [1] : vector<16x16xf32> to vector<16xf32>
    %417 = vector.shape_cast %416 : vector<16xf32> to vector<16x1xf32>
    %418 = vector.broadcast %417 : vector<16x1xf32> to vector<16x16xf32>
    %419 = arith.subf %415, %418 : vector<16x16xf32>
    %420 = math.exp %419 : vector<16x16xf32>
    %cst_151 = arith.constant dense<0.000000e+00> : vector<16xf32>
    %421 = vector.multi_reduction <add>, %420, %cst_151 [1] : vector<16x16xf32> to vector<16xf32>
    %422 = vector.shape_cast %421 : vector<16xf32> to vector<16x1xf32>
    %423 = tpu.reciprocal %422 {approx = true} : vector<16x1xf32> -> vector<16x1xf32>
    %424 = vector.broadcast %423 : vector<16x1xf32> to vector<16x16xf32>
    %425 = arith.mulf %420, %424 : vector<16x16xf32>
    %426 = arith.truncf %425 : vector<16x16xf32> to vector<16x16xbf16>
    %cst_152 = arith.constant dense<0.000000e+00> : vector<16x32xf32>
    %427 = tpu.matmul %426, %410, %cst_152 {dimension_numbers = #tpu.dot_dimension_numbers<[1], [0], [0], [1], [0, 0, 1, 1], [], []>} : vector<16x16xbf16>, vector<16x32xbf16>, vector<16x32xf32> -> vector<16x32xf32>
    %428 = arith.truncf %427 : vector<16x32xf32> to vector<16x32xbf16>
    %429 = vector.extract_strided_slice %404 {offsets = [0, 0], sizes = [32, 128], strides = [1, 1]} : vector<128x128xbf16> to vector<32x128xbf16>
    %cst_153 = arith.constant dense<0.000000e+00> : vector<16x128xf32>
    %430 = tpu.matmul %428, %429, %cst_153 {dimension_numbers = #tpu.dot_dimension_numbers<[1], [0], [0], [1], [0, 0, 1, 1], [], []>} : vector<16x32xbf16>, vector<32x128xbf16>, vector<16x128xf32> -> vector<16x128xf32>
    %431 = vector.extract_strided_slice %395 {offsets = [0, 32], sizes = [16, 32], strides = [1, 1]} : vector<16x128xf32> to vector<16x32xf32>
    %432 = arith.truncf %431 : vector<16x32xf32> to vector<16x32xbf16>
    %433 = vector.extract_strided_slice %402 {offsets = [0, 32], sizes = [16, 32], strides = [1, 1]} : vector<16x128xf32> to vector<16x32xf32>
    %434 = arith.truncf %433 : vector<16x32xf32> to vector<16x32xbf16>
    %435 = vector.extract_strided_slice %403 {offsets = [0, 32], sizes = [16, 32], strides = [1, 1]} : vector<16x128xf32> to vector<16x32xf32>
    %436 = arith.truncf %435 : vector<16x32xf32> to vector<16x32xbf16>
    %cst_154 = arith.constant dense<0.000000e+00> : vector<16x16xf32>
    %437 = tpu.matmul %432, %434, %cst_154 {dimension_numbers = #tpu.dot_dimension_numbers<[1], [1], [0], [0], [0, 0, 1, 0], [], []>} : vector<16x32xbf16>, vector<16x32xbf16>, vector<16x16xf32> -> vector<16x16xf32>
    %cst_155 = arith.constant 0.176776692 : f32
    %438 = vector.broadcast %cst_155 : f32 to vector<16x16xf32>
    %439 = arith.mulf %437, %438 : vector<16x16xf32>
    %440 = vector.broadcast %7 : vector<1x16xf32> to vector<16x16xf32>
    %441 = arith.addf %439, %440 : vector<16x16xf32>
    %cst_156 = arith.constant dense<0xFF800000> : vector<16xf32>
    %442 = vector.multi_reduction <maximumf>, %441, %cst_156 [1] : vector<16x16xf32> to vector<16xf32>
    %443 = vector.shape_cast %442 : vector<16xf32> to vector<16x1xf32>
    %444 = vector.broadcast %443 : vector<16x1xf32> to vector<16x16xf32>
    %445 = arith.subf %441, %444 : vector<16x16xf32>
    %446 = math.exp %445 : vector<16x16xf32>
    %cst_157 = arith.constant dense<0.000000e+00> : vector<16xf32>
    %447 = vector.multi_reduction <add>, %446, %cst_157 [1] : vector<16x16xf32> to vector<16xf32>
    %448 = vector.shape_cast %447 : vector<16xf32> to vector<16x1xf32>
    %449 = tpu.reciprocal %448 {approx = true} : vector<16x1xf32> -> vector<16x1xf32>
    %450 = vector.broadcast %449 : vector<16x1xf32> to vector<16x16xf32>
    %451 = arith.mulf %446, %450 : vector<16x16xf32>
    %452 = arith.truncf %451 : vector<16x16xf32> to vector<16x16xbf16>
    %cst_158 = arith.constant dense<0.000000e+00> : vector<16x32xf32>
    %453 = tpu.matmul %452, %436, %cst_158 {dimension_numbers = #tpu.dot_dimension_numbers<[1], [0], [0], [1], [0, 0, 1, 1], [], []>} : vector<16x16xbf16>, vector<16x32xbf16>, vector<16x32xf32> -> vector<16x32xf32>
    %454 = arith.truncf %453 : vector<16x32xf32> to vector<16x32xbf16>
    %455 = vector.extract_strided_slice %404 {offsets = [32, 0], sizes = [32, 128], strides = [1, 1]} : vector<128x128xbf16> to vector<32x128xbf16>
    %cst_159 = arith.constant dense<0.000000e+00> : vector<16x128xf32>
    %456 = tpu.matmul %454, %455, %cst_159 {dimension_numbers = #tpu.dot_dimension_numbers<[1], [0], [0], [1], [0, 0, 1, 1], [], []>} : vector<16x32xbf16>, vector<32x128xbf16>, vector<16x128xf32> -> vector<16x128xf32>
    %457 = arith.addf %430, %456 : vector<16x128xf32>
    %458 = vector.extract_strided_slice %395 {offsets = [0, 64], sizes = [16, 32], strides = [1, 1]} : vector<16x128xf32> to vector<16x32xf32>
    %459 = arith.truncf %458 : vector<16x32xf32> to vector<16x32xbf16>
    %460 = vector.extract_strided_slice %402 {offsets = [0, 64], sizes = [16, 32], strides = [1, 1]} : vector<16x128xf32> to vector<16x32xf32>
    %461 = arith.truncf %460 : vector<16x32xf32> to vector<16x32xbf16>
    %462 = vector.extract_strided_slice %403 {offsets = [0, 64], sizes = [16, 32], strides = [1, 1]} : vector<16x128xf32> to vector<16x32xf32>
    %463 = arith.truncf %462 : vector<16x32xf32> to vector<16x32xbf16>
    %cst_160 = arith.constant dense<0.000000e+00> : vector<16x16xf32>
    %464 = tpu.matmul %459, %461, %cst_160 {dimension_numbers = #tpu.dot_dimension_numbers<[1], [1], [0], [0], [0, 0, 1, 0], [], []>} : vector<16x32xbf16>, vector<16x32xbf16>, vector<16x16xf32> -> vector<16x16xf32>
    %cst_161 = arith.constant 0.176776692 : f32
    %465 = vector.broadcast %cst_161 : f32 to vector<16x16xf32>
    %466 = arith.mulf %464, %465 : vector<16x16xf32>
    %467 = vector.broadcast %7 : vector<1x16xf32> to vector<16x16xf32>
    %468 = arith.addf %466, %467 : vector<16x16xf32>
    %cst_162 = arith.constant dense<0xFF800000> : vector<16xf32>
    %469 = vector.multi_reduction <maximumf>, %468, %cst_162 [1] : vector<16x16xf32> to vector<16xf32>
    %470 = vector.shape_cast %469 : vector<16xf32> to vector<16x1xf32>
    %471 = vector.broadcast %470 : vector<16x1xf32> to vector<16x16xf32>
    %472 = arith.subf %468, %471 : vector<16x16xf32>
    %473 = math.exp %472 : vector<16x16xf32>
    %cst_163 = arith.constant dense<0.000000e+00> : vector<16xf32>
    %474 = vector.multi_reduction <add>, %473, %cst_163 [1] : vector<16x16xf32> to vector<16xf32>
    %475 = vector.shape_cast %474 : vector<16xf32> to vector<16x1xf32>
    %476 = tpu.reciprocal %475 {approx = true} : vector<16x1xf32> -> vector<16x1xf32>
    %477 = vector.broadcast %476 : vector<16x1xf32> to vector<16x16xf32>
    %478 = arith.mulf %473, %477 : vector<16x16xf32>
    %479 = arith.truncf %478 : vector<16x16xf32> to vector<16x16xbf16>
    %cst_164 = arith.constant dense<0.000000e+00> : vector<16x32xf32>
    %480 = tpu.matmul %479, %463, %cst_164 {dimension_numbers = #tpu.dot_dimension_numbers<[1], [0], [0], [1], [0, 0, 1, 1], [], []>} : vector<16x16xbf16>, vector<16x32xbf16>, vector<16x32xf32> -> vector<16x32xf32>
    %481 = arith.truncf %480 : vector<16x32xf32> to vector<16x32xbf16>
    %482 = vector.extract_strided_slice %404 {offsets = [64, 0], sizes = [32, 128], strides = [1, 1]} : vector<128x128xbf16> to vector<32x128xbf16>
    %cst_165 = arith.constant dense<0.000000e+00> : vector<16x128xf32>
    %483 = tpu.matmul %481, %482, %cst_165 {dimension_numbers = #tpu.dot_dimension_numbers<[1], [0], [0], [1], [0, 0, 1, 1], [], []>} : vector<16x32xbf16>, vector<32x128xbf16>, vector<16x128xf32> -> vector<16x128xf32>
    %484 = arith.addf %457, %483 : vector<16x128xf32>
    %485 = vector.extract_strided_slice %395 {offsets = [0, 96], sizes = [16, 32], strides = [1, 1]} : vector<16x128xf32> to vector<16x32xf32>
    %486 = arith.truncf %485 : vector<16x32xf32> to vector<16x32xbf16>
    %487 = vector.extract_strided_slice %402 {offsets = [0, 96], sizes = [16, 32], strides = [1, 1]} : vector<16x128xf32> to vector<16x32xf32>
    %488 = arith.truncf %487 : vector<16x32xf32> to vector<16x32xbf16>
    %489 = vector.extract_strided_slice %403 {offsets = [0, 96], sizes = [16, 32], strides = [1, 1]} : vector<16x128xf32> to vector<16x32xf32>
    %490 = arith.truncf %489 : vector<16x32xf32> to vector<16x32xbf16>
    %cst_166 = arith.constant dense<0.000000e+00> : vector<16x16xf32>
    %491 = tpu.matmul %486, %488, %cst_166 {dimension_numbers = #tpu.dot_dimension_numbers<[1], [1], [0], [0], [0, 0, 1, 0], [], []>} : vector<16x32xbf16>, vector<16x32xbf16>, vector<16x16xf32> -> vector<16x16xf32>
    %cst_167 = arith.constant 0.176776692 : f32
    %492 = vector.broadcast %cst_167 : f32 to vector<16x16xf32>
    %493 = arith.mulf %491, %492 : vector<16x16xf32>
    %494 = vector.broadcast %7 : vector<1x16xf32> to vector<16x16xf32>
    %495 = arith.addf %493, %494 : vector<16x16xf32>
    %cst_168 = arith.constant dense<0xFF800000> : vector<16xf32>
    %496 = vector.multi_reduction <maximumf>, %495, %cst_168 [1] : vector<16x16xf32> to vector<16xf32>
    %497 = vector.shape_cast %496 : vector<16xf32> to vector<16x1xf32>
    %498 = vector.broadcast %497 : vector<16x1xf32> to vector<16x16xf32>
    %499 = arith.subf %495, %498 : vector<16x16xf32>
    %500 = math.exp %499 : vector<16x16xf32>
    %cst_169 = arith.constant dense<0.000000e+00> : vector<16xf32>
    %501 = vector.multi_reduction <add>, %500, %cst_169 [1] : vector<16x16xf32> to vector<16xf32>
    %502 = vector.shape_cast %501 : vector<16xf32> to vector<16x1xf32>
    %503 = tpu.reciprocal %502 {approx = true} : vector<16x1xf32> -> vector<16x1xf32>
    %504 = vector.broadcast %503 : vector<16x1xf32> to vector<16x16xf32>
    %505 = arith.mulf %500, %504 : vector<16x16xf32>
    %506 = arith.truncf %505 : vector<16x16xf32> to vector<16x16xbf16>
    %cst_170 = arith.constant dense<0.000000e+00> : vector<16x32xf32>
    %507 = tpu.matmul %506, %490, %cst_170 {dimension_numbers = #tpu.dot_dimension_numbers<[1], [0], [0], [1], [0, 0, 1, 1], [], []>} : vector<16x16xbf16>, vector<16x32xbf16>, vector<16x32xf32> -> vector<16x32xf32>
    %508 = arith.truncf %507 : vector<16x32xf32> to vector<16x32xbf16>
    %509 = vector.extract_strided_slice %404 {offsets = [96, 0], sizes = [32, 128], strides = [1, 1]} : vector<128x128xbf16> to vector<32x128xbf16>
    %cst_171 = arith.constant dense<0.000000e+00> : vector<16x128xf32>
    %510 = tpu.matmul %508, %509, %cst_171 {dimension_numbers = #tpu.dot_dimension_numbers<[1], [0], [0], [1], [0, 0, 1, 1], [], []>} : vector<16x32xbf16>, vector<32x128xbf16>, vector<16x128xf32> -> vector<16x128xf32>
    %511 = arith.addf %484, %510 : vector<16x128xf32>
    %c0_172 = arith.constant 0 : index
    %c0_173 = arith.constant 0 : index
    %512 = vector.load %arg32[%c0_172, %c0_173] : memref<1x128xf32, #tpu.memory_space<vmem>>, vector<1x128xf32>
    %513 = vector.broadcast %512 : vector<1x128xf32> to vector<16x128xf32>
    %514 = arith.addf %511, %513 : vector<16x128xf32>
    %515 = arith.addf %389, %514 : vector<16x128xf32>
    %c0_174 = arith.constant 0 : index
    %c0_175 = arith.constant 0 : index
    %516 = vector.load %arg33[%c0_174, %c0_175] : memref<1x128xf32, #tpu.memory_space<vmem>>, vector<1x128xf32>
    %c0_176 = arith.constant 0 : index
    %c0_177 = arith.constant 0 : index
    %517 = vector.load %arg34[%c0_176, %c0_177] : memref<1x128xf32, #tpu.memory_space<vmem>>, vector<1x128xf32>
    %cst_178 = arith.constant dense<0.000000e+00> : vector<16xf32>
    %518 = vector.multi_reduction <add>, %515, %cst_178 [1] : vector<16x128xf32> to vector<16xf32>
    %519 = vector.shape_cast %518 : vector<16xf32> to vector<16x1xf32>
    %cst_179 = arith.constant 1.280000e+02 : f32
    %520 = vector.broadcast %cst_179 : f32 to vector<16x1xf32>
    %521 = arith.divf %519, %520 : vector<16x1xf32>
    %522 = vector.broadcast %521 : vector<16x1xf32> to vector<16x128xf32>
    %523 = arith.subf %515, %522 : vector<16x128xf32>
    %524 = arith.mulf %523, %523 : vector<16x128xf32>
    %cst_180 = arith.constant dense<0.000000e+00> : vector<16xf32>
    %525 = vector.multi_reduction <add>, %524, %cst_180 [1] : vector<16x128xf32> to vector<16xf32>
    %526 = vector.shape_cast %525 : vector<16xf32> to vector<16x1xf32>
    %cst_181 = arith.constant 1.280000e+02 : f32
    %527 = vector.broadcast %cst_181 : f32 to vector<16x1xf32>
    %528 = arith.divf %526, %527 : vector<16x1xf32>
    %cst_182 = arith.constant 9.99999974E-6 : f32
    %529 = vector.broadcast %cst_182 : f32 to vector<16x1xf32>
    %530 = arith.addf %528, %529 : vector<16x1xf32>
    %531 = math.rsqrt %530 : vector<16x1xf32>
    %532 = vector.broadcast %531 : vector<16x1xf32> to vector<16x128xf32>
    %533 = arith.mulf %523, %532 : vector<16x128xf32>
    %534 = vector.broadcast %516 : vector<1x128xf32> to vector<16x128xf32>
    %535 = arith.mulf %533, %534 : vector<16x128xf32>
    %536 = vector.broadcast %517 : vector<1x128xf32> to vector<16x128xf32>
    %537 = arith.addf %535, %536 : vector<16x128xf32>
    %c0_183 = arith.constant 0 : index
    %c0_184 = arith.constant 0 : index
    %538 = vector.load %arg35[%c0_183, %c0_184] : memref<128x256xbf16, #tpu.memory_space<vmem>>, vector<128x256xbf16>
    %539 = arith.truncf %537 : vector<16x128xf32> to vector<16x128xbf16>
    %cst_185 = arith.constant dense<0.000000e+00> : vector<16x256xf32>
    %540 = tpu.matmul %539, %538, %cst_185 {dimension_numbers = #tpu.dot_dimension_numbers<[1], [0], [0], [1], [0, 0, 1, 1], [], []>} : vector<16x128xbf16>, vector<128x256xbf16>, vector<16x256xf32> -> vector<16x256xf32>
    %c0_186 = arith.constant 0 : index
    %c0_187 = arith.constant 0 : index
    %541 = vector.load %arg36[%c0_186, %c0_187] : memref<1x256xf32, #tpu.memory_space<vmem>>, vector<1x256xf32>
    %542 = vector.broadcast %541 : vector<1x256xf32> to vector<16x256xf32>
    %543 = arith.addf %540, %542 : vector<16x256xf32>
    %544 = arith.mulf %543, %543 : vector<16x256xf32>
    %545 = arith.mulf %543, %544 : vector<16x256xf32>
    %cst_188 = arith.constant 4.471500e-02 : f32
    %546 = vector.broadcast %cst_188 : f32 to vector<16x256xf32>
    %547 = arith.mulf %546, %545 : vector<16x256xf32>
    %548 = arith.addf %543, %547 : vector<16x256xf32>
    %cst_189 = arith.constant 0.797884583 : f32
    %549 = vector.broadcast %cst_189 : f32 to vector<16x256xf32>
    %550 = arith.mulf %549, %548 : vector<16x256xf32>
    %551 = math.tanh %550 : vector<16x256xf32>
    %cst_190 = arith.constant 1.000000e+00 : f32
    %552 = vector.broadcast %cst_190 : f32 to vector<16x256xf32>
    %553 = arith.addf %552, %551 : vector<16x256xf32>
    %cst_191 = arith.constant 5.000000e-01 : f32
    %554 = vector.broadcast %cst_191 : f32 to vector<16x256xf32>
    %555 = arith.mulf %554, %553 : vector<16x256xf32>
    %556 = arith.mulf %543, %555 : vector<16x256xf32>
    %c0_192 = arith.constant 0 : index
    %c0_193 = arith.constant 0 : index
    %557 = vector.load %arg37[%c0_192, %c0_193] : memref<256x128xbf16, #tpu.memory_space<vmem>>, vector<256x128xbf16>
    %558 = arith.truncf %556 : vector<16x256xf32> to vector<16x256xbf16>
    %cst_194 = arith.constant dense<0.000000e+00> : vector<16x128xf32>
    %559 = tpu.matmul %558, %557, %cst_194 {dimension_numbers = #tpu.dot_dimension_numbers<[1], [0], [0], [1], [0, 0, 1, 1], [], []>} : vector<16x256xbf16>, vector<256x128xbf16>, vector<16x128xf32> -> vector<16x128xf32>
    %c0_195 = arith.constant 0 : index
    %c0_196 = arith.constant 0 : index
    %560 = vector.load %arg38[%c0_195, %c0_196] : memref<1x128xf32, #tpu.memory_space<vmem>>, vector<1x128xf32>
    %561 = vector.broadcast %560 : vector<1x128xf32> to vector<16x128xf32>
    %562 = arith.addf %559, %561 : vector<16x128xf32>
    %563 = arith.addf %537, %562 : vector<16x128xf32>
    %c0_197 = arith.constant 0 : index
    %c0_198 = arith.constant 0 : index
    %564 = vector.load %arg39[%c0_197, %c0_198] : memref<1x128xf32, #tpu.memory_space<vmem>>, vector<1x128xf32>
    %c0_199 = arith.constant 0 : index
    %c0_200 = arith.constant 0 : index
    %565 = vector.load %arg40[%c0_199, %c0_200] : memref<1x128xf32, #tpu.memory_space<vmem>>, vector<1x128xf32>
    %cst_201 = arith.constant dense<0.000000e+00> : vector<16xf32>
    %566 = vector.multi_reduction <add>, %563, %cst_201 [1] : vector<16x128xf32> to vector<16xf32>
    %567 = vector.shape_cast %566 : vector<16xf32> to vector<16x1xf32>
    %cst_202 = arith.constant 1.280000e+02 : f32
    %568 = vector.broadcast %cst_202 : f32 to vector<16x1xf32>
    %569 = arith.divf %567, %568 : vector<16x1xf32>
    %570 = vector.broadcast %569 : vector<16x1xf32> to vector<16x128xf32>
    %571 = arith.subf %563, %570 : vector<16x128xf32>
    %572 = arith.mulf %571, %571 : vector<16x128xf32>
    %cst_203 = arith.constant dense<0.000000e+00> : vector<16xf32>
    %573 = vector.multi_reduction <add>, %572, %cst_203 [1] : vector<16x128xf32> to vector<16xf32>
    %574 = vector.shape_cast %573 : vector<16xf32> to vector<16x1xf32>
    %cst_204 = arith.constant 1.280000e+02 : f32
    %575 = vector.broadcast %cst_204 : f32 to vector<16x1xf32>
    %576 = arith.divf %574, %575 : vector<16x1xf32>
    %cst_205 = arith.constant 9.99999974E-6 : f32
    %577 = vector.broadcast %cst_205 : f32 to vector<16x1xf32>
    %578 = arith.addf %576, %577 : vector<16x1xf32>
    %579 = math.rsqrt %578 : vector<16x1xf32>
    %580 = vector.broadcast %579 : vector<16x1xf32> to vector<16x128xf32>
    %581 = arith.mulf %571, %580 : vector<16x128xf32>
    %582 = vector.broadcast %564 : vector<1x128xf32> to vector<16x128xf32>
    %583 = arith.mulf %581, %582 : vector<16x128xf32>
    %584 = vector.broadcast %565 : vector<1x128xf32> to vector<16x128xf32>
    %585 = arith.addf %583, %584 : vector<16x128xf32>
    %586 = arith.truncf %585 : vector<16x128xf32> to vector<16x128xbf16>
    %c0_206 = arith.constant 0 : index
    %c0_207 = arith.constant 0 : index
    %587 = vector.load %arg41[%c0_206, %c0_207] : memref<512x128xbf16, #tpu.memory_space<vmem>>, vector<512x128xbf16>
    %cst_208 = arith.constant dense<0.000000e+00> : vector<16x512xf32>
    %588 = tpu.matmul %586, %587, %cst_208 {dimension_numbers = #tpu.dot_dimension_numbers<[1], [1], [0], [0], [0, 0, 1, 0], [], []>} : vector<16x128xbf16>, vector<512x128xbf16>, vector<16x512xf32> -> vector<16x512xf32>
    %c0_209 = arith.constant 0 : index
    %c0_210 = arith.constant 0 : index
    %589 = vector.load %arg42[%c0_209, %c0_210] : memref<1x512xf32, #tpu.memory_space<vmem>>, vector<1x512xf32>
    %590 = vector.broadcast %589 : vector<1x512xf32> to vector<16x512xf32>
    %591 = arith.addf %588, %590 : vector<16x512xf32>
    %cst_211 = arith.constant dense<0xFF800000> : vector<16xf32>
    %592 = vector.multi_reduction <maximumf>, %591, %cst_211 [1] : vector<16x512xf32> to vector<16xf32>
    %593 = vector.shape_cast %592 : vector<16xf32> to vector<16x1xf32>
    %594 = vector.broadcast %593 : vector<16x1xf32> to vector<16x512xf32>
    %595 = arith.subf %591, %594 : vector<16x512xf32>
    %596 = math.exp %595 : vector<16x512xf32>
    %cst_212 = arith.constant dense<0.000000e+00> : vector<16xf32>
    %597 = vector.multi_reduction <add>, %596, %cst_212 [1] : vector<16x512xf32> to vector<16xf32>
    %598 = vector.shape_cast %597 : vector<16xf32> to vector<16x1xf32>
    %599 = math.log %598 : vector<16x1xf32>
    %600 = arith.addf %593, %599 : vector<16x1xf32>
    %c0_213 = arith.constant 0 : index
    %c0_214 = arith.constant 0 : index
    %c0_215 = arith.constant 0 : index
    %601 = vector.load %arg4[%c0_213, %c0_214, %c0_215] : memref<1x16x1xi32, #tpu.memory_space<vmem>>, vector<1x16x1xi32>
    %602 = vector.shape_cast %601 : vector<1x16x1xi32> to vector<16x1xi32>
    %603 = tpu.iota {dimensions = array<i32: 1>} : vector<16x512xi32>
    %604 = vector.broadcast %602 : vector<16x1xi32> to vector<16x512xi32>
    %605 = arith.cmpi eq, %603, %604 : vector<16x512xi32>
    %cst_216 = arith.constant 0.000000e+00 : f32
    %606 = vector.broadcast %cst_216 : f32 to vector<16x512xf32>
    %607 = arith.select %605, %591, %606 : vector<16x512xi1>, vector<16x512xf32>
    %cst_217 = arith.constant dense<0.000000e+00> : vector<16xf32>
    %608 = vector.multi_reduction <add>, %607, %cst_217 [1] : vector<16x512xf32> to vector<16xf32>
    %609 = vector.shape_cast %608 : vector<16xf32> to vector<16x1xf32>
    %c-100_i32 = arith.constant -100 : i32
    %610 = vector.broadcast %c-100_i32 : i32 to vector<16x1xi32>
    %611 = arith.cmpi ne, %602, %610 : vector<16x1xi32>
    %612 = arith.extui %611 : vector<16x1xi1> to vector<16x1xi32>
    %613 = arith.sitofp %612 : vector<16x1xi32> to vector<16x1xf32>
    %614 = arith.subf %600, %609 : vector<16x1xf32>
    %615 = arith.mulf %614, %613 : vector<16x1xf32>
    %c0_218 = arith.constant 0 : index
    %c0_219 = arith.constant 0 : index
    %c0_220 = arith.constant 0 : index
    %616 = vector.load %arg43[%c0_218, %c0_219, %c0_220] : memref<1x16x1xf32, #tpu.memory_space<vmem>>, vector<1x16x1xf32>
    %617 = vector.shape_cast %616 : vector<1x16x1xf32> to vector<16x1xf32>
    %618 = vector.shape_cast %615 : vector<16x1xf32> to vector<1x16x1xf32>
    tpu.vector_store %arg43[%c0_218, %c0_219, %c0_220], %618 {strides = array<i32>} : memref<1x16x1xf32, #tpu.memory_space<vmem>>, vector<1x16x1xf32>,
    return
  }
  func.func @transform_0(%arg0: i32) -> (i32, i32, i32) {
    %c0_i32 = arith.constant 0 : i32
    %c0_i32_0 = arith.constant 0 : i32
    %c0_i32_1 = arith.constant 0 : i32
    return %arg0, %c0_i32, %c0_i32_0 : i32, i32, i32
  }
  func.func @transform_1(%arg0: i32) -> (i32, i32, i32) {
    %c0_i32 = arith.constant 0 : i32
    %c0_i32_0 = arith.constant 0 : i32
    %c0_i32_1 = arith.constant 0 : i32
    return %arg0, %c0_i32, %c0_i32_0 : i32, i32, i32
  }
  func.func @transform_2(%arg0: i32) -> (i32, i32, i32) {
    %c0_i32 = arith.constant 0 : i32
    %c0_i32_0 = arith.constant 0 : i32
    %c0_i32_1 = arith.constant 0 : i32
    return %arg0, %c0_i32, %c0_i32_0 : i32, i32, i32
  }
  func.func @transform_3(%arg0: i32) -> (i32, i32, i32) {
    %c0_i32 = arith.constant 0 : i32
    %c0_i32_0 = arith.constant 0 : i32
    %c0_i32_1 = arith.constant 0 : i32
    return %arg0, %c0_i32, %c0_i32_0 : i32, i32, i32
  }
  func.func @transform_4(%arg0: i32) -> (i32, i32) {
    %c0_i32 = arith.constant 0 : i32
    %c0_i32_0 = arith.constant 0 : i32
    %c0_i32_1 = arith.constant 0 : i32
    return %c0_i32, %c0_i32_0 : i32, i32
  }
  func.func @transform_5(%arg0: i32) -> (i32, i32) {
    %c0_i32 = arith.constant 0 : i32
    %c0_i32_0 = arith.constant 0 : i32
    %c0_i32_1 = arith.constant 0 : i32
    return %c0_i32, %c0_i32_0 : i32, i32
  }
  func.func @transform_6(%arg0: i32) -> (i32, i32) {
    %c0_i32 = arith.constant 0 : i32
    %c0_i32_0 = arith.constant 0 : i32
    %c0_i32_1 = arith.constant 0 : i32
    return %c0_i32, %c0_i32_0 : i32, i32
  }
  func.func @transform_7(%arg0: i32) -> (i32, i32) {
    %c0_i32 = arith.constant 0 : i32
    %c0_i32_0 = arith.constant 0 : i32
    %c0_i32_1 = arith.constant 0 : i32
    return %c0_i32, %c0_i32_0 : i32, i32
  }
  func.func @transform_8(%arg0: i32) -> (i32, i32) {
    %c0_i32 = arith.constant 0 : i32
    %c0_i32_0 = arith.constant 0 : i32
    %c0_i32_1 = arith.constant 0 : i32
    return %c0_i32, %c0_i32_0 : i32, i32
  }
  func.func @transform_9(%arg0: i32) -> (i32, i32) {
    %c0_i32 = arith.constant 0 : i32
    %c0_i32_0 = arith.constant 0 : i32
    %c0_i32_1 = arith.constant 0 : i32
    return %c0_i32, %c0_i32_0 : i32, i32
  }
  func.func @transform_10(%arg0: i32) -> (i32, i32) {
    %c0_i32 = arith.constant 0 : i32
    %c0_i32_0 = arith.constant 0 : i32
    %c0_i32_1 = arith.constant 0 : i32
    return %c0_i32, %c0_i32_0 : i32, i32
  }
  func.func @transform_11(%arg0: i32) -> (i32, i32) {
    %c0_i32 = arith.constant 0 : i32
    %c0_i32_0 = arith.constant 0 : i32
    %c0_i32_1 = arith.constant 0 : i32
    return %c0_i32, %c0_i32_0 : i32, i32
  }
  func.func @transform_12(%arg0: i32) -> (i32, i32) {
    %c0_i32 = arith.constant 0 : i32
    %c0_i32_0 = arith.constant 0 : i32
    %c0_i32_1 = arith.constant 0 : i32
    return %c0_i32, %c0_i32_0 : i32, i32
  }
  func.func @transform_13(%arg0: i32) -> (i32, i32) {
    %c0_i32 = arith.constant 0 : i32
    %c0_i32_0 = arith.constant 0 : i32
    %c0_i32_1 = arith.constant 0 : i32
    return %c0_i32, %c0_i32_0 : i32, i32
  }
  func.func @transform_14(%arg0: i32) -> (i32, i32) {
    %c0_i32 = arith.constant 0 : i32
    %c0_i32_0 = arith.constant 0 : i32
    %c0_i32_1 = arith.constant 0 : i32
    return %c0_i32, %c0_i32_0 : i32, i32
  }
  func.func @transform_15(%arg0: i32) -> (i32, i32) {
    %c0_i32 = arith.constant 0 : i32
    %c0_i32_0 = arith.constant 0 : i32
    %c0_i32_1 = arith.constant 0 : i32
    return %c0_i32, %c0_i32_0 : i32, i32
  }
  func.func @transform_16(%arg0: i32) -> (i32, i32) {
    %c0_i32 = arith.constant 0 : i32
    %c0_i32_0 = arith.constant 0 : i32
    %c0_i32_1 = arith.constant 0 : i32
    return %c0_i32, %c0_i32_0 : i32, i32
  }
  func.func @transform_17(%arg0: i32) -> (i32, i32) {
    %c0_i32 = arith.constant 0 : i32
    %c0_i32_0 = arith.constant 0 : i32
    %c0_i32_1 = arith.constant 0 : i32
    return %c0_i32, %c0_i32_0 : i32, i32
  }
  func.func @transform_18(%arg0: i32) -> (i32, i32) {
    %c0_i32 = arith.constant 0 : i32
    %c0_i32_0 = arith.constant 0 : i32
    %c0_i32_1 = arith.constant 0 : i32
    return %c0_i32, %c0_i32_0 : i32, i32
  }
  func.func @transform_19(%arg0: i32) -> (i32, i32) {
    %c0_i32 = arith.constant 0 : i32
    %c0_i32_0 = arith.constant 0 : i32
    %c0_i32_1 = arith.constant 0 : i32
    return %c0_i32, %c0_i32_0 : i32, i32
  }
  func.func @transform_20(%arg0: i32) -> (i32, i32) {
    %c0_i32 = arith.constant 0 : i32
    %c0_i32_0 = arith.constant 0 : i32
    %c0_i32_1 = arith.constant 0 : i32
    return %c0_i32, %c0_i32_0 : i32, i32
  }
  func.func @transform_21(%arg0: i32) -> (i32, i32) {
    %c0_i32 = arith.constant 0 : i32
    %c0_i32_0 = arith.constant 0 : i32
    %c0_i32_1 = arith.constant 0 : i32
    return %c0_i32, %c0_i32_0 : i32, i32
  }
  func.func @transform_22(%arg0: i32) -> (i32, i32) {
    %c0_i32 = arith.constant 0 : i32
    %c0_i32_0 = arith.constant 0 : i32
    %c0_i32_1 = arith.constant 0 : i32
    return %c0_i32, %c0_i32_0 : i32, i32
  }
  func.func @transform_23(%arg0: i32) -> (i32, i32) {
    %c0_i32 = arith.constant 0 : i32
    %c0_i32_0 = arith.constant 0 : i32
    %c0_i32_1 = arith.constant 0 : i32
    return %c0_i32, %c0_i32_0 : i32, i32
  }
  func.func @transform_24(%arg0: i32) -> (i32, i32) {
    %c0_i32 = arith.constant 0 : i32
    %c0_i32_0 = arith.constant 0 : i32
    %c0_i32_1 = arith.constant 0 : i32
    return %c0_i32, %c0_i32_0 : i32, i32
  }
  func.func @transform_25(%arg0: i32) -> (i32, i32) {
    %c0_i32 = arith.constant 0 : i32
    %c0_i32_0 = arith.constant 0 : i32
    %c0_i32_1 = arith.constant 0 : i32
    return %c0_i32, %c0_i32_0 : i32, i32
  }
  func.func @transform_26(%arg0: i32) -> (i32, i32) {
    %c0_i32 = arith.constant 0 : i32
    %c0_i32_0 = arith.constant 0 : i32
    %c0_i32_1 = arith.constant 0 : i32
    return %c0_i32, %c0_i32_0 : i32, i32
  }
  func.func @transform_27(%arg0: i32) -> (i32, i32) {
    %c0_i32 = arith.constant 0 : i32
    %c0_i32_0 = arith.constant 0 : i32
    %c0_i32_1 = arith.constant 0 : i32
    return %c0_i32, %c0_i32_0 : i32, i32
  }
  func.func @transform_28(%arg0: i32) -> (i32, i32) {
    %c0_i32 = arith.constant 0 : i32
    %c0_i32_0 = arith.constant 0 : i32
    %c0_i32_1 = arith.constant 0 : i32
    return %c0_i32, %c0_i32_0 : i32, i32
  }
  func.func @transform_29(%arg0: i32) -> (i32, i32) {
    %c0_i32 = arith.constant 0 : i32
    %c0_i32_0 = arith.constant 0 : i32
    %c0_i32_1 = arith.constant 0 : i32
    return %c0_i32, %c0_i32_0 : i32, i32
  }
  func.func @transform_30(%arg0: i32) -> (i32, i32) {
    %c0_i32 = arith.constant 0 : i32
    %c0_i32_0 = arith.constant 0 : i32
    %c0_i32_1 = arith.constant 0 : i32
    return %c0_i32, %c0_i32_0 : i32, i32
  }
  func.func @transform_31(%arg0: i32) -> (i32, i32) {
    %c0_i32 = arith.constant 0 : i32
    %c0_i32_0 = arith.constant 0 : i32
    %c0_i32_1 = arith.constant 0 : i32
    return %c0_i32, %c0_i32_0 : i32, i32
  }
  func.func @transform_32(%arg0: i32) -> (i32, i32) {
    %c0_i32 = arith.constant 0 : i32
    %c0_i32_0 = arith.constant 0 : i32
    %c0_i32_1 = arith.constant 0 : i32
    return %c0_i32, %c0_i32_0 : i32, i32
  }
  func.func @transform_33(%arg0: i32) -> (i32, i32) {
    %c0_i32 = arith.constant 0 : i32
    %c0_i32_0 = arith.constant 0 : i32
    %c0_i32_1 = arith.constant 0 : i32
    return %c0_i32, %c0_i32_0 : i32, i32
  }
  func.func @transform_34(%arg0: i32) -> (i32, i32) {
    %c0_i32 = arith.constant 0 : i32
    %c0_i32_0 = arith.constant 0 : i32
    %c0_i32_1 = arith.constant 0 : i32
    return %c0_i32, %c0_i32_0 : i32, i32
  }
  func.func @transform_35(%arg0: i32) -> (i32, i32) {
    %c0_i32 = arith.constant 0 : i32
    %c0_i32_0 = arith.constant 0 : i32
    %c0_i32_1 = arith.constant 0 : i32
    return %c0_i32, %c0_i32_0 : i32, i32
  }
  func.func @transform_36(%arg0: i32) -> (i32, i32) {
    %c0_i32 = arith.constant 0 : i32
    %c0_i32_0 = arith.constant 0 : i32
    %c0_i32_1 = arith.constant 0 : i32
    return %c0_i32, %c0_i32_0 : i32, i32
  }
  func.func @transform_37(%arg0: i32) -> (i32, i32) {
    %c0_i32 = arith.constant 0 : i32
    %c0_i32_0 = arith.constant 0 : i32
    %c0_i32_1 = arith.constant 0 : i32
    return %c0_i32, %c0_i32_0 : i32, i32
  }
  func.func @transform_38(%arg0: i32) -> (i32, i32) {
    %c0_i32 = arith.constant 0 : i32
    %c0_i32_0 = arith.constant 0 : i32
    %c0_i32_1 = arith.constant 0 : i32
    return %c0_i32, %c0_i32_0 : i32, i32
  }
  func.func @transform_39(%arg0: i32) -> (i32, i32) {
    %c0_i32 = arith.constant 0 : i32
    %c0_i32_0 = arith.constant 0 : i32
    %c0_i32_1 = arith.constant 0 : i32
    return %c0_i32, %c0_i32_0 : i32, i32
  }
  func.func @transform_40(%arg0: i32) -> (i32, i32) {
    %c0_i32 = arith.constant 0 : i32
    %c0_i32_0 = arith.constant 0 : i32
    %c0_i32_1 = arith.constant 0 : i32
    return %c0_i32, %c0_i32_0 : i32, i32
  }
  func.func @transform_41(%arg0: i32) -> (i32, i32) {
    %c0_i32 = arith.constant 0 : i32
    %c0_i32_0 = arith.constant 0 : i32
    %c0_i32_1 = arith.constant 0 : i32
    return %c0_i32, %c0_i32_0 : i32, i32
  }
  func.func @transform_42(%arg0: i32) -> (i32, i32, i32) {
    %c0_i32 = arith.constant 0 : i32
    %c0_i32_0 = arith.constant 0 : i32
    %c0_i32_1 = arith.constant 0 : i32
    return %arg0, %c0_i32, %c0_i32_0 : i32, i32, i32
  }
}

</mosaic_0001>

<llo_original>
// kernel: bart_forward_loss.1
$region0: #{bart_forward_loss.1}
  #allocation0 [shape = 'u32[]', space=smem, size = 0x4, offset = 0x4, fixed_abs, tag = 'smem constant byte address 0x4 - core index']
  #allocation1 [shape = 'u32[72,128]{1,0:T(1,128)}', space=vmem, size = 0x9000, scoped, tag = 'internal scratch']
  %s0 = inlined_call_operand.smem [shape: u32[43], index: -1, kind: input, shape index: {}]
  %s1 = sld [smem:[%s0]]
  %s2 = scalar_lea.smem %s0, 1
  %s3 = sld [smem:[%s2]]
  %s4 = scalar_lea.smem %s0, 2
  %s5 = sld [smem:[%s4]]
  %s6 = scalar_lea.smem %s0, 3
  %s7 = sld [smem:[%s6]]
  %s8 = scalar_lea.smem %s0, 4
  %s9 = sld [smem:[%s8]]
  %s10 = scalar_lea.smem %s0, 5
  %s11 = sld [smem:[%s10]]
  %s12 = scalar_lea.smem %s0, 6
  %s13 = sld [smem:[%s12]]
  %s14 = scalar_lea.smem %s0, 7
  %s15 = sld [smem:[%s14]]
  %s16 = scalar_lea.smem %s0, 8
  %s17 = sld [smem:[%s16]]
  %s18 = scalar_lea.smem %s0, 9
  %s19 = sld [smem:[%s18]]
  %s20 = scalar_lea.smem %s0, 10
  %s21 = sld [smem:[%s20]]
  %s22 = scalar_lea.smem %s0, 11
  %s23 = sld [smem:[%s22]]
  %s24 = scalar_lea.smem %s0, 12
  %s25 = sld [smem:[%s24]]
  %s26 = scalar_lea.smem %s0, 13
  %s27 = sld [smem:[%s26]]
  %s28 = scalar_lea.smem %s0, 14
  %s29 = sld [smem:[%s28]]
  %s30 = scalar_lea.smem %s0, 15
  %s31 = sld [smem:[%s30]]
  %s32 = scalar_lea.smem %s0, 16
  %s33 = sld [smem:[%s32]]
  %s34 = scalar_lea.smem %s0, 17
  %s35 = sld [smem:[%s34]]
  %s36 = scalar_lea.smem %s0, 18
  %s37 = sld [smem:[%s36]]
  %s38 = scalar_lea.smem %s0, 19
  %s39 = sld [smem:[%s38]]
  %s40 = scalar_lea.smem %s0, 20
  %s41 = sld [smem:[%s40]]
  %s42 = scalar_lea.smem %s0, 21
  %s43 = sld [smem:[%s42]]
  %s44 = scalar_lea.smem %s0, 22
  %s45 = sld [smem:[%s44]]
  %s46 = scalar_lea.smem %s0, 23
  %s47 = sld [smem:[%s46]]
  %s48 = scalar_lea.smem %s0, 24
  %s49 = sld [smem:[%s48]]
  %s50 = scalar_lea.smem %s0, 25
  %s51 = sld [smem:[%s50]]
  %s52 = scalar_lea.smem %s0, 26
  %s53 = sld [smem:[%s52]]
  %s54 = scalar_lea.smem %s0, 27
  %s55 = sld [smem:[%s54]]
  %s56 = scalar_lea.smem %s0, 28
  %s57 = sld [smem:[%s56]]
  %s58 = scalar_lea.smem %s0, 29
  %s59 = sld [smem:[%s58]]
  %s60 = scalar_lea.smem %s0, 30
  %s61 = sld [smem:[%s60]]
  %s62 = scalar_lea.smem %s0, 31
  %s63 = sld [smem:[%s62]]
  %s64 = scalar_lea.smem %s0, 32
  %s65 = sld [smem:[%s64]]
  %s66 = scalar_lea.smem %s0, 33
  %s67 = sld [smem:[%s66]]
  %s68 = scalar_lea.smem %s0, 34
  %s69 = sld [smem:[%s68]]
  %s70 = scalar_lea.smem %s0, 35
  %s71 = sld [smem:[%s70]]
  %s72 = scalar_lea.smem %s0, 36
  %s73 = sld [smem:[%s72]]
  %s74 = scalar_lea.smem %s0, 37
  %s75 = sld [smem:[%s74]]
  %s76 = scalar_lea.smem %s0, 38
  %s77 = sld [smem:[%s76]]
  %s78 = scalar_lea.smem %s0, 39
  %s79 = sld [smem:[%s78]]
  %s80 = scalar_lea.smem %s0, 40
  %s81 = sld [smem:[%s80]]
  %s82 = scalar_lea.smem %s0, 41
  %s83 = sld [smem:[%s82]]
  %s84 = scalar_lea.smem %s0, 42
  %s85 = sld [smem:[%s84]]
  %s86 = sld [smem:[#allocation0]]
  $region201: #{bart_forward_loss.1} parent=0
    _
  %s88 = ssub.s32 1, %s86
  %s89 = scalar_select 0, %s88, %s86
  loop: start=0, step=1, limit=4
  $region2: #{bart_forward_loss.1} parent=0 // loop_pre_header
    _
  $region3: #{bart_forward_loss.1} parent=0 // loop_header
    %s91 = sphi 0, %s95
    %p92 = scmp.ge.s32.totalorder %s91, 4
    %s101 = sphi 0, %s103
    %s104 = sphi 0, %s101
    %s105 = sphi 0, %s104
    %s121 = sphi 0, %s105
    %s127 = sphi 0, %s129
    %s130 = sphi 0, %s127
    %s131 = sphi 0, %s130
    %s147 = sphi 0, %s131
    %s153 = sphi 0, %s155
    %s156 = sphi 0, %s153
    %s157 = sphi 0, %s156
    %s173 = sphi 0, %s157
    %s179 = sphi 0, %s181
    %s182 = sphi 0, %s179
    %s183 = sphi 0, %s182
    %s199 = sphi 0, %s183
    %s203 = sphi 0, %s203
    %s205 = sphi 0, %s203
    %s206 = sphi 0, %s205
    %s220 = sphi 0, %s206
    %s224 = sphi 0, %s224
    %s226 = sphi 0, %s224
    %s227 = sphi 0, %s226
    %s241 = sphi 0, %s227
    %s245 = sphi 0, %s245
    %s247 = sphi 0, %s245
    %s248 = sphi 0, %s247
    %s262 = sphi 0, %s248
    %s266 = sphi 0, %s266
    %s268 = sphi 0, %s266
    %s269 = sphi 0, %s268
    %s283 = sphi 0, %s269
    %s287 = sphi 0, %s287
    %s289 = sphi 0, %s287
    %s290 = sphi 0, %s289
    %s304 = sphi 0, %s290
    %s308 = sphi 0, %s308
    %s310 = sphi 0, %s308
    %s311 = sphi 0, %s310
    %s325 = sphi 0, %s311
    %s329 = sphi 0, %s329
    %s331 = sphi 0, %s329
    %s332 = sphi 0, %s331
    %s346 = sphi 0, %s332
    %s350 = sphi 0, %s350
    %s352 = sphi 0, %s350
    %s353 = sphi 0, %s352
    %s367 = sphi 0, %s353
    %s371 = sphi 0, %s371
    %s373 = sphi 0, %s371
    %s374 = sphi 0, %s373
    %s388 = sphi 0, %s374
    %s392 = sphi 0, %s392
    %s394 = sphi 0, %s392
    %s395 = sphi 0, %s394
    %s409 = sphi 0, %s395
    %s413 = sphi 0, %s413
    %s415 = sphi 0, %s413
    %s416 = sphi 0, %s415
    %s430 = sphi 0, %s416
    %s434 = sphi 0, %s434
    %s436 = sphi 0, %s434
    %s437 = sphi 0, %s436
    %s451 = sphi 0, %s437
    %s455 = sphi 0, %s455
    %s457 = sphi 0, %s455
    %s458 = sphi 0, %s457
    %s472 = sphi 0, %s458
    %s476 = sphi 0, %s476
    %s478 = sphi 0, %s476
    %s479 = sphi 0, %s478
    %s493 = sphi 0, %s479
    %s497 = sphi 0, %s497
    %s499 = sphi 0, %s497
    %s500 = sphi 0, %s499
    %s514 = sphi 0, %s500
    %s518 = sphi 0, %s518
    %s520 = sphi 0, %s518
    %s521 = sphi 0, %s520
    %s535 = sphi 0, %s521
    %s539 = sphi 0, %s539
    %s541 = sphi 0, %s539
    %s542 = sphi 0, %s541
    %s556 = sphi 0, %s542
    %s560 = sphi 0, %s560
    %s562 = sphi 0, %s560
    %s563 = sphi 0, %s562
    %s577 = sphi 0, %s563
    %s581 = sphi 0, %s581
    %s583 = sphi 0, %s581
    %s584 = sphi 0, %s583
    %s598 = sphi 0, %s584
    %s602 = sphi 0, %s602
    %s604 = sphi 0, %s602
    %s605 = sphi 0, %s604
    %s619 = sphi 0, %s605
    %s623 = sphi 0, %s623
    %s625 = sphi 0, %s623
    %s626 = sphi 0, %s625
    %s640 = sphi 0, %s626
    %s644 = sphi 0, %s644
    %s646 = sphi 0, %s644
    %s647 = sphi 0, %s646
    %s661 = sphi 0, %s647
    %s665 = sphi 0, %s665
    %s667 = sphi 0, %s665
    %s668 = sphi 0, %s667
    %s682 = sphi 0, %s668
    %s686 = sphi 0, %s686
    %s688 = sphi 0, %s686
    %s689 = sphi 0, %s688
    %s703 = sphi 0, %s689
    %s707 = sphi 0, %s707
    %s709 = sphi 0, %s707
    %s710 = sphi 0, %s709
    %s724 = sphi 0, %s710
    %s728 = sphi 0, %s728
    %s730 = sphi 0, %s728
    %s731 = sphi 0, %s730
    %s745 = sphi 0, %s731
    %s749 = sphi 0, %s749
    %s751 = sphi 0, %s749
    %s752 = sphi 0, %s751
    %s766 = sphi 0, %s752
    %s770 = sphi 0, %s770
    %s772 = sphi 0, %s770
    %s773 = sphi 0, %s772
    %s787 = sphi 0, %s773
    %s791 = sphi 0, %s791
    %s793 = sphi 0, %s791
    %s794 = sphi 0, %s793
    %s808 = sphi 0, %s794
    %s812 = sphi 0, %s812
    %s814 = sphi 0, %s812
    %s815 = sphi 0, %s814
    %s829 = sphi 0, %s815
    %s833 = sphi 0, %s833
    %s835 = sphi 0, %s833
    %s836 = sphi 0, %s835
    %s850 = sphi 0, %s836
    %s854 = sphi 0, %s854
    %s856 = sphi 0, %s854
    %s857 = sphi 0, %s856
    %s871 = sphi 0, %s857
    %s875 = sphi 0, %s875
    %s877 = sphi 0, %s875
    %s878 = sphi 0, %s877
    %s892 = sphi 0, %s878
    %s896 = sphi 0, %s896
    %s898 = sphi 0, %s896
    %s899 = sphi 0, %s898
    %s913 = sphi 0, %s899
    %s917 = sphi 0, %s917
    %s919 = sphi 0, %s917
    %s920 = sphi 0, %s919
    %s934 = sphi 0, %s920
    %s938 = sphi 0, %s938
    %s940 = sphi 0, %s938
    %s941 = sphi 0, %s940
    %s955 = sphi 0, %s941
    %s959 = sphi 0, %s959
    %s961 = sphi 0, %s959
    %s962 = sphi 0, %s961
    %s976 = sphi 0, %s962
    %s980 = sphi 0, %s980
    %s982 = sphi 0, %s980
    %s983 = sphi 0, %s982
    %s997 = sphi 0, %s983
    %s1003 = sphi 0, %s1005
    %s1006 = sphi 0, %s1003
    %s1007 = sphi 0, %s1006
    %s1023 = sphi 0, %s1007
  $region4: #{bart_forward_loss.1} parent=0 // loop_header_branch
    %94 = sbr.rel (%p92) target = $region8
  $region5: #{bart_forward_loss.1} parent=0 // loop_body
    %s96 = ssub.s32 %s91, 1
    %s97 = ssub.s32 %s91, 2
    %s98 = sadd.s32 %s91, 1
    %s99 = ssub.s32 %s91, %s98
    %p100 = scmp.eq.s32.totalorder %s99, 0
    %s102 = sadd.s32 %s101, 1
    %s103 = scalar_select %p100, %s101, %s102
    %p106 = pneg %p100
    %p107 = scmp.eq.s32.totalorder %s91, 1
    %p108 = por %p106, %p107
    %p109 = scmp.ne.s32.totalorder %s101, %s104
    %p110 = scmp.eq.s32.totalorder %s91, 0
    %p111 = por %p109, %p110
    %p112 = scmp.ne.s32.totalorder %s101, %s104
    %p113 = scmp.eq.s32.totalorder %s96, 1
    %p114 = por %p112, %p113
    %p115 = scmp.ne.s32.totalorder %s104, %s105
    %p116 = scmp.eq.s32.totalorder %s96, 0
    %p117 = por %p115, %p116
    %p118 = scmp.ne.s32.totalorder %s104, %s105
    %p119 = scmp.eq.s32.totalorder %s97, 1
    %p120 = por %p118, %p119
    %p122 = scmp.ne.s32.totalorder %s105, %s121
    %p123 = scmp.eq.s32.totalorder %s97, 0
    %p124 = por %p122, %p123
    %s125 = ssub.s32 %s91, %s98
    %p126 = scmp.eq.s32.totalorder %s125, 0
    %s128 = sadd.s32 %s127, 1
    %s129 = scalar_select %p126, %s127, %s128
    %p132 = pneg %p126
    %p133 = scmp.eq.s32.totalorder %s91, 1
    %p134 = por %p132, %p133
    %p135 = scmp.ne.s32.totalorder %s127, %s130
    %p136 = scmp.eq.s32.totalorder %s91, 0
    %p137 = por %p135, %p136
    %p138 = scmp.ne.s32.totalorder %s127, %s130
    %p139 = scmp.eq.s32.totalorder %s96, 1
    %p140 = por %p138, %p139
    %p141 = scmp.ne.s32.totalorder %s130, %s131
    %p142 = scmp.eq.s32.totalorder %s96, 0
    %p143 = por %p141, %p142
    %p144 = scmp.ne.s32.totalorder %s130, %s131
    %p145 = scmp.eq.s32.totalorder %s97, 1
    %p146 = por %p144, %p145
    %p148 = scmp.ne.s32.totalorder %s131, %s147
    %p149 = scmp.eq.s32.totalorder %s97, 0
    %p150 = por %p148, %p149
    %s151 = ssub.s32 %s91, %s98
    %p152 = scmp.eq.s32.totalorder %s151, 0
    %s154 = sadd.s32 %s153, 1
    %s155 = scalar_select %p152, %s153, %s154
    %p158 = pneg %p152
    %p159 = scmp.eq.s32.totalorder %s91, 1
    %p160 = por %p158, %p159
    %p161 = scmp.ne.s32.totalorder %s153, %s156
    %p162 = scmp.eq.s32.totalorder %s91, 0
    %p163 = por %p161, %p162
    %p164 = scmp.ne.s32.totalorder %s153, %s156
    %p165 = scmp.eq.s32.totalorder %s96, 1
    %p166 = por %p164, %p165
    %p167 = scmp.ne.s32.totalorder %s156, %s157
    %p168 = scmp.eq.s32.totalorder %s96, 0
    %p169 = por %p167, %p168
    %p170 = scmp.ne.s32.totalorder %s156, %s157
    %p171 = scmp.eq.s32.totalorder %s97, 1
    %p172 = por %p170, %p171
    %p174 = scmp.ne.s32.totalorder %s157, %s173
    %p175 = scmp.eq.s32.totalorder %s97, 0
    %p176 = por %p174, %p175
    %s177 = ssub.s32 %s91, %s98
    %p178 = scmp.eq.s32.totalorder %s177, 0
    %s180 = sadd.s32 %s179, 1
    %s181 = scalar_select %p178, %s179, %s180
    %p184 = pneg %p178
    %p185 = scmp.eq.s32.totalorder %s91, 1
    %p186 = por %p184, %p185
    %p187 = scmp.ne.s32.totalorder %s179, %s182
    %p188 = scmp.eq.s32.totalorder %s91, 0
    %p189 = por %p187, %p188
    %p190 = scmp.ne.s32.totalorder %s179, %s182
    %p191 = scmp.eq.s32.totalorder %s96, 1
    %p192 = por %p190, %p191
    %p193 = scmp.ne.s32.totalorder %s182, %s183
    %p194 = scmp.eq.s32.totalorder %s96, 0
    %p195 = por %p193, %p194
    %p196 = scmp.ne.s32.totalorder %s182, %s183
    %p197 = scmp.eq.s32.totalorder %s97, 1
    %p198 = por %p196, %p197
    %p200 = scmp.ne.s32.totalorder %s183, %s199
    %p201 = scmp.eq.s32.totalorder %s97, 0
    %p202 = por %p200, %p201
    %s204 = sadd.s32 %s203, 1
    %p207 = scmp.eq.s32.totalorder %s91, 1
    %p208 = scmp.ne.s32.totalorder %s203, %s205
    %p209 = scmp.eq.s32.totalorder %s91, 0
    %p210 = por %p208, %p209
    %p211 = scmp.ne.s32.totalorder %s203, %s205
    %p212 = scmp.eq.s32.totalorder %s96, 1
    %p213 = por %p211, %p212
    %p214 = scmp.ne.s32.totalorder %s205, %s206
    %p215 = scmp.eq.s32.totalorder %s96, 0
    %p216 = por %p214, %p215
    %p217 = scmp.ne.s32.totalorder %s205, %s206
    %p218 = scmp.eq.s32.totalorder %s97, 1
    %p219 = por %p217, %p218
    %p221 = scmp.ne.s32.totalorder %s206, %s220
    %p222 = scmp.eq.s32.totalorder %s97, 0
    %p223 = por %p221, %p222
    %s225 = sadd.s32 %s224, 1
    %p228 = scmp.eq.s32.totalorder %s91, 1
    %p229 = scmp.ne.s32.totalorder %s224, %s226
    %p230 = scmp.eq.s32.totalorder %s91, 0
    %p231 = por %p229, %p230
    %p232 = scmp.ne.s32.totalorder %s224, %s226
    %p233 = scmp.eq.s32.totalorder %s96, 1
    %p234 = por %p232, %p233
    %p235 = scmp.ne.s32.totalorder %s226, %s227
    %p236 = scmp.eq.s32.totalorder %s96, 0
    %p237 = por %p235, %p236
    %p238 = scmp.ne.s32.totalorder %s226, %s227
    %p239 = scmp.eq.s32.totalorder %s97, 1
    %p240 = por %p238, %p239
    %p242 = scmp.ne.s32.totalorder %s227, %s241
    %p243 = scmp.eq.s32.totalorder %s97, 0
    %p244 = por %p242, %p243
    %s246 = sadd.s32 %s245, 1
    %p249 = scmp.eq.s32.totalorder %s91, 1
    %p250 = scmp.ne.s32.totalorder %s245, %s247
    %p251 = scmp.eq.s32.totalorder %s91, 0
    %p252 = por %p250, %p251
    %p253 = scmp.ne.s32.totalorder %s245, %s247
    %p254 = scmp.eq.s32.totalorder %s96, 1
    %p255 = por %p253, %p254
    %p256 = scmp.ne.s32.totalorder %s247, %s248
    %p257 = scmp.eq.s32.totalorder %s96, 0
    %p258 = por %p256, %p257
    %p259 = scmp.ne.s32.totalorder %s247, %s248
    %p260 = scmp.eq.s32.totalorder %s97, 1
    %p261 = por %p259, %p260
    %p263 = scmp.ne.s32.totalorder %s248, %s262
    %p264 = scmp.eq.s32.totalorder %s97, 0
    %p265 = por %p263, %p264
    %s267 = sadd.s32 %s266, 1
    %p270 = scmp.eq.s32.totalorder %s91, 1
    %p271 = scmp.ne.s32.totalorder %s266, %s268
    %p272 = scmp.eq.s32.totalorder %s91, 0
    %p273 = por %p271, %p272
    %p274 = scmp.ne.s32.totalorder %s266, %s268
    %p275 = scmp.eq.s32.totalorder %s96, 1
    %p276 = por %p274, %p275
    %p277 = scmp.ne.s32.totalorder %s268, %s269
    %p278 = scmp.eq.s32.totalorder %s96, 0
    %p279 = por %p277, %p278
    %p280 = scmp.ne.s32.totalorder %s268, %s269
    %p281 = scmp.eq.s32.totalorder %s97, 1
    %p282 = por %p280, %p281
    %p284 = scmp.ne.s32.totalorder %s269, %s283
    %p285 = scmp.eq.s32.totalorder %s97, 0
    %p286 = por %p284, %p285
    %s288 = sadd.s32 %s287, 1
    %p291 = scmp.eq.s32.totalorder %s91, 1
    %p292 = scmp.ne.s32.totalorder %s287, %s289
    %p293 = scmp.eq.s32.totalorder %s91, 0
    %p294 = por %p292, %p293
    %p295 = scmp.ne.s32.totalorder %s287, %s289
    %p296 = scmp.eq.s32.totalorder %s96, 1
    %p297 = por %p295, %p296
    %p298 = scmp.ne.s32.totalorder %s289, %s290
    %p299 = scmp.eq.s32.totalorder %s96, 0
    %p300 = por %p298, %p299
    %p301 = scmp.ne.s32.totalorder %s289, %s290
    %p302 = scmp.eq.s32.totalorder %s97, 1
    %p303 = por %p301, %p302
    %p305 = scmp.ne.s32.totalorder %s290, %s304
    %p306 = scmp.eq.s32.totalorder %s97, 0
    %p307 = por %p305, %p306
    %s309 = sadd.s32 %s308, 1
    %p312 = scmp.eq.s32.totalorder %s91, 1
    %p313 = scmp.ne.s32.totalorder %s308, %s310
    %p314 = scmp.eq.s32.totalorder %s91, 0
    %p315 = por %p313, %p314
    %p316 = scmp.ne.s32.totalorder %s308, %s310
    %p317 = scmp.eq.s32.totalorder %s96, 1
    %p318 = por %p316, %p317
    %p319 = scmp.ne.s32.totalorder %s310, %s311
    %p320 = scmp.eq.s32.totalorder %s96, 0
    %p321 = por %p319, %p320
    %p322 = scmp.ne.s32.totalorder %s310, %s311
    %p323 = scmp.eq.s32.totalorder %s97, 1
    %p324 = por %p322, %p323
    %p326 = scmp.ne.s32.totalorder %s311, %s325
    %p327 = scmp.eq.s32.totalorder %s97, 0
    %p328 = por %p326, %p327
    %s330 = sadd.s32 %s329, 1
    %p333 = scmp.eq.s32.totalorder %s91, 1
    %p334 = scmp.ne.s32.totalorder %s329, %s331
    %p335 = scmp.eq.s32.totalorder %s91, 0
    %p336 = por %p334, %p335
    %p337 = scmp.ne.s32.totalorder %s329, %s331
    %p338 = scmp.eq.s32.totalorder %s96, 1
    %p339 = por %p337, %p338
    %p340 = scmp.ne.s32.totalorder %s331, %s332
    %p341 = scmp.eq.s32.totalorder %s96, 0
    %p342 = por %p340, %p341
    %p343 = scmp.ne.s32.totalorder %s331, %s332
    %p344 = scmp.eq.s32.totalorder %s97, 1
    %p345 = por %p343, %p344
    %p347 = scmp.ne.s32.totalorder %s332, %s346
    %p348 = scmp.eq.s32.totalorder %s97, 0
    %p349 = por %p347, %p348
    %s351 = sadd.s32 %s350, 1
    %p354 = scmp.eq.s32.totalorder %s91, 1
    %p355 = scmp.ne.s32.totalorder %s350, %s352
    %p356 = scmp.eq.s32.totalorder %s91, 0
    %p357 = por %p355, %p356
    %p358 = scmp.ne.s32.totalorder %s350, %s352
    %p359 = scmp.eq.s32.totalorder %s96, 1
    %p360 = por %p358, %p359
    %p361 = scmp.ne.s32.totalorder %s352, %s353
    %p362 = scmp.eq.s32.totalorder %s96, 0
    %p363 = por %p361, %p362
    %p364 = scmp.ne.s32.totalorder %s352, %s353
    %p365 = scmp.eq.s32.totalorder %s97, 1
    %p366 = por %p364, %p365
    %p368 = scmp.ne.s32.totalorder %s353, %s367
    %p369 = scmp.eq.s32.totalorder %s97, 0
    %p370 = por %p368, %p369
    %s372 = sadd.s32 %s371, 1
    %p375 = scmp.eq.s32.totalorder %s91, 1
    %p376 = scmp.ne.s32.totalorder %s371, %s373
    %p377 = scmp.eq.s32.totalorder %s91, 0
    %p378 = por %p376, %p377
    %p379 = scmp.ne.s32.totalorder %s371, %s373
    %p380 = scmp.eq.s32.totalorder %s96, 1
    %p381 = por %p379, %p380
    %p382 = scmp.ne.s32.totalorder %s373, %s374
    %p383 = scmp.eq.s32.totalorder %s96, 0
    %p384 = por %p382, %p383
    %p385 = scmp.ne.s32.totalorder %s373, %s374
    %p386 = scmp.eq.s32.totalorder %s97, 1
    %p387 = por %p385, %p386
    %p389 = scmp.ne.s32.totalorder %s374, %s388
    %p390 = scmp.eq.s32.totalorder %s97, 0
    %p391 = por %p389, %p390
    %s393 = sadd.s32 %s392, 1
    %p396 = scmp.eq.s32.totalorder %s91, 1
    %p397 = scmp.ne.s32.totalorder %s392, %s394
    %p398 = scmp.eq.s32.totalorder %s91, 0
    %p399 = por %p397, %p398
    %p400 = scmp.ne.s32.totalorder %s392, %s394
    %p401 = scmp.eq.s32.totalorder %s96, 1
    %p402 = por %p400, %p401
    %p403 = scmp.ne.s32.totalorder %s394, %s395
    %p404 = scmp.eq.s32.totalorder %s96, 0
    %p405 = por %p403, %p404
    %p406 = scmp.ne.s32.totalorder %s394, %s395
    %p407 = scmp.eq.s32.totalorder %s97, 1
    %p408 = por %p406, %p407
    %p410 = scmp.ne.s32.totalorder %s395, %s409
    %p411 = scmp.eq.s32.totalorder %s97, 0
    %p412 = por %p410, %p411
    %s414 = sadd.s32 %s413, 1
    %p417 = scmp.eq.s32.totalorder %s91, 1
    %p418 = scmp.ne.s32.totalorder %s413, %s415
    %p419 = scmp.eq.s32.totalorder %s91, 0
    %p420 = por %p418, %p419
    %p421 = scmp.ne.s32.totalorder %s413, %s415
    %p422 = scmp.eq.s32.totalorder %s96, 1
    %p423 = por %p421, %p422
    %p424 = scmp.ne.s32.totalorder %s415, %s416
    %p425 = scmp.eq.s32.totalorder %s96, 0
    %p426 = por %p424, %p425
    %p427 = scmp.ne.s32.totalorder %s415, %s416
    %p428 = scmp.eq.s32.totalorder %s97, 1
    %p429 = por %p427, %p428
    %p431 = scmp.ne.s32.totalorder %s416, %s430
    %p432 = scmp.eq.s32.totalorder %s97, 0
    %p433 = por %p431, %p432
    %s435 = sadd.s32 %s434, 1
    %p438 = scmp.eq.s32.totalorder %s91, 1
    %p439 = scmp.ne.s32.totalorder %s434, %s436
    %p440 = scmp.eq.s32.totalorder %s91, 0
    %p441 = por %p439, %p440
    %p442 = scmp.ne.s32.totalorder %s434, %s436
    %p443 = scmp.eq.s32.totalorder %s96, 1
    %p444 = por %p442, %p443
    %p445 = scmp.ne.s32.totalorder %s436, %s437
    %p446 = scmp.eq.s32.totalorder %s96, 0
    %p447 = por %p445, %p446
    %p448 = scmp.ne.s32.totalorder %s436, %s437
    %p449 = scmp.eq.s32.totalorder %s97, 1
    %p450 = por %p448, %p449
    %p452 = scmp.ne.s32.totalorder %s437, %s451
    %p453 = scmp.eq.s32.totalorder %s97, 0
    %p454 = por %p452, %p453
    %s456 = sadd.s32 %s455, 1
    %p459 = scmp.eq.s32.totalorder %s91, 1
    %p460 = scmp.ne.s32.totalorder %s455, %s457
    %p461 = scmp.eq.s32.totalorder %s91, 0
    %p462 = por %p460, %p461
    %p463 = scmp.ne.s32.totalorder %s455, %s457
    %p464 = scmp.eq.s32.totalorder %s96, 1
    %p465 = por %p463, %p464
    %p466 = scmp.ne.s32.totalorder %s457, %s458
    %p467 = scmp.eq.s32.totalorder %s96, 0
    %p468 = por %p466, %p467
    %p469 = scmp.ne.s32.totalorder %s457, %s458
    %p470 = scmp.eq.s32.totalorder %s97, 1
    %p471 = por %p469, %p470
    %p473 = scmp.ne.s32.totalorder %s458, %s472
    %p474 = scmp.eq.s32.totalorder %s97, 0
    %p475 = por %p473, %p474
    %s477 = sadd.s32 %s476, 1
    %p480 = scmp.eq.s32.totalorder %s91, 1
    %p481 = scmp.ne.s32.totalorder %s476, %s478
    %p482 = scmp.eq.s32.totalorder %s91, 0
    %p483 = por %p481, %p482
    %p484 = scmp.ne.s32.totalorder %s476, %s478
    %p485 = scmp.eq.s32.totalorder %s96, 1
    %p486 = por %p484, %p485
    %p487 = scmp.ne.s32.totalorder %s478, %s479
    %p488 = scmp.eq.s32.totalorder %s96, 0
    %p489 = por %p487, %p488
    %p490 = scmp.ne.s32.totalorder %s478, %s479
    %p491 = scmp.eq.s32.totalorder %s97, 1
    %p492 = por %p490, %p491
    %p494 = scmp.ne.s32.totalorder %s479, %s493
    %p495 = scmp.eq.s32.totalorder %s97, 0
    %p496 = por %p494, %p495
    %s498 = sadd.s32 %s497, 1
    %p501 = scmp.eq.s32.totalorder %s91, 1
    %p502 = scmp.ne.s32.totalorder %s497, %s499
    %p503 = scmp.eq.s32.totalorder %s91, 0
    %p504 = por %p502, %p503
    %p505 = scmp.ne.s32.totalorder %s497, %s499
    %p506 = scmp.eq.s32.totalorder %s96, 1
    %p507 = por %p505, %p506
    %p508 = scmp.ne.s32.totalorder %s499, %s500
    %p509 = scmp.eq.s32.totalorder %s96, 0
    %p510 = por %p508, %p509
    %p511 = scmp.ne.s32.totalorder %s499, %s500
    %p512 = scmp.eq.s32.totalorder %s97, 1
    %p513 = por %p511, %p512
    %p515 = scmp.ne.s32.totalorder %s500, %s514
    %p516 = scmp.eq.s32.totalorder %s97, 0
    %p517 = por %p515, %p516
    %s519 = sadd.s32 %s518, 1
    %p522 = scmp.eq.s32.totalorder %s91, 1
    %p523 = scmp.ne.s32.totalorder %s518, %s520
    %p524 = scmp.eq.s32.totalorder %s91, 0
    %p525 = por %p523, %p524
    %p526 = scmp.ne.s32.totalorder %s518, %s520
    %p527 = scmp.eq.s32.totalorder %s96, 1
    %p528 = por %p526, %p527
    %p529 = scmp.ne.s32.totalorder %s520, %s521
    %p530 = scmp.eq.s32.totalorder %s96, 0
    %p531 = por %p529, %p530
    %p532 = scmp.ne.s32.totalorder %s520, %s521
    %p533 = scmp.eq.s32.totalorder %s97, 1
    %p534 = por %p532, %p533
    %p536 = scmp.ne.s32.totalorder %s521, %s535
    %p537 = scmp.eq.s32.totalorder %s97, 0
    %p538 = por %p536, %p537
    %s540 = sadd.s32 %s539, 1
    %p543 = scmp.eq.s32.totalorder %s91, 1
    %p544 = scmp.ne.s32.totalorder %s539, %s541
    %p545 = scmp.eq.s32.totalorder %s91, 0
    %p546 = por %p544, %p545
    %p547 = scmp.ne.s32.totalorder %s539, %s541
    %p548 = scmp.eq.s32.totalorder %s96, 1
    %p549 = por %p547, %p548
    %p550 = scmp.ne.s32.totalorder %s541, %s542
    %p551 = scmp.eq.s32.totalorder %s96, 0
    %p552 = por %p550, %p551
    %p553 = scmp.ne.s32.totalorder %s541, %s542
    %p554 = scmp.eq.s32.totalorder %s97, 1
    %p555 = por %p553, %p554
    %p557 = scmp.ne.s32.totalorder %s542, %s556
    %p558 = scmp.eq.s32.totalorder %s97, 0
    %p559 = por %p557, %p558
    %s561 = sadd.s32 %s560, 1
    %p564 = scmp.eq.s32.totalorder %s91, 1
    %p565 = scmp.ne.s32.totalorder %s560, %s562
    %p566 = scmp.eq.s32.totalorder %s91, 0
    %p567 = por %p565, %p566
    %p568 = scmp.ne.s32.totalorder %s560, %s562
    %p569 = scmp.eq.s32.totalorder %s96, 1
    %p570 = por %p568, %p569
    %p571 = scmp.ne.s32.totalorder %s562, %s563
    %p572 = scmp.eq.s32.totalorder %s96, 0
    %p573 = por %p571, %p572
    %p574 = scmp.ne.s32.totalorder %s562, %s563
    %p575 = scmp.eq.s32.totalorder %s97, 1
    %p576 = por %p574, %p575
    %p578 = scmp.ne.s32.totalorder %s563, %s577
    %p579 = scmp.eq.s32.totalorder %s97, 0
    %p580 = por %p578, %p579
    %s582 = sadd.s32 %s581, 1
    %p585 = scmp.eq.s32.totalorder %s91, 1
    %p586 = scmp.ne.s32.totalorder %s581, %s583
    %p587 = scmp.eq.s32.totalorder %s91, 0
    %p588 = por %p586, %p587
    %p589 = scmp.ne.s32.totalorder %s581, %s583
    %p590 = scmp.eq.s32.totalorder %s96, 1
    %p591 = por %p589, %p590
    %p592 = scmp.ne.s32.totalorder %s583, %s584
    %p593 = scmp.eq.s32.totalorder %s96, 0
    %p594 = por %p592, %p593
    %p595 = scmp.ne.s32.totalorder %s583, %s584
    %p596 = scmp.eq.s32.totalorder %s97, 1
    %p597 = por %p595, %p596
    %p599 = scmp.ne.s32.totalorder %s584, %s598
    %p600 = scmp.eq.s32.totalorder %s97, 0
    %p601 = por %p599, %p600
    %s603 = sadd.s32 %s602, 1
    %p606 = scmp.eq.s32.totalorder %s91, 1
    %p607 = scmp.ne.s32.totalorder %s602, %s604
    %p608 = scmp.eq.s32.totalorder %s91, 0
    %p609 = por %p607, %p608
    %p610 = scmp.ne.s32.totalorder %s602, %s604
    %p611 = scmp.eq.s32.totalorder %s96, 1
    %p612 = por %p610, %p611
    %p613 = scmp.ne.s32.totalorder %s604, %s605
    %p614 = scmp.eq.s32.totalorder %s96, 0
    %p615 = por %p613, %p614
    %p616 = scmp.ne.s32.totalorder %s604, %s605
    %p617 = scmp.eq.s32.totalorder %s97, 1
    %p618 = por %p616, %p617
    %p620 = scmp.ne.s32.totalorder %s605, %s619
    %p621 = scmp.eq.s32.totalorder %s97, 0
    %p622 = por %p620, %p621
    %s624 = sadd.s32 %s623, 1
    %p627 = scmp.eq.s32.totalorder %s91, 1
    %p628 = scmp.ne.s32.totalorder %s623, %s625
    %p629 = scmp.eq.s32.totalorder %s91, 0
    %p630 = por %p628, %p629
    %p631 = scmp.ne.s32.totalorder %s623, %s625
    %p632 = scmp.eq.s32.totalorder %s96, 1
    %p633 = por %p631, %p632
    %p634 = scmp.ne.s32.totalorder %s625, %s626
    %p635 = scmp.eq.s32.totalorder %s96, 0
    %p636 = por %p634, %p635
    %p637 = scmp.ne.s32.totalorder %s625, %s626
    %p638 = scmp.eq.s32.totalorder %s97, 1
    %p639 = por %p637, %p638
    %p641 = scmp.ne.s32.totalorder %s626, %s640
    %p642 = scmp.eq.s32.totalorder %s97, 0
    %p643 = por %p641, %p642
    %s645 = sadd.s32 %s644, 1
    %p648 = scmp.eq.s32.totalorder %s91, 1
    %p649 = scmp.ne.s32.totalorder %s644, %s646
    %p650 = scmp.eq.s32.totalorder %s91, 0
    %p651 = por %p649, %p650
    %p652 = scmp.ne.s32.totalorder %s644, %s646
    %p653 = scmp.eq.s32.totalorder %s96, 1
    %p654 = por %p652, %p653
    %p655 = scmp.ne.s32.totalorder %s646, %s647
    %p656 = scmp.eq.s32.totalorder %s96, 0
    %p657 = por %p655, %p656
    %p658 = scmp.ne.s32.totalorder %s646, %s647
    %p659 = scmp.eq.s32.totalorder %s97, 1
    %p660 = por %p658, %p659
    %p662 = scmp.ne.s32.totalorder %s647, %s661
    %p663 = scmp.eq.s32.totalorder %s97, 0
    %p664 = por %p662, %p663
    %s666 = sadd.s32 %s665, 1
    %p669 = scmp.eq.s32.totalorder %s91, 1
    %p670 = scmp.ne.s32.totalorder %s665, %s667
    %p671 = scmp.eq.s32.totalorder %s91, 0
    %p672 = por %p670, %p671
    %p673 = scmp.ne.s32.totalorder %s665, %s667
    %p674 = scmp.eq.s32.totalorder %s96, 1
    %p675 = por %p673, %p674
    %p676 = scmp.ne.s32.totalorder %s667, %s668
    %p677 = scmp.eq.s32.totalorder %s96, 0
    %p678 = por %p676, %p677
    %p679 = scmp.ne.s32.totalorder %s667, %s668
    %p680 = scmp.eq.s32.totalorder %s97, 1
    %p681 = por %p679, %p680
    %p683 = scmp.ne.s32.totalorder %s668, %s682
    %p684 = scmp.eq.s32.totalorder %s97, 0
    %p685 = por %p683, %p684
    %s687 = sadd.s32 %s686, 1
    %p690 = scmp.eq.s32.totalorder %s91, 1
    %p691 = scmp.ne.s32.totalorder %s686, %s688
    %p692 = scmp.eq.s32.totalorder %s91, 0
    %p693 = por %p691, %p692
    %p694 = scmp.ne.s32.totalorder %s686, %s688
    %p695 = scmp.eq.s32.totalorder %s96, 1
    %p696 = por %p694, %p695
    %p697 = scmp.ne.s32.totalorder %s688, %s689
    %p698 = scmp.eq.s32.totalorder %s96, 0
    %p699 = por %p697, %p698
    %p700 = scmp.ne.s32.totalorder %s688, %s689
    %p701 = scmp.eq.s32.totalorder %s97, 1
    %p702 = por %p700, %p701
    %p704 = scmp.ne.s32.totalorder %s689, %s703
    %p705 = scmp.eq.s32.totalorder %s97, 0
    %p706 = por %p704, %p705
    %s708 = sadd.s32 %s707, 1
    %p711 = scmp.eq.s32.totalorder %s91, 1
    %p712 = scmp.ne.s32.totalorder %s707, %s709
    %p713 = scmp.eq.s32.totalorder %s91, 0
    %p714 = por %p712, %p713
    %p715 = scmp.ne.s32.totalorder %s707, %s709
    %p716 = scmp.eq.s32.totalorder %s96, 1
    %p717 = por %p715, %p716
    %p718 = scmp.ne.s32.totalorder %s709, %s710
    %p719 = scmp.eq.s32.totalorder %s96, 0
    %p720 = por %p718, %p719
    %p721 = scmp.ne.s32.totalorder %s709, %s710
    %p722 = scmp.eq.s32.totalorder %s97, 1
    %p723 = por %p721, %p722
    %p725 = scmp.ne.s32.totalorder %s710, %s724
    %p726 = scmp.eq.s32.totalorder %s97, 0
    %p727 = por %p725, %p726
    %s729 = sadd.s32 %s728, 1
    %p732 = scmp.eq.s32.totalorder %s91, 1
    %p733 = scmp.ne.s32.totalorder %s728, %s730
    %p734 = scmp.eq.s32.totalorder %s91, 0
    %p735 = por %p733, %p734
    %p736 = scmp.ne.s32.totalorder %s728, %s730
    %p737 = scmp.eq.s32.totalorder %s96, 1
    %p738 = por %p736, %p737
    %p739 = scmp.ne.s32.totalorder %s730, %s731
    %p740 = scmp.eq.s32.totalorder %s96, 0
    %p741 = por %p739, %p740
    %p742 = scmp.ne.s32.totalorder %s730, %s731
    %p743 = scmp.eq.s32.totalorder %s97, 1
    %p744 = por %p742, %p743
    %p746 = scmp.ne.s32.totalorder %s731, %s745
    %p747 = scmp.eq.s32.totalorder %s97, 0
    %p748 = por %p746, %p747
    %s750 = sadd.s32 %s749, 1
    %p753 = scmp.eq.s32.totalorder %s91, 1
    %p754 = scmp.ne.s32.totalorder %s749, %s751
    %p755 = scmp.eq.s32.totalorder %s91, 0
    %p756 = por %p754, %p755
    %p757 = scmp.ne.s32.totalorder %s749, %s751
    %p758 = scmp.eq.s32.totalorder %s96, 1
    %p759 = por %p757, %p758
    %p760 = scmp.ne.s32.totalorder %s751, %s752
    %p761 = scmp.eq.s32.totalorder %s96, 0
    %p762 = por %p760, %p761
    %p763 = scmp.ne.s32.totalorder %s751, %s752
    %p764 = scmp.eq.s32.totalorder %s97, 1
    %p765 = por %p763, %p764
    %p767 = scmp.ne.s32.totalorder %s752, %s766
    %p768 = scmp.eq.s32.totalorder %s97, 0
    %p769 = por %p767, %p768
    %s771 = sadd.s32 %s770, 1
    %p774 = scmp.eq.s32.totalorder %s91, 1
    %p775 = scmp.ne.s32.totalorder %s770, %s772
    %p776 = scmp.eq.s32.totalorder %s91, 0
    %p777 = por %p775, %p776
    %p778 = scmp.ne.s32.totalorder %s770, %s772
    %p779 = scmp.eq.s32.totalorder %s96, 1
    %p780 = por %p778, %p779
    %p781 = scmp.ne.s32.totalorder %s772, %s773
    %p782 = scmp.eq.s32.totalorder %s96, 0
    %p783 = por %p781, %p782
    %p784 = scmp.ne.s32.totalorder %s772, %s773
    %p785 = scmp.eq.s32.totalorder %s97, 1
    %p786 = por %p784, %p785
    %p788 = scmp.ne.s32.totalorder %s773, %s787
    %p789 = scmp.eq.s32.totalorder %s97, 0
    %p790 = por %p788, %p789
    %s792 = sadd.s32 %s791, 1
    %p795 = scmp.eq.s32.totalorder %s91, 1
    %p796 = scmp.ne.s32.totalorder %s791, %s793
    %p797 = scmp.eq.s32.totalorder %s91, 0
    %p798 = por %p796, %p797
    %p799 = scmp.ne.s32.totalorder %s791, %s793
    %p800 = scmp.eq.s32.totalorder %s96, 1
    %p801 = por %p799, %p800
    %p802 = scmp.ne.s32.totalorder %s793, %s794
    %p803 = scmp.eq.s32.totalorder %s96, 0
    %p804 = por %p802, %p803
    %p805 = scmp.ne.s32.totalorder %s793, %s794
    %p806 = scmp.eq.s32.totalorder %s97, 1
    %p807 = por %p805, %p806
    %p809 = scmp.ne.s32.totalorder %s794, %s808
    %p810 = scmp.eq.s32.totalorder %s97, 0
    %p811 = por %p809, %p810
    %s813 = sadd.s32 %s812, 1
    %p816 = scmp.eq.s32.totalorder %s91, 1
    %p817 = scmp.ne.s32.totalorder %s812, %s814
    %p818 = scmp.eq.s32.totalorder %s91, 0
    %p819 = por %p817, %p818
    %p820 = scmp.ne.s32.totalorder %s812, %s814
    %p821 = scmp.eq.s32.totalorder %s96, 1
    %p822 = por %p820, %p821
    %p823 = scmp.ne.s32.totalorder %s814, %s815
    %p824 = scmp.eq.s32.totalorder %s96, 0
    %p825 = por %p823, %p824
    %p826 = scmp.ne.s32.totalorder %s814, %s815
    %p827 = scmp.eq.s32.totalorder %s97, 1
    %p828 = por %p826, %p827
    %p830 = scmp.ne.s32.totalorder %s815, %s829
    %p831 = scmp.eq.s32.totalorder %s97, 0
    %p832 = por %p830, %p831
    %s834 = sadd.s32 %s833, 1
    %p837 = scmp.eq.s32.totalorder %s91, 1
    %p838 = scmp.ne.s32.totalorder %s833, %s835
    %p839 = scmp.eq.s32.totalorder %s91, 0
    %p840 = por %p838, %p839
    %p841 = scmp.ne.s32.totalorder %s833, %s835
    %p842 = scmp.eq.s32.totalorder %s96, 1
    %p843 = por %p841, %p842
    %p844 = scmp.ne.s32.totalorder %s835, %s836
    %p845 = scmp.eq.s32.totalorder %s96, 0
    %p846 = por %p844, %p845
    %p847 = scmp.ne.s32.totalorder %s835, %s836
    %p848 = scmp.eq.s32.totalorder %s97, 1
    %p849 = por %p847, %p848
    %p851 = scmp.ne.s32.totalorder %s836, %s850
    %p852 = scmp.eq.s32.totalorder %s97, 0
    %p853 = por %p851, %p852
    %s855 = sadd.s32 %s854, 1
    %p858 = scmp.eq.s32.totalorder %s91, 1
    %p859 = scmp.ne.s32.totalorder %s854, %s856
    %p860 = scmp.eq.s32.totalorder %s91, 0
    %p861 = por %p859, %p860
    %p862 = scmp.ne.s32.totalorder %s854, %s856
    %p863 = scmp.eq.s32.totalorder %s96, 1
    %p864 = por %p862, %p863
    %p865 = scmp.ne.s32.totalorder %s856, %s857
    %p866 = scmp.eq.s32.totalorder %s96, 0
    %p867 = por %p865, %p866
    %p868 = scmp.ne.s32.totalorder %s856, %s857
    %p869 = scmp.eq.s32.totalorder %s97, 1
    %p870 = por %p868, %p869
    %p872 = scmp.ne.s32.totalorder %s857, %s871
    %p873 = scmp.eq.s32.totalorder %s97, 0
    %p874 = por %p872, %p873
    %s876 = sadd.s32 %s875, 1
    %p879 = scmp.eq.s32.totalorder %s91, 1
    %p880 = scmp.ne.s32.totalorder %s875, %s877
    %p881 = scmp.eq.s32.totalorder %s91, 0
    %p882 = por %p880, %p881
    %p883 = scmp.ne.s32.totalorder %s875, %s877
    %p884 = scmp.eq.s32.totalorder %s96, 1
    %p885 = por %p883, %p884
    %p886 = scmp.ne.s32.totalorder %s877, %s878
    %p887 = scmp.eq.s32.totalorder %s96, 0
    %p888 = por %p886, %p887
    %p889 = scmp.ne.s32.totalorder %s877, %s878
    %p890 = scmp.eq.s32.totalorder %s97, 1
    %p891 = por %p889, %p890
    %p893 = scmp.ne.s32.totalorder %s878, %s892
    %p894 = scmp.eq.s32.totalorder %s97, 0
    %p895 = por %p893, %p894
    %s897 = sadd.s32 %s896, 1
    %p900 = scmp.eq.s32.totalorder %s91, 1
    %p901 = scmp.ne.s32.totalorder %s896, %s898
    %p902 = scmp.eq.s32.totalorder %s91, 0
    %p903 = por %p901, %p902
    %p904 = scmp.ne.s32.totalorder %s896, %s898
    %p905 = scmp.eq.s32.totalorder %s96, 1
    %p906 = por %p904, %p905
    %p907 = scmp.ne.s32.totalorder %s898, %s899
    %p908 = scmp.eq.s32.totalorder %s96, 0
    %p909 = por %p907, %p908
    %p910 = scmp.ne.s32.totalorder %s898, %s899
    %p911 = scmp.eq.s32.totalorder %s97, 1
    %p912 = por %p910, %p911
    %p914 = scmp.ne.s32.totalorder %s899, %s913
    %p915 = scmp.eq.s32.totalorder %s97, 0
    %p916 = por %p914, %p915
    %s918 = sadd.s32 %s917, 1
    %p921 = scmp.eq.s32.totalorder %s91, 1
    %p922 = scmp.ne.s32.totalorder %s917, %s919
    %p923 = scmp.eq.s32.totalorder %s91, 0
    %p924 = por %p922, %p923
    %p925 = scmp.ne.s32.totalorder %s917, %s919
    %p926 = scmp.eq.s32.totalorder %s96, 1
    %p927 = por %p925, %p926
    %p928 = scmp.ne.s32.totalorder %s919, %s920
    %p929 = scmp.eq.s32.totalorder %s96, 0
    %p930 = por %p928, %p929
    %p931 = scmp.ne.s32.totalorder %s919, %s920
    %p932 = scmp.eq.s32.totalorder %s97, 1
    %p933 = por %p931, %p932
    %p935 = scmp.ne.s32.totalorder %s920, %s934
    %p936 = scmp.eq.s32.totalorder %s97, 0
    %p937 = por %p935, %p936
    %s939 = sadd.s32 %s938, 1
    %p942 = scmp.eq.s32.totalorder %s91, 1
    %p943 = scmp.ne.s32.totalorder %s938, %s940
    %p944 = scmp.eq.s32.totalorder %s91, 0
    %p945 = por %p943, %p944
    %p946 = scmp.ne.s32.totalorder %s938, %s940
    %p947 = scmp.eq.s32.totalorder %s96, 1
    %p948 = por %p946, %p947
    %p949 = scmp.ne.s32.totalorder %s940, %s941
    %p950 = scmp.eq.s32.totalorder %s96, 0
    %p951 = por %p949, %p950
    %p952 = scmp.ne.s32.totalorder %s940, %s941
    %p953 = scmp.eq.s32.totalorder %s97, 1
    %p954 = por %p952, %p953
    %p956 = scmp.ne.s32.totalorder %s941, %s955
    %p957 = scmp.eq.s32.totalorder %s97, 0
    %p958 = por %p956, %p957
    %s960 = sadd.s32 %s959, 1
    %p963 = scmp.eq.s32.totalorder %s91, 1
    %p964 = scmp.ne.s32.totalorder %s959, %s961
    %p965 = scmp.eq.s32.totalorder %s91, 0
    %p966 = por %p964, %p965
    %p967 = scmp.ne.s32.totalorder %s959, %s961
    %p968 = scmp.eq.s32.totalorder %s96, 1
    %p969 = por %p967, %p968
    %p970 = scmp.ne.s32.totalorder %s961, %s962
    %p971 = scmp.eq.s32.totalorder %s96, 0
    %p972 = por %p970, %p971
    %p973 = scmp.ne.s32.totalorder %s961, %s962
    %p974 = scmp.eq.s32.totalorder %s97, 1
    %p975 = por %p973, %p974
    %p977 = scmp.ne.s32.totalorder %s962, %s976
    %p978 = scmp.eq.s32.totalorder %s97, 0
    %p979 = por %p977, %p978
    %s981 = sadd.s32 %s980, 1
    %p984 = scmp.eq.s32.totalorder %s91, 1
    %p985 = scmp.ne.s32.totalorder %s980, %s982
    %p986 = scmp.eq.s32.totalorder %s91, 0
    %p987 = por %p985, %p986
    %p988 = scmp.ne.s32.totalorder %s980, %s982
    %p989 = scmp.eq.s32.totalorder %s96, 1
    %p990 = por %p988, %p989
    %p991 = scmp.ne.s32.totalorder %s982, %s983
    %p992 = scmp.eq.s32.totalorder %s96, 0
    %p993 = por %p991, %p992
    %p994 = scmp.ne.s32.totalorder %s982, %s983
    %p995 = scmp.eq.s32.totalorder %s97, 1
    %p996 = por %p994, %p995
    %p998 = scmp.ne.s32.totalorder %s983, %s997
    %p999 = scmp.eq.s32.totalorder %s97, 0
    %p1000 = por %p998, %p999
    %s1001 = ssub.s32 %s91, %s98
    %p1002 = scmp.eq.s32.totalorder %s1001, 0
    %s1004 = sadd.s32 %s1003, 1
    %s1005 = scalar_select %p1002, %s1003, %s1004
    %p1008 = pneg %p1002
    %p1009 = scmp.eq.s32.totalorder %s91, 1
    %p1010 = por %p1008, %p1009
    %p1011 = scmp.ne.s32.totalorder %s1003, %s1006
    %p1012 = scmp.eq.s32.totalorder %s91, 0
    %p1013 = por %p1011, %p1012
    %p1014 = scmp.ne.s32.totalorder %s1003, %s1006
    %p1015 = scmp.eq.s32.totalorder %s96, 1
    %p1016 = por %p1014, %p1015
    %p1017 = scmp.ne.s32.totalorder %s1006, %s1007
    %p1018 = scmp.eq.s32.totalorder %s96, 0
    %p1019 = por %p1017, %p1018
    %p1020 = scmp.ne.s32.totalorder %s1006, %s1007
    %p1021 = scmp.eq.s32.totalorder %s97, 1
    %p1022 = por %p1020, %p1021
    %p1024 = scmp.ne.s32.totalorder %s1007, %s1023
    %p1025 = scmp.eq.s32.totalorder %s97, 0
    %p1026 = por %p1024, %p1025
    %p1027 = scmp.le.s32.totalorder 1, %s91
    %p1028 = scmp.lt.s32.totalorder %s91, 3
    %p1029 = pnand %p1027, %p1028
    %p1030 = pneg %p1029
    // Predicated region
    $region9: #{bart_forward_loss.1} parent=5 // pred_check
      _
    $region10: #{bart_forward_loss.1} parent=5 // pred_check_branch
      %1032 = sbr.rel (%p1029) target = $region12
    $region11: #{bart_forward_loss.1} parent=5 // pred_region
      %s1033 = ssub.s32 %s91, 1
      // Predicated region
      $region13: #{bart_forward_loss.1} parent=11 // pred_check
        %p1034 = pneg %p216
      $region14: #{bart_forward_loss.1} parent=11 // pred_check_branch
        %1036 = sbr.rel (%p1034) target = $region16
      $region15: #{bart_forward_loss.1} parent=11 // pred_region
        _
      $region16: #{bart_forward_loss.1} parent=11 // pred_fallthru
        _
      // Predicated region
      $region17: #{bart_forward_loss.1} parent=11 // pred_check
        %p1037 = pneg %p237
      $region18: #{bart_forward_loss.1} parent=11 // pred_check_branch
        %1039 = sbr.rel (%p1037) target = $region20
      $region19: #{bart_forward_loss.1} parent=11 // pred_region
        _
      $region20: #{bart_forward_loss.1} parent=11 // pred_fallthru
        _
      // Predicated region
      $region21: #{bart_forward_loss.1} parent=11 // pred_check
        %p1040 = pneg %p258
      $region22: #{bart_forward_loss.1} parent=11 // pred_check_branch
        %1042 = sbr.rel (%p1040) target = $region24
      $region23: #{bart_forward_loss.1} parent=11 // pred_region
        _
      $region24: #{bart_forward_loss.1} parent=11 // pred_fallthru
        _
      // Predicated region
      $region25: #{bart_forward_loss.1} parent=11 // pred_check
        %p1043 = pneg %p279
      $region26: #{bart_forward_loss.1} parent=11 // pred_check_branch
        %1045 = sbr.rel (%p1043) target = $region28
      $region27: #{bart_forward_loss.1} parent=11 // pred_region
        _
      $region28: #{bart_forward_loss.1} parent=11 // pred_fallthru
        _
      // Predicated region
      $region29: #{bart_forward_loss.1} parent=11 // pred_check
        %p1046 = pneg %p300
      $region30: #{bart_forward_loss.1} parent=11 // pred_check_branch
        %1048 = sbr.rel (%p1046) target = $region32
      $region31: #{bart_forward_loss.1} parent=11 // pred_region
        _
      $region32: #{bart_forward_loss.1} parent=11 // pred_fallthru
        _
      // Predicated region
      $region33: #{bart_forward_loss.1} parent=11 // pred_check
        %p1049 = pneg %p321
      $region34: #{bart_forward_loss.1} parent=11 // pred_check_branch
        %1051 = sbr.rel (%p1049) target = $region36
      $region35: #{bart_forward_loss.1} parent=11 // pred_region
        _
      $region36: #{bart_forward_loss.1} parent=11 // pred_fallthru
        _
      // Predicated region
      $region37: #{bart_forward_loss.1} parent=11 // pred_check
        %p1052 = pneg %p342
      $region38: #{bart_forward_loss.1} parent=11 // pred_check_branch
        %1054 = sbr.rel (%p1052) target = $region40
      $region39: #{bart_forward_loss.1} parent=11 // pred_region
        _
      $region40: #{bart_forward_loss.1} parent=11 // pred_fallthru
        _
      // Predicated region
      $region41: #{bart_forward_loss.1} parent=11 // pred_check
        %p1055 = pneg %p363
      $region42: #{bart_forward_loss.1} parent=11 // pred_check_branch
        %1057 = sbr.rel (%p1055) target = $region44
      $region43: #{bart_forward_loss.1} parent=11 // pred_region
        _
      $region44: #{bart_forward_loss.1} parent=11 // pred_fallthru
        _
      // Predicated region
      $region45: #{bart_forward_loss.1} parent=11 // pred_check
        %p1058 = pneg %p384
      $region46: #{bart_forward_loss.1} parent=11 // pred_check_branch
        %1060 = sbr.rel (%p1058) target = $region48
      $region47: #{bart_forward_loss.1} parent=11 // pred_region
        _
      $region48: #{bart_forward_loss.1} parent=11 // pred_fallthru
        _
      // Predicated region
      $region49: #{bart_forward_loss.1} parent=11 // pred_check
        %p1061 = pneg %p405
      $region50: #{bart_forward_loss.1} parent=11 // pred_check_branch
        %1063 = sbr.rel (%p1061) target = $region52
      $region51: #{bart_forward_loss.1} parent=11 // pred_region
        _
      $region52: #{bart_forward_loss.1} parent=11 // pred_fallthru
        _
      // Predicated region
      $region53: #{bart_forward_loss.1} parent=11 // pred_check
        %p1064 = pneg %p426
      $region54: #{bart_forward_loss.1} parent=11 // pred_check_branch
        %1066 = sbr.rel (%p1064) target = $region56
      $region55: #{bart_forward_loss.1} parent=11 // pred_region
        _
      $region56: #{bart_forward_loss.1} parent=11 // pred_fallthru
        _
      // Predicated region
      $region57: #{bart_forward_loss.1} parent=11 // pred_check
        %p1067 = pneg %p447
      $region58: #{bart_forward_loss.1} parent=11 // pred_check_branch
        %1069 = sbr.rel (%p1067) target = $region60
      $region59: #{bart_forward_loss.1} parent=11 // pred_region
        _
      $region60: #{bart_forward_loss.1} parent=11 // pred_fallthru
        _
      // Predicated region
      $region61: #{bart_forward_loss.1} parent=11 // pred_check
        %p1070 = pneg %p468
      $region62: #{bart_forward_loss.1} parent=11 // pred_check_branch
        %1072 = sbr.rel (%p1070) target = $region64
      $region63: #{bart_forward_loss.1} parent=11 // pred_region
        _
      $region64: #{bart_forward_loss.1} parent=11 // pred_fallthru
        _
      // Predicated region
      $region65: #{bart_forward_loss.1} parent=11 // pred_check
        %p1073 = pneg %p489
      $region66: #{bart_forward_loss.1} parent=11 // pred_check_branch
        %1075 = sbr.rel (%p1073) target = $region68
      $region67: #{bart_forward_loss.1} parent=11 // pred_region
        _
      $region68: #{bart_forward_loss.1} parent=11 // pred_fallthru
        _
      // Predicated region
      $region69: #{bart_forward_loss.1} parent=11 // pred_check
        %p1076 = pneg %p510
      $region70: #{bart_forward_loss.1} parent=11 // pred_check_branch
        %1078 = sbr.rel (%p1076) target = $region72
      $region71: #{bart_forward_loss.1} parent=11 // pred_region
        _
      $region72: #{bart_forward_loss.1} parent=11 // pred_fallthru
        _
      // Predicated region
      $region73: #{bart_forward_loss.1} parent=11 // pred_check
        %p1079 = pneg %p531
      $region74: #{bart_forward_loss.1} parent=11 // pred_check_branch
        %1081 = sbr.rel (%p1079) target = $region76
      $region75: #{bart_forward_loss.1} parent=11 // pred_region
        _
      $region76: #{bart_forward_loss.1} parent=11 // pred_fallthru
        _
      // Predicated region
      $region77: #{bart_forward_loss.1} parent=11 // pred_check
        %p1082 = pneg %p552
      $region78: #{bart_forward_loss.1} parent=11 // pred_check_branch
        %1084 = sbr.rel (%p1082) target = $region80
      $region79: #{bart_forward_loss.1} parent=11 // pred_region
        _
      $region80: #{bart_forward_loss.1} parent=11 // pred_fallthru
        _
      // Predicated region
      $region81: #{bart_forward_loss.1} parent=11 // pred_check
        %p1085 = pneg %p573
      $region82: #{bart_forward_loss.1} parent=11 // pred_check_branch
        %1087 = sbr.rel (%p1085) target = $region84
      $region83: #{bart_forward_loss.1} parent=11 // pred_region
        _
      $region84: #{bart_forward_loss.1} parent=11 // pred_fallthru
        _
      // Predicated region
      $region85: #{bart_forward_loss.1} parent=11 // pred_check
        %p1088 = pneg %p594
      $region86: #{bart_forward_loss.1} parent=11 // pred_check_branch
        %1090 = sbr.rel (%p1088) target = $region88
      $region87: #{bart_forward_loss.1} parent=11 // pred_region
        _
      $region88: #{bart_forward_loss.1} parent=11 // pred_fallthru
        _
      // Predicated region
      $region89: #{bart_forward_loss.1} parent=11 // pred_check
        %p1091 = pneg %p615
      $region90: #{bart_forward_loss.1} parent=11 // pred_check_branch
        %1093 = sbr.rel (%p1091) target = $region92
      $region91: #{bart_forward_loss.1} parent=11 // pred_region
        _
      $region92: #{bart_forward_loss.1} parent=11 // pred_fallthru
        _
      // Predicated region
      $region93: #{bart_forward_loss.1} parent=11 // pred_check
        %p1094 = pneg %p636
      $region94: #{bart_forward_loss.1} parent=11 // pred_check_branch
        %1096 = sbr.rel (%p1094) target = $region96
      $region95: #{bart_forward_loss.1} parent=11 // pred_region
        _
      $region96: #{bart_forward_loss.1} parent=11 // pred_fallthru
        _
      // Predicated region
      $region97: #{bart_forward_loss.1} parent=11 // pred_check
        %p1097 = pneg %p657
      $region98: #{bart_forward_loss.1} parent=11 // pred_check_branch
        %1099 = sbr.rel (%p1097) target = $region100
      $region99: #{bart_forward_loss.1} parent=11 // pred_region
        _
      $region100: #{bart_forward_loss.1} parent=11 // pred_fallthru
        _
      // Predicated region
      $region101: #{bart_forward_loss.1} parent=11 // pred_check
        %p1100 = pneg %p678
      $region102: #{bart_forward_loss.1} parent=11 // pred_check_branch
        %1102 = sbr.rel (%p1100) target = $region104
      $region103: #{bart_forward_loss.1} parent=11 // pred_region
        _
      $region104: #{bart_forward_loss.1} parent=11 // pred_fallthru
        _
      // Predicated region
      $region105: #{bart_forward_loss.1} parent=11 // pred_check
        %p1103 = pneg %p699
      $region106: #{bart_forward_loss.1} parent=11 // pred_check_branch
        %1105 = sbr.rel (%p1103) target = $region108
      $region107: #{bart_forward_loss.1} parent=11 // pred_region
        _
      $region108: #{bart_forward_loss.1} parent=11 // pred_fallthru
        _
      // Predicated region
      $region109: #{bart_forward_loss.1} parent=11 // pred_check
        %p1106 = pneg %p720
      $region110: #{bart_forward_loss.1} parent=11 // pred_check_branch
        %1108 = sbr.rel (%p1106) target = $region112
      $region111: #{bart_forward_loss.1} parent=11 // pred_region
        _
      $region112: #{bart_forward_loss.1} parent=11 // pred_fallthru
        _
      // Predicated region
      $region113: #{bart_forward_loss.1} parent=11 // pred_check
        %p1109 = pneg %p741
      $region114: #{bart_forward_loss.1} parent=11 // pred_check_branch
        %1111 = sbr.rel (%p1109) target = $region116
      $region115: #{bart_forward_loss.1} parent=11 // pred_region
        _
      $region116: #{bart_forward_loss.1} parent=11 // pred_fallthru
        _
      // Predicated region
      $region117: #{bart_forward_loss.1} parent=11 // pred_check
        %p1112 = pneg %p762
      $region118: #{bart_forward_loss.1} parent=11 // pred_check_branch
        %1114 = sbr.rel (%p1112) target = $region120
      $region119: #{bart_forward_loss.1} parent=11 // pred_region
        _
      $region120: #{bart_forward_loss.1} parent=11 // pred_fallthru
        _
      // Predicated region
      $region121: #{bart_forward_loss.1} parent=11 // pred_check
        %p1115 = pneg %p783
      $region122: #{bart_forward_loss.1} parent=11 // pred_check_branch
        %1117 = sbr.rel (%p1115) target = $region124
      $region123: #{bart_forward_loss.1} parent=11 // pred_region
        _
      $region124: #{bart_forward_loss.1} parent=11 // pred_fallthru
        _
      // Predicated region
      $region125: #{bart_forward_loss.1} parent=11 // pred_check
        %p1118 = pneg %p804
      $region126: #{bart_forward_loss.1} parent=11 // pred_check_branch
        %1120 = sbr.rel (%p1118) target = $region128
      $region127: #{bart_forward_loss.1} parent=11 // pred_region
        _
      $region128: #{bart_forward_loss.1} parent=11 // pred_fallthru
        _
      // Predicated region
      $region129: #{bart_forward_loss.1} parent=11 // pred_check
        %p1121 = pneg %p825
      $region130: #{bart_forward_loss.1} parent=11 // pred_check_branch
        %1123 = sbr.rel (%p1121) target = $region132
      $region131: #{bart_forward_loss.1} parent=11 // pred_region
        _
      $region132: #{bart_forward_loss.1} parent=11 // pred_fallthru
        _
      // Predicated region
      $region133: #{bart_forward_loss.1} parent=11 // pred_check
        %p1124 = pneg %p846
      $region134: #{bart_forward_loss.1} parent=11 // pred_check_branch
        %1126 = sbr.rel (%p1124) target = $region136
      $region135: #{bart_forward_loss.1} parent=11 // pred_region
        _
      $region136: #{bart_forward_loss.1} parent=11 // pred_fallthru
        _
      // Predicated region
      $region137: #{bart_forward_loss.1} parent=11 // pred_check
        %p1127 = pneg %p867
      $region138: #{bart_forward_loss.1} parent=11 // pred_check_branch
        %1129 = sbr.rel (%p1127) target = $region140
      $region139: #{bart_forward_loss.1} parent=11 // pred_region
        _
      $region140: #{bart_forward_loss.1} parent=11 // pred_fallthru
        _
      // Predicated region
      $region141: #{bart_forward_loss.1} parent=11 // pred_check
        %p1130 = pneg %p888
      $region142: #{bart_forward_loss.1} parent=11 // pred_check_branch
        %1132 = sbr.rel (%p1130) target = $region144
      $region143: #{bart_forward_loss.1} parent=11 // pred_region
        _
      $region144: #{bart_forward_loss.1} parent=11 // pred_fallthru
        _
      // Predicated region
      $region145: #{bart_forward_loss.1} parent=11 // pred_check
        %p1133 = pneg %p909
      $region146: #{bart_forward_loss.1} parent=11 // pred_check_branch
        %1135 = sbr.rel (%p1133) target = $region148
      $region147: #{bart_forward_loss.1} parent=11 // pred_region
        _
      $region148: #{bart_forward_loss.1} parent=11 // pred_fallthru
        _
      // Predicated region
      $region149: #{bart_forward_loss.1} parent=11 // pred_check
        %p1136 = pneg %p930
      $region150: #{bart_forward_loss.1} parent=11 // pred_check_branch
        %1138 = sbr.rel (%p1136) target = $region152
      $region151: #{bart_forward_loss.1} parent=11 // pred_region
        _
      $region152: #{bart_forward_loss.1} parent=11 // pred_fallthru
        _
      // Predicated region
      $region153: #{bart_forward_loss.1} parent=11 // pred_check
        %p1139 = pneg %p951
      $region154: #{bart_forward_loss.1} parent=11 // pred_check_branch
        %1141 = sbr.rel (%p1139) target = $region156
      $region155: #{bart_forward_loss.1} parent=11 // pred_region
        _
      $region156: #{bart_forward_loss.1} parent=11 // pred_fallthru
        _
      // Predicated region
      $region157: #{bart_forward_loss.1} parent=11 // pred_check
        %p1142 = pneg %p972
      $region158: #{bart_forward_loss.1} parent=11 // pred_check_branch
        %1144 = sbr.rel (%p1142) target = $region160
      $region159: #{bart_forward_loss.1} parent=11 // pred_region
        _
      $region160: #{bart_forward_loss.1} parent=11 // pred_fallthru
        _
      // Predicated region
      $region161: #{bart_forward_loss.1} parent=11 // pred_check
        %p1145 = pneg %p993
      $region162: #{bart_forward_loss.1} parent=11 // pred_check_branch
        %1147 = sbr.rel (%p1145) target = $region164
      $region163: #{bart_forward_loss.1} parent=11 // pred_region
        _
      $region164: #{bart_forward_loss.1} parent=11 // pred_fallthru
        _
    $region12: #{bart_forward_loss.1} parent=5 // pred_fallthru
      _
    %p1148 = scmp.lt.s32.totalorder %s91, 2
    // Predicated region
    $region165: #{bart_forward_loss.1} parent=5 // pred_check
      %p1149 = pneg %p1148
    $region166: #{bart_forward_loss.1} parent=5 // pred_check_branch
      %1151 = sbr.rel (%p1149) target = $region168
    $region167: #{bart_forward_loss.1} parent=5 // pred_region
      // Predicated region
      $region169: #{bart_forward_loss.1} parent=167 // pred_check
        %p1152 = pneg %p111
      $region170: #{bart_forward_loss.1} parent=167 // pred_check_branch
        %1154 = sbr.rel (%p1152) target = $region172
      $region171: #{bart_forward_loss.1} parent=167 // pred_region
        %p1155 = scmp.lt.s32.totalorder %s91, 1
        %s1156 = scalar_select %p1155, %s91, 1
        %s1157 = scalar_lea.vmem %s1, %s1156
      $region172: #{bart_forward_loss.1} parent=167 // pred_fallthru
        _
      // Predicated region
      $region173: #{bart_forward_loss.1} parent=167 // pred_check
        %p1158 = pneg %p137
      $region174: #{bart_forward_loss.1} parent=167 // pred_check_branch
        %1160 = sbr.rel (%p1158) target = $region176
      $region175: #{bart_forward_loss.1} parent=167 // pred_region
        %p1161 = scmp.lt.s32.totalorder %s91, 1
        %s1162 = scalar_select %p1161, %s91, 1
        %s1163 = smul.addr %s1162, 2
        %s1164 = smul.addr %s1163, 8
        %s1165 = scalar_lea.vmem %s3, %s1164
      $region176: #{bart_forward_loss.1} parent=167 // pred_fallthru
        _
      // Predicated region
      $region177: #{bart_forward_loss.1} parent=167 // pred_check
        %p1166 = pneg %p163
      $region178: #{bart_forward_loss.1} parent=167 // pred_check_branch
        %1168 = sbr.rel (%p1166) target = $region180
      $region179: #{bart_forward_loss.1} parent=167 // pred_region
        %p1169 = scmp.lt.s32.totalorder %s91, 1
        %s1170 = scalar_select %p1169, %s91, 1
        %s1171 = smul.addr %s1170, 2
        %s1172 = smul.addr %s1171, 8
        %s1173 = scalar_lea.vmem %s5, %s1172
      $region180: #{bart_forward_loss.1} parent=167 // pred_fallthru
        _
      // Predicated region
      $region181: #{bart_forward_loss.1} parent=167 // pred_check
        %p1174 = pneg %p189
      $region182: #{bart_forward_loss.1} parent=167 // pred_check_branch
        %1176 = sbr.rel (%p1174) target = $region184
      $region183: #{bart_forward_loss.1} parent=167 // pred_region
        %p1177 = scmp.lt.s32.totalorder %s91, 1
        %s1178 = scalar_select %p1177, %s91, 1
        %s1179 = smul.addr %s1178, 2
        %s1180 = smul.addr %s1179, 8
        %s1181 = scalar_lea.vmem %s7, %s1180
      $region184: #{bart_forward_loss.1} parent=167 // pred_fallthru
        _
    $region168: #{bart_forward_loss.1} parent=5 // pred_fallthru
      _
    %p1182 = scmp.le.s32.totalorder 1, %s91
    %p1183 = scmp.lt.s32.totalorder %s91, 3
    %p1184 = pnand %p1182, %p1183
    %p1185 = pneg %p1184
    // Predicated region
    $region185: #{bart_forward_loss.1} parent=5 // pred_check
      _
    $region186: #{bart_forward_loss.1} parent=5 // pred_check_branch
      %1187 = sbr.rel (%p1184) target = $region188
    $region187: #{bart_forward_loss.1} parent=5 // pred_region
      %s1188 = ssub.s32 %s91, 1
      %p1189 = scmp.lt.s32.totalorder %s96, 1
      %s1190 = scalar_select %p1189, %s96, 1
      %s1191 = scalar_lea.vmem %s1, %s1190
      %p1192 = pneg %p117
      %p1193 = pneg %p114
      %p1194 = scmp.lt.s32.totalorder %s96, 1
      %s1195 = scalar_select %p1194, %s96, 1
      %s1196 = smul.addr %s1195, 2
      %s1197 = smul.addr %s1196, 8
      %s1198 = scalar_lea.vmem %s3, %s1197
      %p1199 = pneg %p143
      %p1200 = pneg %p140
      %p1201 = scmp.lt.s32.totalorder %s96, 1
      %s1202 = scalar_select %p1201, %s96, 1
      %s1203 = smul.addr %s1202, 2
      %s1204 = smul.addr %s1203, 8
      %s1205 = scalar_lea.vmem %s5, %s1204
      %p1206 = pneg %p169
      %p1207 = pneg %p166
      %p1208 = scmp.lt.s32.totalorder %s96, 1
      %s1209 = scalar_select %p1208, %s96, 1
      %s1210 = smul.addr %s1209, 2
      %s1211 = smul.addr %s1210, 8
      %s1212 = scalar_lea.vmem %s7, %s1211
      %p1213 = pneg %p195
      %p1214 = pneg %p192
      %p1215 = pneg %p216
      %p1216 = pneg %p213
      %p1217 = pneg %p237
      %p1218 = pneg %p234
      %p1219 = pneg %p258
      %p1220 = pneg %p255
      %p1221 = pneg %p279
      %p1222 = pneg %p276
      %p1223 = pneg %p300
      %p1224 = pneg %p297
      %p1225 = pneg %p321
      %p1226 = pneg %p318
      %p1227 = pneg %p342
      %p1228 = pneg %p339
      %p1229 = pneg %p363
      %p1230 = pneg %p360
      %p1231 = pneg %p384
      %p1232 = pneg %p381
      %p1233 = pneg %p405
      %p1234 = pneg %p402
      %p1235 = pneg %p426
      %p1236 = pneg %p423
      %p1237 = pneg %p447
      %p1238 = pneg %p444
      %p1239 = pneg %p468
      %p1240 = pneg %p465
      %p1241 = pneg %p489
      %p1242 = pneg %p486
      %p1243 = pneg %p510
      %p1244 = pneg %p507
      %p1245 = pneg %p531
      %p1246 = pneg %p528
      %p1247 = pneg %p552
      %p1248 = pneg %p549
      %p1249 = pneg %p573
      %p1250 = pneg %p570
      %p1251 = pneg %p594
      %p1252 = pneg %p591
      %p1253 = pneg %p615
      %p1254 = pneg %p612
      %p1255 = pneg %p636
      %p1256 = pneg %p633
      %p1257 = pneg %p657
      %p1258 = pneg %p654
      %p1259 = pneg %p678
      %p1260 = pneg %p675
      %p1261 = pneg %p699
      %p1262 = pneg %p696
      %p1263 = pneg %p720
      %p1264 = pneg %p717
      %p1265 = pneg %p741
      %p1266 = pneg %p738
      %p1267 = pneg %p762
      %p1268 = pneg %p759
      %p1269 = pneg %p783
      %p1270 = pneg %p780
      %p1271 = pneg %p804
      %p1272 = pneg %p801
      %p1273 = pneg %p825
      %p1274 = pneg %p822
      %p1275 = pneg %p846
      %p1276 = pneg %p843
      %p1277 = pneg %p867
      %p1278 = pneg %p864
      %p1279 = pneg %p888
      %p1280 = pneg %p885
      %p1281 = pneg %p909
      %p1282 = pneg %p906
      %p1283 = pneg %p930
      %p1284 = pneg %p927
      %p1285 = pneg %p951
      %p1286 = pneg %p948
      %p1287 = pneg %p972
      %p1288 = pneg %p969
      %p1289 = pneg %p993
      %p1290 = pneg %p990
      %p1291 = pneg %p1019
      %p1292 = pneg %p1016
      %p1293 = scmp.lt.s32.totalorder %s96, 1
      %s1294 = scalar_select %p1293, %s96, 1
      %s1295 = smul.addr %s1294, 2
      %s1296 = smul.addr %s1295, 8
      %s1297 = scalar_lea.vmem %s85, %s1296
      %p1298 = scmp.lt.s32.totalorder %s96, 1
      %s1299 = scalar_select %p1298, %s96, 1
      %s1300 = scalar_lea.vmem %s1, %s1299
      %p1301 = scmp.lt.s32.totalorder %s96, 1
      %s1302 = scalar_select %p1301, %s96, 1
      %s1303 = smul.addr %s1302, 2
      %s1304 = smul.addr %s1303, 8
      %s1305 = scalar_lea.vmem %s3, %s1304
      %p1306 = scmp.lt.s32.totalorder %s96, 1
      %s1307 = scalar_select %p1306, %s96, 1
      %s1308 = smul.addr %s1307, 2
      %s1309 = smul.addr %s1308, 8
      %s1310 = scalar_lea.vmem %s5, %s1309
      %p1311 = scmp.lt.s32.totalorder %s96, 1
      %s1312 = scalar_select %p1311, %s96, 1
      %s1313 = smul.addr %s1312, 2
      %s1314 = smul.addr %s1313, 8
      %s1315 = scalar_lea.vmem %s7, %s1314
      %p1316 = scmp.lt.s32.totalorder %s96, 1
      %s1317 = scalar_select %p1316, %s96, 1
      %s1318 = smul.addr %s1317, 2
      %s1319 = smul.addr %s1318, 8
      %s1320 = scalar_lea.vmem %s85, %s1319
      %v1322 = vld [vmem:[%s1305] sm:$0xff]
      %v1323 = vld [vmem:[%s1305 + $0x8] sm:$0xff]
      %v1324 = vld [vmem:[%s1300] sm:$0x1]
      %v1325 = vsub.f32 1.0, %v1324
      %v1326 = vmul.f32 %v1325, -1e+09
      %v1327 = vld [vmem:[%s9] sm:$0x1]
      %v1328 = vld [vmem:[%s11] sm:$0x1]
      %1329 = vadd.xlane.f32.xlu0 %v1322
      %v1330 = vpop.xlane.xlu0 %1329
      %1331 = vadd.xlane.f32.xlu0 %v1323
      %v1332 = vpop.xlane.xlu0 %1331
      %v1333 = vrcp.pop 128.0
      %v1334 = vmul.f32 128.0, %v1333
      %v1335 = vsub.f32 1.0, %v1334
      %v1336 = vmul.f32 %v1333, %v1335
      %v1337 = vadd.f32 %v1333, %v1336
      %vm1338 = vweird.f32 %v1333
      %v1339 = vsel %vm1338, %v1333, %v1337
      %v1340 = vmul.f32 %v1330, %v1339
      %v1341 = vmul.f32 %v1332, %v1339
      %v1342 = vsub.f32 %v1322, %v1340
      %v1343 = vsub.f32 %v1323, %v1341
      %v1344 = vmul.f32 %v1342, %v1342
      %v1345 = vmul.f32 %v1343, %v1343
      %1346 = vadd.xlane.f32.xlu0 %v1344
      %v1347 = vpop.xlane.xlu0 %1346
      %1348 = vadd.xlane.f32.xlu0 %v1345
      %v1349 = vpop.xlane.xlu0 %1348
      %v1350 = vmul.f32 %v1347, %v1339
      %v1351 = vmul.f32 %v1349, %v1339
      %v1352 = vadd.f32 %v1350, 1e-05
      %v1353 = vadd.f32 %v1351, 1e-05
      %v1354 = vrsqrt.pop %v1352
      %v1355 = vmul.f32 %v1354, %v1352
      %v1356 = vmul.f32 %v1355, %v1354
      %v1357 = vmul.f32 0.5, %v1356
      %v1358 = vsub.f32 1.5, %v1357
      %v1359 = vmul.f32 %v1354, %v1358
      %vm1360 = vweird.f32 %v1352
      %vm1361 = vweird.f32 %v1354
      %vm1362 = vmor %vm1360, %vm1361
      %v1363 = vsel %vm1362, %v1354, %v1359
      %v1364 = vrsqrt.pop %v1353
      %v1365 = vmul.f32 %v1364, %v1353
      %v1366 = vmul.f32 %v1365, %v1364
      %v1367 = vmul.f32 0.5, %v1366
      %v1368 = vsub.f32 1.5, %v1367
      %v1369 = vmul.f32 %v1364, %v1368
      %vm1370 = vweird.f32 %v1353
      %vm1371 = vweird.f32 %v1364
      %vm1372 = vmor %vm1370, %vm1371
      %v1373 = vsel %vm1372, %v1364, %v1369
      %v1374 = vmul.f32 %v1342, %v1363
      %v1375 = vmul.f32 %v1343, %v1373
      %v1377 = vperm.slane %v1327, 0
      %v1379 = vmul.f32 %v1374, %v1377
      %v1380 = vmul.f32 %v1375, %v1377
      %v1382 = vperm.slane %v1328, 0
      %v1384 = vadd.f32 %v1379, %v1382
      %v1385 = vadd.f32 %v1380, %v1382
      %v1386 = vld [vmem:[%s13] sm:$0xff]
      %v1387 = vld [vmem:[%s13 + $0x8] sm:$0xf]
      %v1388 = vld [vmem:[%s13 + $0xc] sm:$0xff]
      %v1389 = vld [vmem:[%s13 + $0x14] sm:$0xf]
      %v1390 = vld [vmem:[%s13 + $0x18] sm:$0xff]
      %v1391 = vld [vmem:[%s13 + $0x20] sm:$0xf]
      %v1392 = vld [vmem:[%s13 + $0x24] sm:$0xff]
      %v1393 = vld [vmem:[%s13 + $0x2c] sm:$0xf]
      %v1394 = vld [vmem:[%s13 + $0x30] sm:$0xff]
      %v1395 = vld [vmem:[%s13 + $0x38] sm:$0xf]
      %v1396 = vld [vmem:[%s13 + $0x3c] sm:$0xff]
      %v1397 = vld [vmem:[%s13 + $0x44] sm:$0xf]
      %v1398 = vld [vmem:[%s13 + $0x48] sm:$0xff]
      %v1399 = vld [vmem:[%s13 + $0x50] sm:$0xf]
      %v1400 = vld [vmem:[%s13 + $0x54] sm:$0xff]
      %v1401 = vld [vmem:[%s13 + $0x5c] sm:$0xf]
      %v1402 = vld [vmem:[%s13 + $0x60] sm:$0xff]
      %v1403 = vld [vmem:[%s13 + $0x68] sm:$0xf]
      %v1404 = vld [vmem:[%s13 + $0x6c] sm:$0xff]
      %v1405 = vld [vmem:[%s13 + $0x74] sm:$0xf]
      %v1406 = vld [vmem:[%s13 + $0x78] sm:$0xff]
      %v1407 = vld [vmem:[%s13 + $0x80] sm:$0xf]
      %v1408 = vld [vmem:[%s13 + $0x84] sm:$0xff]
      %v1409 = vld [vmem:[%s13 + $0x8c] sm:$0xf]
      %v1410 = vld [vmem:[%s13 + $0x90] sm:$0xff]
      %v1411 = vld [vmem:[%s13 + $0x98] sm:$0xf]
      %v1412 = vld [vmem:[%s13 + $0x9c] sm:$0xff]
      %v1413 = vld [vmem:[%s13 + $0xa4] sm:$0xf]
      %v1414 = vld [vmem:[%s13 + $0xa8] sm:$0xff]
      %v1415 = vld [vmem:[%s13 + $0xb0] sm:$0xf]
      %v1416 = vld [vmem:[%s13 + $0xb4] sm:$0xff]
      %v1417 = vld [vmem:[%s13 + $0xbc] sm:$0xf]
      %v1418 = vpack.c.bf16 %v1385, %v1384
      %v1419 = vld [vmem:[%s15] sm:$0x7]
      %v1421 = vperm.slane %v1419, 0
      %v1422 = vperm.slane %v1419, 1
      %v1423 = vperm.slane %v1419, 2
      %v1459 = vunpack.c.l.b16 %v1386
      %v1460 = vunpack.c.h.b16 %v1386
      %v1461 = vunpack.c.l.b16 %v1387
      %v1462 = vunpack.c.l.b16 %v1388
      %v1463 = vunpack.c.h.b16 %v1388
      %v1464 = vunpack.c.l.b16 %v1389
      %v1465 = vunpack.c.l.b16 %v1390
      %v1466 = vunpack.c.h.b16 %v1390
      %v1467 = vunpack.c.l.b16 %v1391
      %v1468 = vunpack.c.l.b16 %v1392
      %v1469 = vunpack.c.h.b16 %v1392
      %v1470 = vunpack.c.l.b16 %v1393
      %v1471 = vunpack.c.l.b16 %v1394
      %v1472 = vunpack.c.h.b16 %v1394
      %v1473 = vunpack.c.l.b16 %v1395
      %v1474 = vunpack.c.l.b16 %v1396
      %v1475 = vunpack.c.h.b16 %v1396
      %v1476 = vunpack.c.l.b16 %v1397
      %v1477 = vunpack.c.l.b16 %v1398
      %v1478 = vunpack.c.h.b16 %v1398
      %v1479 = vunpack.c.l.b16 %v1399
      %v1480 = vunpack.c.l.b16 %v1400
      %v1481 = vunpack.c.h.b16 %v1400
      %v1482 = vunpack.c.l.b16 %v1401
      %v1483 = vunpack.c.l.b16 %v1402
      %v1484 = vunpack.c.h.b16 %v1402
      %v1485 = vunpack.c.l.b16 %v1403
      %v1486 = vunpack.c.l.b16 %v1404
      %v1487 = vunpack.c.h.b16 %v1404
      %v1488 = vunpack.c.l.b16 %v1405
      %v1489 = vunpack.c.l.b16 %v1406
      %v1490 = vunpack.c.h.b16 %v1406
      %v1491 = vunpack.c.l.b16 %v1407
      %v1492 = vunpack.c.l.b16 %v1408
      %v1493 = vunpack.c.h.b16 %v1408
      %v1494 = vunpack.c.l.b16 %v1409
      %v1495 = vunpack.c.l.b16 %v1410
      %v1496 = vunpack.c.h.b16 %v1410
      %v1497 = vunpack.c.l.b16 %v1411
      %v1498 = vunpack.c.l.b16 %v1412
      %v1499 = vunpack.c.h.b16 %v1412
      %v1500 = vunpack.c.l.b16 %v1413
      %v1501 = vunpack.c.l.b16 %v1414
      %v1502 = vunpack.c.h.b16 %v1414
      %v1503 = vunpack.c.l.b16 %v1415
      %v1504 = vunpack.c.l.b16 %v1416
      %v1505 = vunpack.c.h.b16 %v1416
      %v1506 = vunpack.c.l.b16 %v1417
      %v1507 = vpack.c.b16 %v1462, %v1459
      %v1508 = vpack.c.b16 %v1463, %v1460
      %v1509 = vpack.c.b16 %v1464, %v1461
      %v1510 = vpack.c.b16 %v1468, %v1465
      %v1511 = vpack.c.b16 %v1469, %v1466
      %v1512 = vpack.c.b16 %v1470, %v1467
      %v1513 = vpack.c.b16 %v1474, %v1471
      %v1514 = vpack.c.b16 %v1475, %v1472
      %v1515 = vpack.c.b16 %v1476, %v1473
      %v1516 = vpack.c.b16 %v1480, %v1477
      %v1517 = vpack.c.b16 %v1481, %v1478
      %v1518 = vpack.c.b16 %v1482, %v1479
      %v1519 = vpack.c.b16 %v1486, %v1483
      %v1520 = vpack.c.b16 %v1487, %v1484
      %v1521 = vpack.c.b16 %v1488, %v1485
      %v1522 = vpack.c.b16 %v1492, %v1489
      %v1523 = vpack.c.b16 %v1493, %v1490
      %v1524 = vpack.c.b16 %v1494, %v1491
      %v1525 = vpack.c.b16 %v1498, %v1495
      %v1526 = vpack.c.b16 %v1499, %v1496
      %v1527 = vpack.c.b16 %v1500, %v1497
      %v1528 = vpack.c.b16 %v1504, %v1501
      %v1529 = vpack.c.b16 %v1505, %v1502
      %v1530 = vpack.c.b16 %v1506, %v1503
      %1555 = vmatpush.bf16.msra.mxu0 %v1528
      %1556 = vmatpush.bf16.msra.mxu0 %v1525
      %1557 = vmatpush.bf16.msra.mxu0 %v1522
      %1558 = vmatpush.bf16.msra.mxu0 %v1519
      %1559 = vmatpush.bf16.msra.mxu0 %v1516
      %1560 = vmatpush.bf16.msra.mxu0 %v1513
      %1561 = vmatpush.bf16.msra.mxu0 %v1510
      %1562 = vmatpush.bf16.msra.mxu0 %v1507
      %1563 = vmatmul.bf16.gmra.mxu0 %v1418
      %v1564 = vpop.f32.mrf.mxu0
      %v1565 = vadd.f32 %v1421, %v1564
      %v1566 = vpop.f32.mrf.mxu0
      %v1567 = vadd.f32 %v1421, %v1566
      %1568 = vdwg.mxu0
      %1569 = vmatpush.bf16.msra.mxu0 %v1529
      %1570 = vmatpush.bf16.msra.mxu0 %v1526
      %1571 = vmatpush.bf16.msra.mxu0 %v1523
      %1572 = vmatpush.bf16.msra.mxu0 %v1520
      %1573 = vmatpush.bf16.msra.mxu0 %v1517
      %1574 = vmatpush.bf16.msra.mxu0 %v1514
      %1575 = vmatpush.bf16.msra.mxu0 %v1511
      %1576 = vmatpush.bf16.msra.mxu0 %v1508
      %1577 = vmatmul.bf16.gmra.mxu0 %v1418
      %v1578 = vpop.f32.mrf.mxu0
      %v1579 = vadd.f32 %v1422, %v1578
      %v1580 = vpop.f32.mrf.mxu0
      %v1581 = vadd.f32 %v1422, %v1580
      %1582 = vdwg.mxu0
      %1583 = vmatpush.bf16.msra.mxu0 %v1530
      %1584 = vmatpush.bf16.msra.mxu0 %v1527
      %1585 = vmatpush.bf16.msra.mxu0 %v1524
      %1586 = vmatpush.bf16.msra.mxu0 %v1521
      %1587 = vmatpush.bf16.msra.mxu0 %v1518
      %1588 = vmatpush.bf16.msra.mxu0 %v1515
      %1589 = vmatpush.bf16.msra.mxu0 %v1512
      %1590 = vmatpush.bf16.msra.mxu0 %v1509
      %1591 = vmatmul.bf16.gmra.mxu0 %v1418
      %v1592 = vpop.f32.mrf.mxu0
      %v1593 = vadd.f32 %v1423, %v1592
      %v1594 = vpop.f32.mrf.mxu0
      %v1595 = vadd.f32 %v1423, %v1594
      %1596 = vdwg.mxu0
      %v1597 = vld [vmem:[%s17] sm:$0xf]
      %v1598 = vld [vmem:[%s17 + $0x4] sm:$0xf]
      %v1599 = vld [vmem:[%s17 + $0x8] sm:$0xf]
      %v1600 = vld [vmem:[%s17 + $0xc] sm:$0xf]
      %v1601 = vld [vmem:[%s17 + $0x10] sm:$0xf]
      %v1602 = vld [vmem:[%s17 + $0x14] sm:$0xf]
      %v1603 = vld [vmem:[%s17 + $0x18] sm:$0xf]
      %v1604 = vld [vmem:[%s17 + $0x1c] sm:$0xf]
      %v1605 = vld [vmem:[%s17 + $0x20] sm:$0xf]
      %v1606 = vld [vmem:[%s17 + $0x24] sm:$0xf]
      %v1607 = vld [vmem:[%s17 + $0x28] sm:$0xf]
      %v1608 = vld [vmem:[%s17 + $0x2c] sm:$0xf]
      %v1609 = vld [vmem:[%s17 + $0x30] sm:$0xf]
      %v1610 = vld [vmem:[%s17 + $0x34] sm:$0xf]
      %v1611 = vld [vmem:[%s17 + $0x38] sm:$0xf]
      %v1612 = vld [vmem:[%s17 + $0x3c] sm:$0xf]
      %v1613 = vpack.c.bf16 %v1567, %v1565
      %v1614 = vpack.c.bf16 %v1581, %v1579
      %v1615 = vpack.c.bf16 %v1595, %v1593
      %vm1616 = vcmask 261120
      %v1618 = vsel %vm1616, %v1613, 0
      %v1621 = vsel %vm1616, %v1614, 0
      %1623 = vmatpush.bf16.xpose.msra.mxu0 0
      %1624 = vmatpush.bf16.xpose.msra.mxu0 0
      %1625 = vmatpush.bf16.xpose.msra.mxu0 0
      %1626 = vmatpush.bf16.xpose.msra.mxu0 0
      %1627 = vmatpush.bf16.xpose.msra.mxu0 0
      %1628 = vmatpush.bf16.xpose.msra.mxu0 0
      %1629 = vmatpush.bf16.xpose.msra.mxu0 0
      %1630 = vmatpush.bf16.xpose.msra.mxu0 %v1621
      %1631 = vmatmul.bf16.gmra.mxu0 %v1618
      %v1632 = vpop.f32.mrf.mxu0
      %v1633 = vadd.f32 0.0, %v1632
      %v1634 = vpop.f32.mrf.mxu0
      %v1635 = vadd.f32 0.0, %v1634
      %1636 = vdwg.mxu0
      %v1637 = vmul.f32 %v1633, 0.17677669
      %v1638 = vmul.f32 %v1635, 0.17677669
      %v1640 = vperm.slane %v1326, 0
      %v1642 = vadd.f32 %v1637, %v1640
      %v1643 = vadd.f32 %v1638, %v1640
      %vm1644 = vcmask 130048
      %v1645 = vsel %vm1644, %v1642, -inf
      %1646 = vmax.xlane.f32.xlu0 %v1645
      %v1647 = vpop.xlane.xlu0 %1646
      %v1648 = vsel %vm1644, %v1643, -inf
      %1649 = vmax.xlane.f32.xlu0 %v1648
      %v1650 = vpop.xlane.xlu0 %1649
      %v1651 = vsub.f32 %v1642, %v1647
      %v1652 = vsub.f32 %v1643, %v1650
      %v1653 = vmul.f32 %v1651, 1.442695
      %v1654 = vpow.pop %v1653
      %v1655 = vmul.f32 %v1652, 1.442695
      %v1656 = vpow.pop %v1655
      %v1657 = vsel %vm1644, %v1654, 0.0
      %1658 = vadd.xlane.f32.xlu0 %v1657
      %v1659 = vpop.xlane.xlu0 %1658
      %v1660 = vsel %vm1644, %v1656, 0.0
      %1661 = vadd.xlane.f32.xlu0 %v1660
      %v1662 = vpop.xlane.xlu0 %1661
      %v1663 = vrcp.pop %v1659
      %v1664 = vrcp.pop %v1662
      %v1665 = vmul.f32 %v1654, %v1663
      %v1666 = vmul.f32 %v1656, %v1664
      %v1667 = vpack.c.bf16 %v1666, %v1665
      %v1669 = vsel %vm1644, %v1667, 0
      %1671 = vmatpush.bf16.msra.mxu0 0
      %1672 = vmatpush.bf16.msra.mxu0 0
      %1673 = vmatpush.bf16.msra.mxu0 0
      %1674 = vmatpush.bf16.msra.mxu0 0
      %1675 = vmatpush.bf16.msra.mxu0 0
      %1676 = vmatpush.bf16.msra.mxu0 0
      %1677 = vmatpush.bf16.msra.mxu0 0
      %1678 = vmatpush.bf16.msra.mxu0 %v1615
      %1679 = vmatmul.bf16.gmra.mxu0 %v1669
      %v1680 = vpop.f32.mrf.mxu0
      %v1681 = vadd.f32 0.0, %v1680
      %v1682 = vpop.f32.mrf.mxu0
      %v1683 = vadd.f32 0.0, %v1682
      %1684 = vdwg.mxu0
      %v1685 = vpack.c.bf16 %v1683, %v1681
      %1687 = vrot.lane.b32.xlu0 %v1613, 96
      %v1688 = vpop.permute.xlu0 %1687
      %1690 = vrot.lane.b32.xlu0 %v1614, 96
      %v1691 = vpop.permute.xlu0 %1690
      %v1693 = vsel %vm1616, %v1688, 0
      %v1696 = vsel %vm1616, %v1691, 0
      %1698 = vmatpush.bf16.xpose.msra.mxu0 0
      %1699 = vmatpush.bf16.xpose.msra.mxu0 0
      %1700 = vmatpush.bf16.xpose.msra.mxu0 0
      %1701 = vmatpush.bf16.xpose.msra.mxu0 0
      %1702 = vmatpush.bf16.xpose.msra.mxu0 0
      %1703 = vmatpush.bf16.xpose.msra.mxu0 0
      %1704 = vmatpush.bf16.xpose.msra.mxu0 0
      %1705 = vmatpush.bf16.xpose.msra.mxu0 %v1696
      %1706 = vmatmul.bf16.gmra.mxu0 %v1693
      %v1707 = vpop.f32.mrf.mxu0
      %v1708 = vadd.f32 0.0, %v1707
      %v1709 = vpop.f32.mrf.mxu0
      %v1710 = vadd.f32 0.0, %v1709
      %1711 = vdwg.mxu0
      %v1712 = vmul.f32 %v1708, 0.17677669
      %v1713 = vmul.f32 %v1710, 0.17677669
      %v1714 = vadd.f32 %v1712, %v1640
      %v1715 = vadd.f32 %v1713, %v1640
      %v1716 = vsel %vm1644, %v1714, -inf
      %1717 = vmax.xlane.f32.xlu0 %v1716
      %v1718 = vpop.xlane.xlu0 %1717
      %v1719 = vsel %vm1644, %v1715, -inf
      %1720 = vmax.xlane.f32.xlu0 %v1719
      %v1721 = vpop.xlane.xlu0 %1720
      %v1722 = vsub.f32 %v1714, %v1718
      %v1723 = vsub.f32 %v1715, %v1721
      %v1724 = vmul.f32 %v1722, 1.442695
      %v1725 = vpow.pop %v1724
      %v1726 = vmul.f32 %v1723, 1.442695
      %v1727 = vpow.pop %v1726
      %v1728 = vsel %vm1644, %v1725, 0.0
      %1729 = vadd.xlane.f32.xlu0 %v1728
      %v1730 = vpop.xlane.xlu0 %1729
      %v1731 = vsel %vm1644, %v1727, 0.0
      %1732 = vadd.xlane.f32.xlu0 %v1731
      %v1733 = vpop.xlane.xlu0 %1732
      %v1734 = vrcp.pop %v1730
      %v1735 = vrcp.pop %v1733
      %v1736 = vmul.f32 %v1725, %v1734
      %v1737 = vmul.f32 %v1727, %v1735
      %v1738 = vpack.c.bf16 %v1737, %v1736
      %1740 = vrot.lane.b32.xlu0 %v1615, 96
      %v1741 = vpop.permute.xlu0 %1740
      %v1744 = vsel %vm1644, %v1738, 0
      %1746 = vmatpush.bf16.msra.mxu0 0
      %1747 = vmatpush.bf16.msra.mxu0 0
      %1748 = vmatpush.bf16.msra.mxu0 0
      %1749 = vmatpush.bf16.msra.mxu0 0
      %1750 = vmatpush.bf16.msra.mxu0 0
      %1751 = vmatpush.bf16.msra.mxu0 0
      %1752 = vmatpush.bf16.msra.mxu0 0
      %1753 = vmatpush.bf16.msra.mxu0 %v1741
      %1754 = vmatmul.bf16.gmra.mxu0 %v1744
      %v1755 = vpop.f32.mrf.mxu0
      %v1756 = vadd.f32 0.0, %v1755
      %v1757 = vpop.f32.mrf.mxu0
      %v1758 = vadd.f32 0.0, %v1757
      %1759 = vdwg.mxu0
      %v1760 = vpack.c.bf16 %v1758, %v1756
      %v1765 = vunpack.c.l.b16 %v1601
      %v1766 = vunpack.c.l.b16 %v1602
      %v1767 = vunpack.c.l.b16 %v1603
      %v1768 = vunpack.c.l.b16 %v1604
      %v1769 = vpack.c.b16 %v1766, %v1765
      %v1770 = vpack.c.b16 %v1768, %v1767
      %v1774 = vsel %vm1616, %v1760, 0
      %1776 = vmatpush.bf16.msra.mxu0 0
      %1777 = vmatpush.bf16.msra.mxu0 0
      %1778 = vmatpush.bf16.msra.mxu0 0
      %1779 = vmatpush.bf16.msra.mxu0 0
      %1780 = vmatpush.bf16.msra.mxu0 0
      %1781 = vmatpush.bf16.msra.mxu0 0
      %1782 = vmatpush.bf16.msra.mxu0 %v1770
      %1783 = vmatpush.bf16.msra.mxu0 %v1769
      %1784 = vmatmul.bf16.gmra.mxu0 %v1774
      %v1785 = vpop.f32.mrf.mxu0
      %v1786 = vadd.f32 0.0, %v1785
      %v1787 = vpop.f32.mrf.mxu0
      %v1788 = vadd.f32 0.0, %v1787
      %1789 = vdwg.mxu0
      %v1794 = vunpack.c.l.b16 %v1597
      %v1795 = vunpack.c.l.b16 %v1598
      %v1796 = vunpack.c.l.b16 %v1599
      %v1797 = vunpack.c.l.b16 %v1600
      %v1798 = vpack.c.b16 %v1795, %v1794
      %v1799 = vpack.c.b16 %v1797, %v1796
      %v1803 = vsel %vm1616, %v1685, 0
      %1805 = vmatpush.bf16.msra.mxu0 0
      %1806 = vmatpush.bf16.msra.mxu0 0
      %1807 = vmatpush.bf16.msra.mxu0 0
      %1808 = vmatpush.bf16.msra.mxu0 0
      %1809 = vmatpush.bf16.msra.mxu0 0
      %1810 = vmatpush.bf16.msra.mxu0 0
      %1811 = vmatpush.bf16.msra.mxu0 %v1799
      %1812 = vmatpush.bf16.msra.mxu0 %v1798
      %1813 = vmatmul.bf16.gmra.mxu0 %v1803
      %v1814 = vpop.f32.mrf.mxu0
      %v1815 = vadd.f32 %v1786, %v1814
      %v1816 = vpop.f32.mrf.mxu0
      %v1817 = vadd.f32 %v1788, %v1816
      %1818 = vdwg.mxu0
      %1819 = vrot.lane.b32.xlu0 %v1613, 64
      %v1820 = vpop.permute.xlu0 %1819
      %1821 = vrot.lane.b32.xlu0 %v1614, 64
      %v1822 = vpop.permute.xlu0 %1821
      %v1824 = vsel %vm1616, %v1820, 0
      %v1827 = vsel %vm1616, %v1822, 0
      %1829 = vmatpush.bf16.xpose.msra.mxu0 0
      %1830 = vmatpush.bf16.xpose.msra.mxu0 0
      %1831 = vmatpush.bf16.xpose.msra.mxu0 0
      %1832 = vmatpush.bf16.xpose.msra.mxu0 0
      %1833 = vmatpush.bf16.xpose.msra.mxu0 0
      %1834 = vmatpush.bf16.xpose.msra.mxu0 0
      %1835 = vmatpush.bf16.xpose.msra.mxu0 0
      %1836 = vmatpush.bf16.xpose.msra.mxu0 %v1827
      %1837 = vmatmul.bf16.gmra.mxu0 %v1824
      %v1838 = vpop.f32.mrf.mxu0
      %v1839 = vadd.f32 0.0, %v1838
      %v1840 = vpop.f32.mrf.mxu0
      %v1841 = vadd.f32 0.0, %v1840
      %1842 = vdwg.mxu0
      %v1843 = vmul.f32 %v1839, 0.17677669
      %v1844 = vmul.f32 %v1841, 0.17677669
      %v1845 = vadd.f32 %v1843, %v1640
      %v1846 = vadd.f32 %v1844, %v1640
      %v1847 = vsel %vm1644, %v1845, -inf
      %1848 = vmax.xlane.f32.xlu0 %v1847
      %v1849 = vpop.xlane.xlu0 %1848
      %v1850 = vsel %vm1644, %v1846, -inf
      %1851 = vmax.xlane.f32.xlu0 %v1850
      %v1852 = vpop.xlane.xlu0 %1851
      %v1853 = vsub.f32 %v1845, %v1849
      %v1854 = vsub.f32 %v1846, %v1852
      %v1855 = vmul.f32 %v1853, 1.442695
      %v1856 = vpow.pop %v1855
      %v1857 = vmul.f32 %v1854, 1.442695
      %v1858 = vpow.pop %v1857
      %v1859 = vsel %vm1644, %v1856, 0.0
      %1860 = vadd.xlane.f32.xlu0 %v1859
      %v1861 = vpop.xlane.xlu0 %1860
      %v1862 = vsel %vm1644, %v1858, 0.0
      %1863 = vadd.xlane.f32.xlu0 %v1862
      %v1864 = vpop.xlane.xlu0 %1863
      %v1865 = vrcp.pop %v1861
      %v1866 = vrcp.pop %v1864
      %v1867 = vmul.f32 %v1856, %v1865
      %v1868 = vmul.f32 %v1858, %v1866
      %v1869 = vpack.c.bf16 %v1868, %v1867
      %1870 = vrot.lane.b32.xlu0 %v1615, 64
      %v1871 = vpop.permute.xlu0 %1870
      %v1874 = vsel %vm1644, %v1869, 0
      %1876 = vmatpush.bf16.msra.mxu0 0
      %1877 = vmatpush.bf16.msra.mxu0 0
      %1878 = vmatpush.bf16.msra.mxu0 0
      %1879 = vmatpush.bf16.msra.mxu0 0
      %1880 = vmatpush.bf16.msra.mxu0 0
      %1881 = vmatpush.bf16.msra.mxu0 0
      %1882 = vmatpush.bf16.msra.mxu0 0
      %1883 = vmatpush.bf16.msra.mxu0 %v1871
      %1884 = vmatmul.bf16.gmra.mxu0 %v1874
      %v1885 = vpop.f32.mrf.mxu0
      %v1886 = vadd.f32 0.0, %v1885
      %v1887 = vpop.f32.mrf.mxu0
      %v1888 = vadd.f32 0.0, %v1887
      %1889 = vdwg.mxu0
      %v1890 = vpack.c.bf16 %v1888, %v1886
      %v1895 = vunpack.c.l.b16 %v1605
      %v1896 = vunpack.c.l.b16 %v1606
      %v1897 = vunpack.c.l.b16 %v1607
      %v1898 = vunpack.c.l.b16 %v1608
      %v1899 = vpack.c.b16 %v1896, %v1895
      %v1900 = vpack.c.b16 %v1898, %v1897
      %v1904 = vsel %vm1616, %v1890, 0
      %1906 = vmatpush.bf16.msra.mxu0 0
      %1907 = vmatpush.bf16.msra.mxu0 0
      %1908 = vmatpush.bf16.msra.mxu0 0
      %1909 = vmatpush.bf16.msra.mxu0 0
      %1910 = vmatpush.bf16.msra.mxu0 0
      %1911 = vmatpush.bf16.msra.mxu0 0
      %1912 = vmatpush.bf16.msra.mxu0 %v1900
      %1913 = vmatpush.bf16.msra.mxu0 %v1899
      %1914 = vmatmul.bf16.gmra.mxu0 %v1904
      %v1915 = vpop.f32.mrf.mxu0
      %v1916 = vadd.f32 0.0, %v1915
      %v1917 = vpop.f32.mrf.mxu0
      %v1918 = vadd.f32 0.0, %v1917
      %1919 = vdwg.mxu0
      %v1920 = vadd.f32 %v1815, %v1916
      %v1921 = vadd.f32 %v1817, %v1918
      %1922 = vrot.lane.b32.xlu0 %v1613, 32
      %v1923 = vpop.permute.xlu0 %1922
      %1924 = vrot.lane.b32.xlu0 %v1614, 32
      %v1925 = vpop.permute.xlu0 %1924
      %v1927 = vsel %vm1616, %v1923, 0
      %v1930 = vsel %vm1616, %v1925, 0
      %1932 = vmatpush.bf16.xpose.msra.mxu0 0
      %1933 = vmatpush.bf16.xpose.msra.mxu0 0
      %1934 = vmatpush.bf16.xpose.msra.mxu0 0
      %1935 = vmatpush.bf16.xpose.msra.mxu0 0
      %1936 = vmatpush.bf16.xpose.msra.mxu0 0
      %1937 = vmatpush.bf16.xpose.msra.mxu0 0
      %1938 = vmatpush.bf16.xpose.msra.mxu0 0
      %1939 = vmatpush.bf16.xpose.msra.mxu0 %v1930
      %1940 = vmatmul.bf16.gmra.mxu0 %v1927
      %v1941 = vpop.f32.mrf.mxu0
      %v1942 = vadd.f32 0.0, %v1941
      %v1943 = vpop.f32.mrf.mxu0
      %v1944 = vadd.f32 0.0, %v1943
      %1945 = vdwg.mxu0
      %v1946 = vmul.f32 %v1942, 0.17677669
      %v1947 = vmul.f32 %v1944, 0.17677669
      %v1948 = vadd.f32 %v1946, %v1640
      %v1949 = vadd.f32 %v1947, %v1640
      %v1950 = vsel %vm1644, %v1948, -inf
      %1951 = vmax.xlane.f32.xlu0 %v1950
      %v1952 = vpop.xlane.xlu0 %1951
      %v1953 = vsel %vm1644, %v1949, -inf
      %1954 = vmax.xlane.f32.xlu0 %v1953
      %v1955 = vpop.xlane.xlu0 %1954
      %v1956 = vsub.f32 %v1948, %v1952
      %v1957 = vsub.f32 %v1949, %v1955
      %v1958 = vmul.f32 %v1956, 1.442695
      %v1959 = vpow.pop %v1958
      %v1960 = vmul.f32 %v1957, 1.442695
      %v1961 = vpow.pop %v1960
      %v1962 = vsel %vm1644, %v1959, 0.0
      %1963 = vadd.xlane.f32.xlu0 %v1962
      %v1964 = vpop.xlane.xlu0 %1963
      %v1965 = vsel %vm1644, %v1961, 0.0
      %1966 = vadd.xlane.f32.xlu0 %v1965
      %v1967 = vpop.xlane.xlu0 %1966
      %v1968 = vrcp.pop %v1964
      %v1969 = vrcp.pop %v1967
      %v1970 = vmul.f32 %v1959, %v1968
      %v1971 = vmul.f32 %v1961, %v1969
      %v1972 = vpack.c.bf16 %v1971, %v1970
      %1973 = vrot.lane.b32.xlu0 %v1615, 32
      %v1974 = vpop.permute.xlu0 %1973
      %v1977 = vsel %vm1644, %v1972, 0
      %1979 = vmatpush.bf16.msra.mxu0 0
      %1980 = vmatpush.bf16.msra.mxu0 0
      %1981 = vmatpush.bf16.msra.mxu0 0
      %1982 = vmatpush.bf16.msra.mxu0 0
      %1983 = vmatpush.bf16.msra.mxu0 0
      %1984 = vmatpush.bf16.msra.mxu0 0
      %1985 = vmatpush.bf16.msra.mxu0 0
      %1986 = vmatpush.bf16.msra.mxu0 %v1974
      %1987 = vmatmul.bf16.gmra.mxu0 %v1977
      %v1988 = vpop.f32.mrf.mxu0
      %v1989 = vadd.f32 0.0, %v1988
      %v1990 = vpop.f32.mrf.mxu0
      %v1991 = vadd.f32 0.0, %v1990
      %1992 = vdwg.mxu0
      %v1993 = vpack.c.bf16 %v1991, %v1989
      %v1998 = vunpack.c.l.b16 %v1609
      %v1999 = vunpack.c.l.b16 %v1610
      %v2000 = vunpack.c.l.b16 %v1611
      %v2001 = vunpack.c.l.b16 %v1612
      %v2002 = vpack.c.b16 %v1999, %v1998
      %v2003 = vpack.c.b16 %v2001, %v2000
      %v2007 = vsel %vm1616, %v1993, 0
      %2009 = vmatpush.bf16.msra.mxu0 0
      %2010 = vmatpush.bf16.msra.mxu0 0
      %2011 = vmatpush.bf16.msra.mxu0 0
      %2012 = vmatpush.bf16.msra.mxu0 0
      %2013 = vmatpush.bf16.msra.mxu0 0
      %2014 = vmatpush.bf16.msra.mxu0 0
      %2015 = vmatpush.bf16.msra.mxu0 %v2003
      %2016 = vmatpush.bf16.msra.mxu0 %v2002
      %2017 = vmatmul.bf16.gmra.mxu0 %v2007
      %v2018 = vpop.f32.mrf.mxu0
      %v2019 = vadd.f32 0.0, %v2018
      %v2020 = vpop.f32.mrf.mxu0
      %v2021 = vadd.f32 0.0, %v2020
      %2022 = vdwg.mxu0
      %v2023 = vadd.f32 %v1920, %v2019
      %v2024 = vadd.f32 %v1921, %v2021
      %v2025 = vld [vmem:[%s19] sm:$0x1]
      %v2027 = vperm.slane %v2025, 0
      %v2029 = vadd.f32 %v2023, %v2027
      %v2030 = vadd.f32 %v2024, %v2027
      %v2031 = vadd.f32 %v1384, %v2029
      %v2032 = vadd.f32 %v1385, %v2030
      %v2033 = vld [vmem:[%s21] sm:$0x1]
      %v2034 = vld [vmem:[%s23] sm:$0x1]
      %2035 = vadd.xlane.f32.xlu0 %v2031
      %v2036 = vpop.xlane.xlu0 %2035
      %2037 = vadd.xlane.f32.xlu0 %v2032
      %v2038 = vpop.xlane.xlu0 %2037
      %v2039 = vmul.f32 %v2036, %v1339
      %v2040 = vmul.f32 %v2038, %v1339
      %v2041 = vsub.f32 %v2031, %v2039
      %v2042 = vsub.f32 %v2032, %v2040
      %v2043 = vmul.f32 %v2041, %v2041
      %v2044 = vmul.f32 %v2042, %v2042
      %2045 = vadd.xlane.f32.xlu0 %v2043
      %v2046 = vpop.xlane.xlu0 %2045
      %2047 = vadd.xlane.f32.xlu0 %v2044
      %v2048 = vpop.xlane.xlu0 %2047
      %v2049 = vmul.f32 %v2046, %v1339
      %v2050 = vmul.f32 %v2048, %v1339
      %v2051 = vadd.f32 %v2049, 1e-05
      %v2052 = vadd.f32 %v2050, 1e-05
      %v2053 = vrsqrt.pop %v2051
      %v2054 = vmul.f32 %v2053, %v2051
      %v2055 = vmul.f32 %v2054, %v2053
      %v2056 = vmul.f32 0.5, %v2055
      %v2057 = vsub.f32 1.5, %v2056
      %v2058 = vmul.f32 %v2053, %v2057
      %vm2059 = vweird.f32 %v2051
      %vm2060 = vweird.f32 %v2053
      %vm2061 = vmor %vm2059, %vm2060
      %v2062 = vsel %vm2061, %v2053, %v2058
      %v2063 = vrsqrt.pop %v2052
      %v2064 = vmul.f32 %v2063, %v2052
      %v2065 = vmul.f32 %v2064, %v2063
      %v2066 = vmul.f32 0.5, %v2065
      %v2067 = vsub.f32 1.5, %v2066
      %v2068 = vmul.f32 %v2063, %v2067
      %vm2069 = vweird.f32 %v2052
      %vm2070 = vweird.f32 %v2063
      %vm2071 = vmor %vm2069, %vm2070
      %v2072 = vsel %vm2071, %v2063, %v2068
      %v2073 = vmul.f32 %v2041, %v2062
      %v2074 = vmul.f32 %v2042, %v2072
      %v2076 = vperm.slane %v2033, 0
      %v2078 = vmul.f32 %v2073, %v2076
      %v2079 = vmul.f32 %v2074, %v2076
      %v2081 = vperm.slane %v2034, 0
      %v2083 = vadd.f32 %v2078, %v2081
      %v2084 = vadd.f32 %v2079, %v2081
      %v2085 = vld [vmem:[%s25] sm:$0xff]
      %v2086 = vld [vmem:[%s25 + $0x8] sm:$0xff]
      %v2087 = vld [vmem:[%s25 + $0x10] sm:$0xff]
      %v2088 = vld [vmem:[%s25 + $0x18] sm:$0xff]
      %v2089 = vld [vmem:[%s25 + $0x20] sm:$0xff]
      %v2090 = vld [vmem:[%s25 + $0x28] sm:$0xff]
      %v2091 = vld [vmem:[%s25 + $0x30] sm:$0xff]
      %v2092 = vld [vmem:[%s25 + $0x38] sm:$0xff]
      %v2093 = vld [vmem:[%s25 + $0x40] sm:$0xff]
      %v2094 = vld [vmem:[%s25 + $0x48] sm:$0xff]
      %v2095 = vld [vmem:[%s25 + $0x50] sm:$0xff]
      %v2096 = vld [vmem:[%s25 + $0x58] sm:$0xff]
      %v2097 = vld [vmem:[%s25 + $0x60] sm:$0xff]
      %v2098 = vld [vmem:[%s25 + $0x68] sm:$0xff]
      %v2099 = vld [vmem:[%s25 + $0x70] sm:$0xff]
      %v2100 = vld [vmem:[%s25 + $0x78] sm:$0xff]
      %v2101 = vpack.c.bf16 %v2084, %v2083
      %v2102 = vld [vmem:[%s27] sm:$0x3]
      %v2104 = vperm.slane %v2102, 0
      %v2105 = vperm.slane %v2102, 1
      %v2124 = vunpack.c.l.b16 %v2085
      %v2125 = vunpack.c.h.b16 %v2085
      %v2126 = vunpack.c.l.b16 %v2086
      %v2127 = vunpack.c.h.b16 %v2086
      %v2128 = vunpack.c.l.b16 %v2087
      %v2129 = vunpack.c.h.b16 %v2087
      %v2130 = vunpack.c.l.b16 %v2088
      %v2131 = vunpack.c.h.b16 %v2088
      %v2132 = vunpack.c.l.b16 %v2089
      %v2133 = vunpack.c.h.b16 %v2089
      %v2134 = vunpack.c.l.b16 %v2090
      %v2135 = vunpack.c.h.b16 %v2090
      %v2136 = vunpack.c.l.b16 %v2091
      %v2137 = vunpack.c.h.b16 %v2091
      %v2138 = vunpack.c.l.b16 %v2092
      %v2139 = vunpack.c.h.b16 %v2092
      %v2140 = vunpack.c.l.b16 %v2093
      %v2141 = vunpack.c.h.b16 %v2093
      %v2142 = vunpack.c.l.b16 %v2094
      %v2143 = vunpack.c.h.b16 %v2094
      %v2144 = vunpack.c.l.b16 %v2095
      %v2145 = vunpack.c.h.b16 %v2095
      %v2146 = vunpack.c.l.b16 %v2096
      %v2147 = vunpack.c.h.b16 %v2096
      %v2148 = vunpack.c.l.b16 %v2097
      %v2149 = vunpack.c.h.b16 %v2097
      %v2150 = vunpack.c.l.b16 %v2098
      %v2151 = vunpack.c.h.b16 %v2098
      %v2152 = vunpack.c.l.b16 %v2099
      %v2153 = vunpack.c.h.b16 %v2099
      %v2154 = vunpack.c.l.b16 %v2100
      %v2155 = vunpack.c.h.b16 %v2100
      %v2156 = vpack.c.b16 %v2126, %v2124
      %v2157 = vpack.c.b16 %v2127, %v2125
      %v2158 = vpack.c.b16 %v2130, %v2128
      %v2159 = vpack.c.b16 %v2131, %v2129
      %v2160 = vpack.c.b16 %v2134, %v2132
      %v2161 = vpack.c.b16 %v2135, %v2133
      %v2162 = vpack.c.b16 %v2138, %v2136
      %v2163 = vpack.c.b16 %v2139, %v2137
      %v2164 = vpack.c.b16 %v2142, %v2140
      %v2165 = vpack.c.b16 %v2143, %v2141
      %v2166 = vpack.c.b16 %v2146, %v2144
      %v2167 = vpack.c.b16 %v2147, %v2145
      %v2168 = vpack.c.b16 %v2150, %v2148
      %v2169 = vpack.c.b16 %v2151, %v2149
      %v2170 = vpack.c.b16 %v2154, %v2152
      %v2171 = vpack.c.b16 %v2155, %v2153
      %2188 = vmatpush.bf16.msra.mxu0 %v2170
      %2189 = vmatpush.bf16.msra.mxu0 %v2168
      %2190 = vmatpush.bf16.msra.mxu0 %v2166
      %2191 = vmatpush.bf16.msra.mxu0 %v2164
      %2192 = vmatpush.bf16.msra.mxu0 %v2162
      %2193 = vmatpush.bf16.msra.mxu0 %v2160
      %2194 = vmatpush.bf16.msra.mxu0 %v2158
      %2195 = vmatpush.bf16.msra.mxu0 %v2156
      %2196 = vmatmul.bf16.gmra.mxu0 %v2101
      %v2197 = vpop.f32.mrf.mxu0
      %v2198 = vadd.f32 %v2104, %v2197
      %v2199 = vpop.f32.mrf.mxu0
      %v2200 = vadd.f32 %v2104, %v2199
      %2201 = vdwg.mxu0
      %2202 = vmatpush.bf16.msra.mxu0 %v2171
      %2203 = vmatpush.bf16.msra.mxu0 %v2169
      %2204 = vmatpush.bf16.msra.mxu0 %v2167
      %2205 = vmatpush.bf16.msra.mxu0 %v2165
      %2206 = vmatpush.bf16.msra.mxu0 %v2163
      %2207 = vmatpush.bf16.msra.mxu0 %v2161
      %2208 = vmatpush.bf16.msra.mxu0 %v2159
      %2209 = vmatpush.bf16.msra.mxu0 %v2157
      %2210 = vmatmul.bf16.gmra.mxu0 %v2101
      %v2211 = vpop.f32.mrf.mxu0
      %v2212 = vadd.f32 %v2105, %v2211
      %v2213 = vpop.f32.mrf.mxu0
      %v2214 = vadd.f32 %v2105, %v2213
      %2215 = vdwg.mxu0
      %v2216 = vmul.f32 %v2198, %v2198
      %v2217 = vmul.f32 %v2212, %v2212
      %v2218 = vmul.f32 %v2200, %v2200
      %v2219 = vmul.f32 %v2214, %v2214
      %v2220 = vmul.f32 %v2198, %v2216
      %v2221 = vmul.f32 %v2212, %v2217
      %v2222 = vmul.f32 %v2200, %v2218
      %v2223 = vmul.f32 %v2214, %v2219
      %v2224 = vmul.f32 %v2220, 0.044715
      %v2225 = vmul.f32 %v2221, 0.044715
      %v2226 = vmul.f32 %v2222, 0.044715
      %v2227 = vmul.f32 %v2223, 0.044715
      %v2228 = vadd.f32 %v2198, %v2224
      %v2229 = vadd.f32 %v2212, %v2225
      %v2230 = vadd.f32 %v2200, %v2226
      %v2231 = vadd.f32 %v2214, %v2227
      %v2232 = vmul.f32 %v2228, 0.7978846
      %v2233 = vmul.f32 %v2229, 0.7978846
      %v2234 = vmul.f32 %v2230, 0.7978846
      %v2235 = vmul.f32 %v2231, 0.7978846
      %v2236 = vtanh.pop %v2232
      %v2237 = vtanh.pop %v2233
      %v2238 = vtanh.pop %v2234
      %v2239 = vtanh.pop %v2235
      %v2240 = vadd.f32 %v2236, 1.0
      %v2241 = vadd.f32 %v2237, 1.0
      %v2242 = vadd.f32 %v2238, 1.0
      %v2243 = vadd.f32 %v2239, 1.0
      %v2244 = vmul.f32 %v2240, 0.5
      %v2245 = vmul.f32 %v2241, 0.5
      %v2246 = vmul.f32 %v2242, 0.5
      %v2247 = vmul.f32 %v2243, 0.5
      %v2248 = vmul.f32 %v2198, %v2244
      %v2249 = vmul.f32 %v2212, %v2245
      %v2250 = vmul.f32 %v2200, %v2246
      %v2251 = vmul.f32 %v2214, %v2247
      %v2252 = vld [vmem:[%s29] sm:$0xf]
      %v2253 = vld [vmem:[%s29 + $0x4] sm:$0xf]
      %v2254 = vld [vmem:[%s29 + $0x8] sm:$0xf]
      %v2255 = vld [vmem:[%s29 + $0xc] sm:$0xf]
      %v2256 = vld [vmem:[%s29 + $0x10] sm:$0xf]
      %v2257 = vld [vmem:[%s29 + $0x14] sm:$0xf]
      %v2258 = vld [vmem:[%s29 + $0x18] sm:$0xf]
      %v2259 = vld [vmem:[%s29 + $0x1c] sm:$0xf]
      %v2260 = vld [vmem:[%s29 + $0x20] sm:$0xf]
      %v2261 = vld [vmem:[%s29 + $0x24] sm:$0xf]
      %v2262 = vld [vmem:[%s29 + $0x28] sm:$0xf]
      %v2263 = vld [vmem:[%s29 + $0x2c] sm:$0xf]
      %v2264 = vld [vmem:[%s29 + $0x30] sm:$0xf]
      %v2265 = vld [vmem:[%s29 + $0x34] sm:$0xf]
      %v2266 = vld [vmem:[%s29 + $0x38] sm:$0xf]
      %v2267 = vld [vmem:[%s29 + $0x3c] sm:$0xf]
      %v2268 = vld [vmem:[%s29 + $0x40] sm:$0xf]
      %v2269 = vld [vmem:[%s29 + $0x44] sm:$0xf]
      %v2270 = vld [vmem:[%s29 + $0x48] sm:$0xf]
      %v2271 = vld [vmem:[%s29 + $0x4c] sm:$0xf]
      %v2272 = vld [vmem:[%s29 + $0x50] sm:$0xf]
      %v2273 = vld [vmem:[%s29 + $0x54] sm:$0xf]
      %v2274 = vld [vmem:[%s29 + $0x58] sm:$0xf]
      %v2275 = vld [vmem:[%s29 + $0x5c] sm:$0xf]
      %v2276 = vld [vmem:[%s29 + $0x60] sm:$0xf]
      %v2277 = vld [vmem:[%s29 + $0x64] sm:$0xf]
      %v2278 = vld [vmem:[%s29 + $0x68] sm:$0xf]
      %v2279 = vld [vmem:[%s29 + $0x6c] sm:$0xf]
      %v2280 = vld [vmem:[%s29 + $0x70] sm:$0xf]
      %v2281 = vld [vmem:[%s29 + $0x74] sm:$0xf]
      %v2282 = vld [vmem:[%s29 + $0x78] sm:$0xf]
      %v2283 = vld [vmem:[%s29 + $0x7c] sm:$0xf]
      %v2284 = vpack.c.bf16 %v2250, %v2248
      %v2285 = vpack.c.bf16 %v2251, %v2249
      %v2286 = vld [vmem:[%s31] sm:$0x1]
      %v2288 = vperm.slane %v2286, 0
      %v2322 = vunpack.c.l.b16 %v2252
      %v2323 = vunpack.c.l.b16 %v2253
      %v2324 = vunpack.c.l.b16 %v2254
      %v2325 = vunpack.c.l.b16 %v2255
      %v2326 = vunpack.c.l.b16 %v2256
      %v2327 = vunpack.c.l.b16 %v2257
      %v2328 = vunpack.c.l.b16 %v2258
      %v2329 = vunpack.c.l.b16 %v2259
      %v2330 = vunpack.c.l.b16 %v2260
      %v2331 = vunpack.c.l.b16 %v2261
      %v2332 = vunpack.c.l.b16 %v2262
      %v2333 = vunpack.c.l.b16 %v2263
      %v2334 = vunpack.c.l.b16 %v2264
      %v2335 = vunpack.c.l.b16 %v2265
      %v2336 = vunpack.c.l.b16 %v2266
      %v2337 = vunpack.c.l.b16 %v2267
      %v2338 = vunpack.c.l.b16 %v2268
      %v2339 = vunpack.c.l.b16 %v2269
      %v2340 = vunpack.c.l.b16 %v2270
      %v2341 = vunpack.c.l.b16 %v2271
      %v2342 = vunpack.c.l.b16 %v2272
      %v2343 = vunpack.c.l.b16 %v2273
      %v2344 = vunpack.c.l.b16 %v2274
      %v2345 = vunpack.c.l.b16 %v2275
      %v2346 = vunpack.c.l.b16 %v2276
      %v2347 = vunpack.c.l.b16 %v2277
      %v2348 = vunpack.c.l.b16 %v2278
      %v2349 = vunpack.c.l.b16 %v2279
      %v2350 = vunpack.c.l.b16 %v2280
      %v2351 = vunpack.c.l.b16 %v2281
      %v2352 = vunpack.c.l.b16 %v2282
      %v2353 = vunpack.c.l.b16 %v2283
      %v2354 = vpack.c.b16 %v2323, %v2322
      %v2355 = vpack.c.b16 %v2325, %v2324
      %v2356 = vpack.c.b16 %v2327, %v2326
      %v2357 = vpack.c.b16 %v2329, %v2328
      %v2358 = vpack.c.b16 %v2331, %v2330
      %v2359 = vpack.c.b16 %v2333, %v2332
      %v2360 = vpack.c.b16 %v2335, %v2334
      %v2361 = vpack.c.b16 %v2337, %v2336
      %v2362 = vpack.c.b16 %v2339, %v2338
      %v2363 = vpack.c.b16 %v2341, %v2340
      %v2364 = vpack.c.b16 %v2343, %v2342
      %v2365 = vpack.c.b16 %v2345, %v2344
      %v2366 = vpack.c.b16 %v2347, %v2346
      %v2367 = vpack.c.b16 %v2349, %v2348
      %v2368 = vpack.c.b16 %v2351, %v2350
      %v2369 = vpack.c.b16 %v2353, %v2352
      %2386 = vmatpush.bf16.msra.mxu0 %v2361
      %2387 = vmatpush.bf16.msra.mxu0 %v2360
      %2388 = vmatpush.bf16.msra.mxu0 %v2359
      %2389 = vmatpush.bf16.msra.mxu0 %v2358
      %2390 = vmatpush.bf16.msra.mxu0 %v2357
      %2391 = vmatpush.bf16.msra.mxu0 %v2356
      %2392 = vmatpush.bf16.msra.mxu0 %v2355
      %2393 = vmatpush.bf16.msra.mxu0 %v2354
      %2394 = vmatmul.bf16.gmra.mxu0 %v2284
      %v2395 = vpop.f32.mrf.mxu0
      %v2396 = vadd.f32 %v2288, %v2395
      %v2397 = vpop.f32.mrf.mxu0
      %v2398 = vadd.f32 %v2288, %v2397
      %2399 = vdwg.mxu0
      %2400 = vmatpush.bf16.msra.mxu0 %v2369
      %2401 = vmatpush.bf16.msra.mxu0 %v2368
      %2402 = vmatpush.bf16.msra.mxu0 %v2367
      %2403 = vmatpush.bf16.msra.mxu0 %v2366
      %2404 = vmatpush.bf16.msra.mxu0 %v2365
      %2405 = vmatpush.bf16.msra.mxu0 %v2364
      %2406 = vmatpush.bf16.msra.mxu0 %v2363
      %2407 = vmatpush.bf16.msra.mxu0 %v2362
      %2408 = vmatmul.bf16.gmra.mxu0 %v2285
      %v2409 = vpop.f32.mrf.mxu0
      %v2410 = vadd.f32 %v2396, %v2409
      %v2411 = vpop.f32.mrf.mxu0
      %v2412 = vadd.f32 %v2398, %v2411
      %2413 = vdwg.mxu0
      %v2414 = vadd.f32 %v2083, %v2410
      %v2415 = vadd.f32 %v2084, %v2412
      %v2416 = vld [vmem:[%s33] sm:$0x1]
      %v2417 = vld [vmem:[%s35] sm:$0x1]
      %2418 = vadd.xlane.f32.xlu0 %v2414
      %v2419 = vpop.xlane.xlu0 %2418
      %2420 = vadd.xlane.f32.xlu0 %v2415
      %v2421 = vpop.xlane.xlu0 %2420
      %v2422 = vmul.f32 %v2419, %v1339
      %v2423 = vmul.f32 %v2421, %v1339
      %v2424 = vsub.f32 %v2414, %v2422
      %v2425 = vsub.f32 %v2415, %v2423
      %v2426 = vmul.f32 %v2424, %v2424
      %v2427 = vmul.f32 %v2425, %v2425
      %2428 = vadd.xlane.f32.xlu0 %v2426
      %v2429 = vpop.xlane.xlu0 %2428
      %2430 = vadd.xlane.f32.xlu0 %v2427
      %v2431 = vpop.xlane.xlu0 %2430
      %v2432 = vmul.f32 %v2429, %v1339
      %v2433 = vmul.f32 %v2431, %v1339
      %v2434 = vadd.f32 %v2432, 1e-05
      %v2435 = vadd.f32 %v2433, 1e-05
      %v2436 = vrsqrt.pop %v2434
      %v2437 = vmul.f32 %v2436, %v2434
      %v2438 = vmul.f32 %v2437, %v2436
      %v2439 = vmul.f32 0.5, %v2438
      %v2440 = vsub.f32 1.5, %v2439
      %v2441 = vmul.f32 %v2436, %v2440
      %vm2442 = vweird.f32 %v2434
      %vm2443 = vweird.f32 %v2436
      %vm2444 = vmor %vm2442, %vm2443
      %v2445 = vsel %vm2444, %v2436, %v2441
      %v2446 = vrsqrt.pop %v2435
      %v2447 = vmul.f32 %v2446, %v2435
      %v2448 = vmul.f32 %v2447, %v2446
      %v2449 = vmul.f32 0.5, %v2448
      %v2450 = vsub.f32 1.5, %v2449
      %v2451 = vmul.f32 %v2446, %v2450
      %vm2452 = vweird.f32 %v2435
      %vm2453 = vweird.f32 %v2446
      %vm2454 = vmor %vm2452, %vm2453
      %v2455 = vsel %vm2454, %v2446, %v2451
      %v2456 = vmul.f32 %v2424, %v2445
      %v2457 = vmul.f32 %v2425, %v2455
      %v2459 = vperm.slane %v2416, 0
      %v2461 = vmul.f32 %v2456, %v2459
      %v2462 = vmul.f32 %v2457, %v2459
      %v2464 = vperm.slane %v2417, 0
      %v2466 = vadd.f32 %v2461, %v2464
      %v2467 = vadd.f32 %v2462, %v2464
      %v2468 = vld [vmem:[%s1310] sm:$0xff]
      %v2469 = vld [vmem:[%s1310 + $0x8] sm:$0xff]
      %v2470 = vld [vmem:[%s37] sm:$0x1]
      %v2471 = vld [vmem:[%s39] sm:$0x1]
      %2472 = vadd.xlane.f32.xlu0 %v2468
      %v2473 = vpop.xlane.xlu0 %2472
      %2474 = vadd.xlane.f32.xlu0 %v2469
      %v2475 = vpop.xlane.xlu0 %2474
      %v2476 = vmul.f32 %v2473, %v1339
      %v2477 = vmul.f32 %v2475, %v1339
      %v2478 = vsub.f32 %v2468, %v2476
      %v2479 = vsub.f32 %v2469, %v2477
      %v2480 = vmul.f32 %v2478, %v2478
      %v2481 = vmul.f32 %v2479, %v2479
      %2482 = vadd.xlane.f32.xlu0 %v2480
      %v2483 = vpop.xlane.xlu0 %2482
      %2484 = vadd.xlane.f32.xlu0 %v2481
      %v2485 = vpop.xlane.xlu0 %2484
      %v2486 = vmul.f32 %v2483, %v1339
      %v2487 = vmul.f32 %v2485, %v1339
      %v2488 = vadd.f32 %v2486, 1e-05
      %v2489 = vadd.f32 %v2487, 1e-05
      %v2490 = vrsqrt.pop %v2488
      %v2491 = vmul.f32 %v2490, %v2488
      %v2492 = vmul.f32 %v2491, %v2490
      %v2493 = vmul.f32 0.5, %v2492
      %v2494 = vsub.f32 1.5, %v2493
      %v2495 = vmul.f32 %v2490, %v2494
      %vm2496 = vweird.f32 %v2488
      %vm2497 = vweird.f32 %v2490
      %vm2498 = vmor %vm2496, %vm2497
      %v2499 = vsel %vm2498, %v2490, %v2495
      %v2500 = vrsqrt.pop %v2489
      %v2501 = vmul.f32 %v2500, %v2489
      %v2502 = vmul.f32 %v2501, %v2500
      %v2503 = vmul.f32 0.5, %v2502
      %v2504 = vsub.f32 1.5, %v2503
      %v2505 = vmul.f32 %v2500, %v2504
      %vm2506 = vweird.f32 %v2489
      %vm2507 = vweird.f32 %v2500
      %vm2508 = vmor %vm2506, %vm2507
      %v2509 = vsel %vm2508, %v2500, %v2505
      %v2510 = vmul.f32 %v2478, %v2499
      %v2511 = vmul.f32 %v2479, %v2509
      %v2513 = vperm.slane %v2470, 0
      %v2515 = vmul.f32 %v2510, %v2513
      %v2516 = vmul.f32 %v2511, %v2513
      %v2518 = vperm.slane %v2471, 0
      %v2520 = vadd.f32 %v2515, %v2518
      %v2521 = vadd.f32 %v2516, %v2518
      %v2522 = vld [vmem:[%s41] sm:$0xff]
      %v2523 = vld [vmem:[%s41 + $0x8] sm:$0xf]
      %v2524 = vld [vmem:[%s41 + $0xc] sm:$0xff]
      %v2525 = vld [vmem:[%s41 + $0x14] sm:$0xf]
      %v2526 = vld [vmem:[%s41 + $0x18] sm:$0xff]
      %v2527 = vld [vmem:[%s41 + $0x20] sm:$0xf]
      %v2528 = vld [vmem:[%s41 + $0x24] sm:$0xff]
      %v2529 = vld [vmem:[%s41 + $0x2c] sm:$0xf]
      %v2530 = vld [vmem:[%s41 + $0x30] sm:$0xff]
      %v2531 = vld [vmem:[%s41 + $0x38] sm:$0xf]
      %v2532 = vld [vmem:[%s41 + $0x3c] sm:$0xff]
      %v2533 = vld [vmem:[%s41 + $0x44] sm:$0xf]
      %v2534 = vld [vmem:[%s41 + $0x48] sm:$0xff]
      %v2535 = vld [vmem:[%s41 + $0x50] sm:$0xf]
      %v2536 = vld [vmem:[%s41 + $0x54] sm:$0xff]
      %v2537 = vld [vmem:[%s41 + $0x5c] sm:$0xf]
      %v2538 = vld [vmem:[%s41 + $0x60] sm:$0xff]
      %v2539 = vld [vmem:[%s41 + $0x68] sm:$0xf]
      %v2540 = vld [vmem:[%s41 + $0x6c] sm:$0xff]
      %v2541 = vld [vmem:[%s41 + $0x74] sm:$0xf]
      %v2542 = vld [vmem:[%s41 + $0x78] sm:$0xff]
      %v2543 = vld [vmem:[%s41 + $0x80] sm:$0xf]
      %v2544 = vld [vmem:[%s41 + $0x84] sm:$0xff]
      %v2545 = vld [vmem:[%s41 + $0x8c] sm:$0xf]
      %v2546 = vld [vmem:[%s41 + $0x90] sm:$0xff]
      %v2547 = vld [vmem:[%s41 + $0x98] sm:$0xf]
      %v2548 = vld [vmem:[%s41 + $0x9c] sm:$0xff]
      %v2549 = vld [vmem:[%s41 + $0xa4] sm:$0xf]
      %v2550 = vld [vmem:[%s41 + $0xa8] sm:$0xff]
      %v2551 = vld [vmem:[%s41 + $0xb0] sm:$0xf]
      %v2552 = vld [vmem:[%s41 + $0xb4] sm:$0xff]
      %v2553 = vld [vmem:[%s41 + $0xbc] sm:$0xf]
      %v2554 = vpack.c.bf16 %v2521, %v2520
      %v2555 = vld [vmem:[%s43] sm:$0x7]
      %v2557 = vperm.slane %v2555, 0
      %v2558 = vperm.slane %v2555, 1
      %v2559 = vperm.slane %v2555, 2
      %v2595 = vunpack.c.l.b16 %v2522
      %v2596 = vunpack.c.h.b16 %v2522
      %v2597 = vunpack.c.l.b16 %v2523
      %v2598 = vunpack.c.l.b16 %v2524
      %v2599 = vunpack.c.h.b16 %v2524
      %v2600 = vunpack.c.l.b16 %v2525
      %v2601 = vunpack.c.l.b16 %v2526
      %v2602 = vunpack.c.h.b16 %v2526
      %v2603 = vunpack.c.l.b16 %v2527
      %v2604 = vunpack.c.l.b16 %v2528
      %v2605 = vunpack.c.h.b16 %v2528
      %v2606 = vunpack.c.l.b16 %v2529
      %v2607 = vunpack.c.l.b16 %v2530
      %v2608 = vunpack.c.h.b16 %v2530
      %v2609 = vunpack.c.l.b16 %v2531
      %v2610 = vunpack.c.l.b16 %v2532
      %v2611 = vunpack.c.h.b16 %v2532
      %v2612 = vunpack.c.l.b16 %v2533
      %v2613 = vunpack.c.l.b16 %v2534
      %v2614 = vunpack.c.h.b16 %v2534
      %v2615 = vunpack.c.l.b16 %v2535
      %v2616 = vunpack.c.l.b16 %v2536
      %v2617 = vunpack.c.h.b16 %v2536
      %v2618 = vunpack.c.l.b16 %v2537
      %v2619 = vunpack.c.l.b16 %v2538
      %v2620 = vunpack.c.h.b16 %v2538
      %v2621 = vunpack.c.l.b16 %v2539
      %v2622 = vunpack.c.l.b16 %v2540
      %v2623 = vunpack.c.h.b16 %v2540
      %v2624 = vunpack.c.l.b16 %v2541
      %v2625 = vunpack.c.l.b16 %v2542
      %v2626 = vunpack.c.h.b16 %v2542
      %v2627 = vunpack.c.l.b16 %v2543
      %v2628 = vunpack.c.l.b16 %v2544
      %v2629 = vunpack.c.h.b16 %v2544
      %v2630 = vunpack.c.l.b16 %v2545
      %v2631 = vunpack.c.l.b16 %v2546
      %v2632 = vunpack.c.h.b16 %v2546
      %v2633 = vunpack.c.l.b16 %v2547
      %v2634 = vunpack.c.l.b16 %v2548
      %v2635 = vunpack.c.h.b16 %v2548
      %v2636 = vunpack.c.l.b16 %v2549
      %v2637 = vunpack.c.l.b16 %v2550
      %v2638 = vunpack.c.h.b16 %v2550
      %v2639 = vunpack.c.l.b16 %v2551
      %v2640 = vunpack.c.l.b16 %v2552
      %v2641 = vunpack.c.h.b16 %v2552
      %v2642 = vunpack.c.l.b16 %v2553
      %v2643 = vpack.c.b16 %v2598, %v2595
      %v2644 = vpack.c.b16 %v2599, %v2596
      %v2645 = vpack.c.b16 %v2600, %v2597
      %v2646 = vpack.c.b16 %v2604, %v2601
      %v2647 = vpack.c.b16 %v2605, %v2602
      %v2648 = vpack.c.b16 %v2606, %v2603
      %v2649 = vpack.c.b16 %v2610, %v2607
      %v2650 = vpack.c.b16 %v2611, %v2608
      %v2651 = vpack.c.b16 %v2612, %v2609
      %v2652 = vpack.c.b16 %v2616, %v2613
      %v2653 = vpack.c.b16 %v2617, %v2614
      %v2654 = vpack.c.b16 %v2618, %v2615
      %v2655 = vpack.c.b16 %v2622, %v2619
      %v2656 = vpack.c.b16 %v2623, %v2620
      %v2657 = vpack.c.b16 %v2624, %v2621
      %v2658 = vpack.c.b16 %v2628, %v2625
      %v2659 = vpack.c.b16 %v2629, %v2626
      %v2660 = vpack.c.b16 %v2630, %v2627
      %v2661 = vpack.c.b16 %v2634, %v2631
      %v2662 = vpack.c.b16 %v2635, %v2632
      %v2663 = vpack.c.b16 %v2636, %v2633
      %v2664 = vpack.c.b16 %v2640, %v2637
      %v2665 = vpack.c.b16 %v2641, %v2638
      %v2666 = vpack.c.b16 %v2642, %v2639
      %2691 = vmatpush.bf16.msra.mxu0 %v2664
      %2692 = vmatpush.bf16.msra.mxu0 %v2661
      %2693 = vmatpush.bf16.msra.mxu0 %v2658
      %2694 = vmatpush.bf16.msra.mxu0 %v2655
      %2695 = vmatpush.bf16.msra.mxu0 %v2652
      %2696 = vmatpush.bf16.msra.mxu0 %v2649
      %2697 = vmatpush.bf16.msra.mxu0 %v2646
      %2698 = vmatpush.bf16.msra.mxu0 %v2643
      %2699 = vmatmul.bf16.gmra.mxu0 %v2554
      %v2700 = vpop.f32.mrf.mxu0
      %v2701 = vadd.f32 %v2557, %v2700
      %v2702 = vpop.f32.mrf.mxu0
      %v2703 = vadd.f32 %v2557, %v2702
      %2704 = vdwg.mxu0
      %2705 = vmatpush.bf16.msra.mxu0 %v2665
      %2706 = vmatpush.bf16.msra.mxu0 %v2662
      %2707 = vmatpush.bf16.msra.mxu0 %v2659
      %2708 = vmatpush.bf16.msra.mxu0 %v2656
      %2709 = vmatpush.bf16.msra.mxu0 %v2653
      %2710 = vmatpush.bf16.msra.mxu0 %v2650
      %2711 = vmatpush.bf16.msra.mxu0 %v2647
      %2712 = vmatpush.bf16.msra.mxu0 %v2644
      %2713 = vmatmul.bf16.gmra.mxu0 %v2554
      %v2714 = vpop.f32.mrf.mxu0
      %v2715 = vadd.f32 %v2558, %v2714
      %v2716 = vpop.f32.mrf.mxu0
      %v2717 = vadd.f32 %v2558, %v2716
      %2718 = vdwg.mxu0
      %2719 = vmatpush.bf16.msra.mxu0 %v2666
      %2720 = vmatpush.bf16.msra.mxu0 %v2663
      %2721 = vmatpush.bf16.msra.mxu0 %v2660
      %2722 = vmatpush.bf16.msra.mxu0 %v2657
      %2723 = vmatpush.bf16.msra.mxu0 %v2654
      %2724 = vmatpush.bf16.msra.mxu0 %v2651
      %2725 = vmatpush.bf16.msra.mxu0 %v2648
      %2726 = vmatpush.bf16.msra.mxu0 %v2645
      %2727 = vmatmul.bf16.gmra.mxu0 %v2554
      %v2728 = vpop.f32.mrf.mxu0
      %v2729 = vadd.f32 %v2559, %v2728
      %v2730 = vpop.f32.mrf.mxu0
      %v2731 = vadd.f32 %v2559, %v2730
      %2732 = vdwg.mxu0
      %v2733 = vlaneseq
      %v2734 = vshrl.u32 %v2733, 7
      %v2735 = vadd.s32 %v2734, 8
      %v2736 = vlaneseq
      %v2737 = vand.u32 %v2736, 127
      %vm2738 = vcmp.le.s32.totalorder %v2737, %v2734
      %vm2739 = vcmp.le.s32.totalorder %v2737, %v2735
      %v2740 = vsel %vm2738, 0.0, -1e+09
      %v2741 = vsel %vm2739, 0.0, -1e+09
      %v2742 = vld [vmem:[%s45] sm:$0xf]
      %v2743 = vld [vmem:[%s45 + $0x4] sm:$0xf]
      %v2744 = vld [vmem:[%s45 + $0x8] sm:$0xf]
      %v2745 = vld [vmem:[%s45 + $0xc] sm:$0xf]
      %v2746 = vld [vmem:[%s45 + $0x10] sm:$0xf]
      %v2747 = vld [vmem:[%s45 + $0x14] sm:$0xf]
      %v2748 = vld [vmem:[%s45 + $0x18] sm:$0xf]
      %v2749 = vld [vmem:[%s45 + $0x1c] sm:$0xf]
      %v2750 = vld [vmem:[%s45 + $0x20] sm:$0xf]
      %v2751 = vld [vmem:[%s45 + $0x24] sm:$0xf]
      %v2752 = vld [vmem:[%s45 + $0x28] sm:$0xf]
      %v2753 = vld [vmem:[%s45 + $0x2c] sm:$0xf]
      %v2754 = vld [vmem:[%s45 + $0x30] sm:$0xf]
      %v2755 = vld [vmem:[%s45 + $0x34] sm:$0xf]
      %v2756 = vld [vmem:[%s45 + $0x38] sm:$0xf]
      %v2757 = vld [vmem:[%s45 + $0x3c] sm:$0xf]
      %v2758 = vpack.c.bf16 %v2703, %v2701
      %v2759 = vpack.c.bf16 %v2717, %v2715
      %v2760 = vpack.c.bf16 %v2731, %v2729
      %v2762 = vsel %vm1616, %v2758, 0
      %v2765 = vsel %vm1616, %v2759, 0
      %2767 = vmatpush.bf16.xpose.msra.mxu0 0
      %2768 = vmatpush.bf16.xpose.msra.mxu0 0
      %2769 = vmatpush.bf16.xpose.msra.mxu0 0
      %2770 = vmatpush.bf16.xpose.msra.mxu0 0
      %2771 = vmatpush.bf16.xpose.msra.mxu0 0
      %2772 = vmatpush.bf16.xpose.msra.mxu0 0
      %2773 = vmatpush.bf16.xpose.msra.mxu0 0
      %2774 = vmatpush.bf16.xpose.msra.mxu0 %v2765
      %2775 = vmatmul.bf16.gmra.mxu0 %v2762
      %v2776 = vpop.f32.mrf.mxu0
      %v2777 = vadd.f32 0.0, %v2776
      %v2778 = vpop.f32.mrf.mxu0
      %v2779 = vadd.f32 0.0, %v2778
      %2780 = vdwg.mxu0
      %v2781 = vmul.f32 %v2777, 0.17677669
      %v2782 = vmul.f32 %v2779, 0.17677669
      %v2783 = vadd.f32 %v2781, %v2740
      %v2784 = vadd.f32 %v2782, %v2741
      %v2785 = vsel %vm1644, %v2783, -inf
      %2786 = vmax.xlane.f32.xlu0 %v2785
      %v2787 = vpop.xlane.xlu0 %2786
      %v2788 = vsel %vm1644, %v2784, -inf
      %2789 = vmax.xlane.f32.xlu0 %v2788
      %v2790 = vpop.xlane.xlu0 %2789
      %v2791 = vsub.f32 %v2783, %v2787
      %v2792 = vsub.f32 %v2784, %v2790
      %v2793 = vmul.f32 %v2791, 1.442695
      %v2794 = vpow.pop %v2793
      %v2795 = vmul.f32 %v2792, 1.442695
      %v2796 = vpow.pop %v2795
      %v2797 = vsel %vm1644, %v2794, 0.0
      %2798 = vadd.xlane.f32.xlu0 %v2797
      %v2799 = vpop.xlane.xlu0 %2798
      %v2800 = vsel %vm1644, %v2796, 0.0
      %2801 = vadd.xlane.f32.xlu0 %v2800
      %v2802 = vpop.xlane.xlu0 %2801
      %v2803 = vrcp.pop %v2799
      %v2804 = vrcp.pop %v2802
      %v2805 = vmul.f32 %v2794, %v2803
      %v2806 = vmul.f32 %v2796, %v2804
      %v2807 = vpack.c.bf16 %v2806, %v2805
      %v2809 = vsel %vm1644, %v2807, 0
      %2811 = vmatpush.bf16.msra.mxu0 0
      %2812 = vmatpush.bf16.msra.mxu0 0
      %2813 = vmatpush.bf16.msra.mxu0 0
      %2814 = vmatpush.bf16.msra.mxu0 0
      %2815 = vmatpush.bf16.msra.mxu0 0
      %2816 = vmatpush.bf16.msra.mxu0 0
      %2817 = vmatpush.bf16.msra.mxu0 0
      %2818 = vmatpush.bf16.msra.mxu0 %v2760
      %2819 = vmatmul.bf16.gmra.mxu0 %v2809
      %v2820 = vpop.f32.mrf.mxu0
      %v2821 = vadd.f32 0.0, %v2820
      %v2822 = vpop.f32.mrf.mxu0
      %v2823 = vadd.f32 0.0, %v2822
      %2824 = vdwg.mxu0
      %v2825 = vpack.c.bf16 %v2823, %v2821
      %2827 = vrot.lane.b32.xlu0 %v2758, 96
      %v2828 = vpop.permute.xlu0 %2827
      %2830 = vrot.lane.b32.xlu0 %v2759, 96
      %v2831 = vpop.permute.xlu0 %2830
      %v2833 = vsel %vm1616, %v2828, 0
      %v2836 = vsel %vm1616, %v2831, 0
      %2838 = vmatpush.bf16.xpose.msra.mxu0 0
      %2839 = vmatpush.bf16.xpose.msra.mxu0 0
      %2840 = vmatpush.bf16.xpose.msra.mxu0 0
      %2841 = vmatpush.bf16.xpose.msra.mxu0 0
      %2842 = vmatpush.bf16.xpose.msra.mxu0 0
      %2843 = vmatpush.bf16.xpose.msra.mxu0 0
      %2844 = vmatpush.bf16.xpose.msra.mxu0 0
      %2845 = vmatpush.bf16.xpose.msra.mxu0 %v2836
      %2846 = vmatmul.bf16.gmra.mxu0 %v2833
      %v2847 = vpop.f32.mrf.mxu0
      %v2848 = vadd.f32 0.0, %v2847
      %v2849 = vpop.f32.mrf.mxu0
      %v2850 = vadd.f32 0.0, %v2849
      %2851 = vdwg.mxu0
      %v2852 = vmul.f32 %v2848, 0.17677669
      %v2853 = vmul.f32 %v2850, 0.17677669
      %v2854 = vadd.f32 %v2852, %v2740
      %v2855 = vadd.f32 %v2853, %v2741
      %v2856 = vsel %vm1644, %v2854, -inf
      %2857 = vmax.xlane.f32.xlu0 %v2856
      %v2858 = vpop.xlane.xlu0 %2857
      %v2859 = vsel %vm1644, %v2855, -inf
      %2860 = vmax.xlane.f32.xlu0 %v2859
      %v2861 = vpop.xlane.xlu0 %2860
      %v2862 = vsub.f32 %v2854, %v2858
      %v2863 = vsub.f32 %v2855, %v2861
      %v2864 = vmul.f32 %v2862, 1.442695
      %v2865 = vpow.pop %v2864
      %v2866 = vmul.f32 %v2863, 1.442695
      %v2867 = vpow.pop %v2866
      %v2868 = vsel %vm1644, %v2865, 0.0
      %2869 = vadd.xlane.f32.xlu0 %v2868
      %v2870 = vpop.xlane.xlu0 %2869
      %v2871 = vsel %vm1644, %v2867, 0.0
      %2872 = vadd.xlane.f32.xlu0 %v2871
      %v2873 = vpop.xlane.xlu0 %2872
      %v2874 = vrcp.pop %v2870
      %v2875 = vrcp.pop %v2873
      %v2876 = vmul.f32 %v2865, %v2874
      %v2877 = vmul.f32 %v2867, %v2875
      %v2878 = vpack.c.bf16 %v2877, %v2876
      %2880 = vrot.lane.b32.xlu0 %v2760, 96
      %v2881 = vpop.permute.xlu0 %2880
      %v2884 = vsel %vm1644, %v2878, 0
      %2886 = vmatpush.bf16.msra.mxu0 0
      %2887 = vmatpush.bf16.msra.mxu0 0
      %2888 = vmatpush.bf16.msra.mxu0 0
      %2889 = vmatpush.bf16.msra.mxu0 0
      %2890 = vmatpush.bf16.msra.mxu0 0
      %2891 = vmatpush.bf16.msra.mxu0 0
      %2892 = vmatpush.bf16.msra.mxu0 0
      %2893 = vmatpush.bf16.msra.mxu0 %v2881
      %2894 = vmatmul.bf16.gmra.mxu0 %v2884
      %v2895 = vpop.f32.mrf.mxu0
      %v2896 = vadd.f32 0.0, %v2895
      %v2897 = vpop.f32.mrf.mxu0
      %v2898 = vadd.f32 0.0, %v2897
      %2899 = vdwg.mxu0
      %v2900 = vpack.c.bf16 %v2898, %v2896
      %v2905 = vunpack.c.l.b16 %v2746
      %v2906 = vunpack.c.l.b16 %v2747
      %v2907 = vunpack.c.l.b16 %v2748
      %v2908 = vunpack.c.l.b16 %v2749
      %v2909 = vpack.c.b16 %v2906, %v2905
      %v2910 = vpack.c.b16 %v2908, %v2907
      %v2914 = vsel %vm1616, %v2900, 0
      %2916 = vmatpush.bf16.msra.mxu0 0
      %2917 = vmatpush.bf16.msra.mxu0 0
      %2918 = vmatpush.bf16.msra.mxu0 0
      %2919 = vmatpush.bf16.msra.mxu0 0
      %2920 = vmatpush.bf16.msra.mxu0 0
      %2921 = vmatpush.bf16.msra.mxu0 0
      %2922 = vmatpush.bf16.msra.mxu0 %v2910
      %2923 = vmatpush.bf16.msra.mxu0 %v2909
      %2924 = vmatmul.bf16.gmra.mxu0 %v2914
      %v2925 = vpop.f32.mrf.mxu0
      %v2926 = vadd.f32 0.0, %v2925
      %v2927 = vpop.f32.mrf.mxu0
      %v2928 = vadd.f32 0.0, %v2927
      %2929 = vdwg.mxu0
      %v2934 = vunpack.c.l.b16 %v2742
      %v2935 = vunpack.c.l.b16 %v2743
      %v2936 = vunpack.c.l.b16 %v2744
      %v2937 = vunpack.c.l.b16 %v2745
      %v2938 = vpack.c.b16 %v2935, %v2934
      %v2939 = vpack.c.b16 %v2937, %v2936
      %v2943 = vsel %vm1616, %v2825, 0
      %2945 = vmatpush.bf16.msra.mxu0 0
      %2946 = vmatpush.bf16.msra.mxu0 0
      %2947 = vmatpush.bf16.msra.mxu0 0
      %2948 = vmatpush.bf16.msra.mxu0 0
      %2949 = vmatpush.bf16.msra.mxu0 0
      %2950 = vmatpush.bf16.msra.mxu0 0
      %2951 = vmatpush.bf16.msra.mxu0 %v2939
      %2952 = vmatpush.bf16.msra.mxu0 %v2938
      %2953 = vmatmul.bf16.gmra.mxu0 %v2943
      %v2954 = vpop.f32.mrf.mxu0
      %v2955 = vadd.f32 %v2926, %v2954
      %v2956 = vpop.f32.mrf.mxu0
      %v2957 = vadd.f32 %v2928, %v2956
      %2958 = vdwg.mxu0
      %2959 = vrot.lane.b32.xlu0 %v2758, 64
      %v2960 = vpop.permute.xlu0 %2959
      %2961 = vrot.lane.b32.xlu0 %v2759, 64
      %v2962 = vpop.permute.xlu0 %2961
      %v2964 = vsel %vm1616, %v2960, 0
      %v2967 = vsel %vm1616, %v2962, 0
      %2969 = vmatpush.bf16.xpose.msra.mxu0 0
      %2970 = vmatpush.bf16.xpose.msra.mxu0 0
      %2971 = vmatpush.bf16.xpose.msra.mxu0 0
      %2972 = vmatpush.bf16.xpose.msra.mxu0 0
      %2973 = vmatpush.bf16.xpose.msra.mxu0 0
      %2974 = vmatpush.bf16.xpose.msra.mxu0 0
      %2975 = vmatpush.bf16.xpose.msra.mxu0 0
      %2976 = vmatpush.bf16.xpose.msra.mxu0 %v2967
      %2977 = vmatmul.bf16.gmra.mxu0 %v2964
      %v2978 = vpop.f32.mrf.mxu0
      %v2979 = vadd.f32 0.0, %v2978
      %v2980 = vpop.f32.mrf.mxu0
      %v2981 = vadd.f32 0.0, %v2980
      %2982 = vdwg.mxu0
      %v2983 = vmul.f32 %v2979, 0.17677669
      %v2984 = vmul.f32 %v2981, 0.17677669
      %v2985 = vadd.f32 %v2983, %v2740
      %v2986 = vadd.f32 %v2984, %v2741
      %v2987 = vsel %vm1644, %v2985, -inf
      %2988 = vmax.xlane.f32.xlu0 %v2987
      %v2989 = vpop.xlane.xlu0 %2988
      %v2990 = vsel %vm1644, %v2986, -inf
      %2991 = vmax.xlane.f32.xlu0 %v2990
      %v2992 = vpop.xlane.xlu0 %2991
      %v2993 = vsub.f32 %v2985, %v2989
      %v2994 = vsub.f32 %v2986, %v2992
      %v2995 = vmul.f32 %v2993, 1.442695
      %v2996 = vpow.pop %v2995
      %v2997 = vmul.f32 %v2994, 1.442695
      %v2998 = vpow.pop %v2997
      %v2999 = vsel %vm1644, %v2996, 0.0
      %3000 = vadd.xlane.f32.xlu0 %v2999
      %v3001 = vpop.xlane.xlu0 %3000
      %v3002 = vsel %vm1644, %v2998, 0.0
      %3003 = vadd.xlane.f32.xlu0 %v3002
      %v3004 = vpop.xlane.xlu0 %3003
      %v3005 = vrcp.pop %v3001
      %v3006 = vrcp.pop %v3004
      %v3007 = vmul.f32 %v2996, %v3005
      %v3008 = vmul.f32 %v2998, %v3006
      %v3009 = vpack.c.bf16 %v3008, %v3007
      %3010 = vrot.lane.b32.xlu0 %v2760, 64
      %v3011 = vpop.permute.xlu0 %3010
      %v3014 = vsel %vm1644, %v3009, 0
      %3016 = vmatpush.bf16.msra.mxu0 0
      %3017 = vmatpush.bf16.msra.mxu0 0
      %3018 = vmatpush.bf16.msra.mxu0 0
      %3019 = vmatpush.bf16.msra.mxu0 0
      %3020 = vmatpush.bf16.msra.mxu0 0
      %3021 = vmatpush.bf16.msra.mxu0 0
      %3022 = vmatpush.bf16.msra.mxu0 0
      %3023 = vmatpush.bf16.msra.mxu0 %v3011
      %3024 = vmatmul.bf16.gmra.mxu0 %v3014
      %v3025 = vpop.f32.mrf.mxu0
      %v3026 = vadd.f32 0.0, %v3025
      %v3027 = vpop.f32.mrf.mxu0
      %v3028 = vadd.f32 0.0, %v3027
      %3029 = vdwg.mxu0
      %v3030 = vpack.c.bf16 %v3028, %v3026
      %v3035 = vunpack.c.l.b16 %v2750
      %v3036 = vunpack.c.l.b16 %v2751
      %v3037 = vunpack.c.l.b16 %v2752
      %v3038 = vunpack.c.l.b16 %v2753
      %v3039 = vpack.c.b16 %v3036, %v3035
      %v3040 = vpack.c.b16 %v3038, %v3037
      %v3044 = vsel %vm1616, %v3030, 0
      %3046 = vmatpush.bf16.msra.mxu0 0
      %3047 = vmatpush.bf16.msra.mxu0 0
      %3048 = vmatpush.bf16.msra.mxu0 0
      %3049 = vmatpush.bf16.msra.mxu0 0
      %3050 = vmatpush.bf16.msra.mxu0 0
      %3051 = vmatpush.bf16.msra.mxu0 0
      %3052 = vmatpush.bf16.msra.mxu0 %v3040
      %3053 = vmatpush.bf16.msra.mxu0 %v3039
      %3054 = vmatmul.bf16.gmra.mxu0 %v3044
      %v3055 = vpop.f32.mrf.mxu0
      %v3056 = vadd.f32 0.0, %v3055
      %v3057 = vpop.f32.mrf.mxu0
      %v3058 = vadd.f32 0.0, %v3057
      %3059 = vdwg.mxu0
      %v3060 = vadd.f32 %v2955, %v3056
      %v3061 = vadd.f32 %v2957, %v3058
      %3062 = vrot.lane.b32.xlu0 %v2758, 32
      %v3063 = vpop.permute.xlu0 %3062
      %3064 = vrot.lane.b32.xlu0 %v2759, 32
      %v3065 = vpop.permute.xlu0 %3064
      %v3067 = vsel %vm1616, %v3063, 0
      %v3070 = vsel %vm1616, %v3065, 0
      %3072 = vmatpush.bf16.xpose.msra.mxu0 0
      %3073 = vmatpush.bf16.xpose.msra.mxu0 0
      %3074 = vmatpush.bf16.xpose.msra.mxu0 0
      %3075 = vmatpush.bf16.xpose.msra.mxu0 0
      %3076 = vmatpush.bf16.xpose.msra.mxu0 0
      %3077 = vmatpush.bf16.xpose.msra.mxu0 0
      %3078 = vmatpush.bf16.xpose.msra.mxu0 0
      %3079 = vmatpush.bf16.xpose.msra.mxu0 %v3070
      %3080 = vmatmul.bf16.gmra.mxu0 %v3067
      %v3081 = vpop.f32.mrf.mxu0
      %v3082 = vadd.f32 0.0, %v3081
      %v3083 = vpop.f32.mrf.mxu0
      %v3084 = vadd.f32 0.0, %v3083
      %3085 = vdwg.mxu0
      %v3086 = vmul.f32 %v3082, 0.17677669
      %v3087 = vmul.f32 %v3084, 0.17677669
      %v3088 = vadd.f32 %v3086, %v2740
      %v3089 = vadd.f32 %v3087, %v2741
      %v3090 = vsel %vm1644, %v3088, -inf
      %3091 = vmax.xlane.f32.xlu0 %v3090
      %v3092 = vpop.xlane.xlu0 %3091
      %v3093 = vsel %vm1644, %v3089, -inf
      %3094 = vmax.xlane.f32.xlu0 %v3093
      %v3095 = vpop.xlane.xlu0 %3094
      %v3096 = vsub.f32 %v3088, %v3092
      %v3097 = vsub.f32 %v3089, %v3095
      %v3098 = vmul.f32 %v3096, 1.442695
      %v3099 = vpow.pop %v3098
      %v3100 = vmul.f32 %v3097, 1.442695
      %v3101 = vpow.pop %v3100
      %v3102 = vsel %vm1644, %v3099, 0.0
      %3103 = vadd.xlane.f32.xlu0 %v3102
      %v3104 = vpop.xlane.xlu0 %3103
      %v3105 = vsel %vm1644, %v3101, 0.0
      %3106 = vadd.xlane.f32.xlu0 %v3105
      %v3107 = vpop.xlane.xlu0 %3106
      %v3108 = vrcp.pop %v3104
      %v3109 = vrcp.pop %v3107
      %v3110 = vmul.f32 %v3099, %v3108
      %v3111 = vmul.f32 %v3101, %v3109
      %v3112 = vpack.c.bf16 %v3111, %v3110
      %3113 = vrot.lane.b32.xlu0 %v2760, 32
      %v3114 = vpop.permute.xlu0 %3113
      %v3117 = vsel %vm1644, %v3112, 0
      %3119 = vmatpush.bf16.msra.mxu0 0
      %3120 = vmatpush.bf16.msra.mxu0 0
      %3121 = vmatpush.bf16.msra.mxu0 0
      %3122 = vmatpush.bf16.msra.mxu0 0
      %3123 = vmatpush.bf16.msra.mxu0 0
      %3124 = vmatpush.bf16.msra.mxu0 0
      %3125 = vmatpush.bf16.msra.mxu0 0
      %3126 = vmatpush.bf16.msra.mxu0 %v3114
      %3127 = vmatmul.bf16.gmra.mxu0 %v3117
      %v3128 = vpop.f32.mrf.mxu0
      %v3129 = vadd.f32 0.0, %v3128
      %v3130 = vpop.f32.mrf.mxu0
      %v3131 = vadd.f32 0.0, %v3130
      %3132 = vdwg.mxu0
      %v3133 = vpack.c.bf16 %v3131, %v3129
      %v3138 = vunpack.c.l.b16 %v2754
      %v3139 = vunpack.c.l.b16 %v2755
      %v3140 = vunpack.c.l.b16 %v2756
      %v3141 = vunpack.c.l.b16 %v2757
      %v3142 = vpack.c.b16 %v3139, %v3138
      %v3143 = vpack.c.b16 %v3141, %v3140
      %v3147 = vsel %vm1616, %v3133, 0
      %3149 = vmatpush.bf16.msra.mxu0 0
      %3150 = vmatpush.bf16.msra.mxu0 0
      %3151 = vmatpush.bf16.msra.mxu0 0
      %3152 = vmatpush.bf16.msra.mxu0 0
      %3153 = vmatpush.bf16.msra.mxu0 0
      %3154 = vmatpush.bf16.msra.mxu0 0
      %3155 = vmatpush.bf16.msra.mxu0 %v3143
      %3156 = vmatpush.bf16.msra.mxu0 %v3142
      %3157 = vmatmul.bf16.gmra.mxu0 %v3147
      %v3158 = vpop.f32.mrf.mxu0
      %v3159 = vadd.f32 0.0, %v3158
      %v3160 = vpop.f32.mrf.mxu0
      %v3161 = vadd.f32 0.0, %v3160
      %3162 = vdwg.mxu0
      %v3163 = vadd.f32 %v3060, %v3159
      %v3164 = vadd.f32 %v3061, %v3161
      %v3165 = vld [vmem:[%s47] sm:$0x1]
      %v3167 = vperm.slane %v3165, 0
      %v3169 = vadd.f32 %v3163, %v3167
      %v3170 = vadd.f32 %v3164, %v3167
      %v3171 = vadd.f32 %v2520, %v3169
      %v3172 = vadd.f32 %v2521, %v3170
      %v3173 = vld [vmem:[%s49] sm:$0x1]
      %v3174 = vld [vmem:[%s51] sm:$0x1]
      %3175 = vadd.xlane.f32.xlu0 %v3171
      %v3176 = vpop.xlane.xlu0 %3175
      %3177 = vadd.xlane.f32.xlu0 %v3172
      %v3178 = vpop.xlane.xlu0 %3177
      %v3179 = vmul.f32 %v3176, %v1339
      %v3180 = vmul.f32 %v3178, %v1339
      %v3181 = vsub.f32 %v3171, %v3179
      %v3182 = vsub.f32 %v3172, %v3180
      %v3183 = vmul.f32 %v3181, %v3181
      %v3184 = vmul.f32 %v3182, %v3182
      %3185 = vadd.xlane.f32.xlu0 %v3183
      %v3186 = vpop.xlane.xlu0 %3185
      %3187 = vadd.xlane.f32.xlu0 %v3184
      %v3188 = vpop.xlane.xlu0 %3187
      %v3189 = vmul.f32 %v3186, %v1339
      %v3190 = vmul.f32 %v3188, %v1339
      %v3191 = vadd.f32 %v3189, 1e-05
      %v3192 = vadd.f32 %v3190, 1e-05
      %v3193 = vrsqrt.pop %v3191
      %v3194 = vmul.f32 %v3193, %v3191
      %v3195 = vmul.f32 %v3194, %v3193
      %v3196 = vmul.f32 0.5, %v3195
      %v3197 = vsub.f32 1.5, %v3196
      %v3198 = vmul.f32 %v3193, %v3197
      %vm3199 = vweird.f32 %v3191
      %vm3200 = vweird.f32 %v3193
      %vm3201 = vmor %vm3199, %vm3200
      %v3202 = vsel %vm3201, %v3193, %v3198
      %v3203 = vrsqrt.pop %v3192
      %v3204 = vmul.f32 %v3203, %v3192
      %v3205 = vmul.f32 %v3204, %v3203
      %v3206 = vmul.f32 0.5, %v3205
      %v3207 = vsub.f32 1.5, %v3206
      %v3208 = vmul.f32 %v3203, %v3207
      %vm3209 = vweird.f32 %v3192
      %vm3210 = vweird.f32 %v3203
      %vm3211 = vmor %vm3209, %vm3210
      %v3212 = vsel %vm3211, %v3203, %v3208
      %v3213 = vmul.f32 %v3181, %v3202
      %v3214 = vmul.f32 %v3182, %v3212
      %v3216 = vperm.slane %v3173, 0
      %v3218 = vmul.f32 %v3213, %v3216
      %v3219 = vmul.f32 %v3214, %v3216
      %v3221 = vperm.slane %v3174, 0
      %v3223 = vadd.f32 %v3218, %v3221
      %v3224 = vadd.f32 %v3219, %v3221
      %v3225 = vld [vmem:[%s53] sm:$0xf]
      %v3226 = vld [vmem:[%s53 + $0x4] sm:$0xf]
      %v3227 = vld [vmem:[%s53 + $0x8] sm:$0xf]
      %v3228 = vld [vmem:[%s53 + $0xc] sm:$0xf]
      %v3229 = vld [vmem:[%s53 + $0x10] sm:$0xf]
      %v3230 = vld [vmem:[%s53 + $0x14] sm:$0xf]
      %v3231 = vld [vmem:[%s53 + $0x18] sm:$0xf]
      %v3232 = vld [vmem:[%s53 + $0x1c] sm:$0xf]
      %v3233 = vld [vmem:[%s53 + $0x20] sm:$0xf]
      %v3234 = vld [vmem:[%s53 + $0x24] sm:$0xf]
      %v3235 = vld [vmem:[%s53 + $0x28] sm:$0xf]
      %v3236 = vld [vmem:[%s53 + $0x2c] sm:$0xf]
      %v3237 = vld [vmem:[%s53 + $0x30] sm:$0xf]
      %v3238 = vld [vmem:[%s53 + $0x34] sm:$0xf]
      %v3239 = vld [vmem:[%s53 + $0x38] sm:$0xf]
      %v3240 = vld [vmem:[%s53 + $0x3c] sm:$0xf]
      %v3241 = vpack.c.bf16 %v3224, %v3223
      %v3242 = vld [vmem:[%s55] sm:$0x1]
      %v3244 = vperm.slane %v3242, 0
      %v3262 = vunpack.c.l.b16 %v3225
      %v3263 = vunpack.c.l.b16 %v3226
      %v3264 = vunpack.c.l.b16 %v3227
      %v3265 = vunpack.c.l.b16 %v3228
      %v3266 = vunpack.c.l.b16 %v3229
      %v3267 = vunpack.c.l.b16 %v3230
      %v3268 = vunpack.c.l.b16 %v3231
      %v3269 = vunpack.c.l.b16 %v3232
      %v3270 = vunpack.c.l.b16 %v3233
      %v3271 = vunpack.c.l.b16 %v3234
      %v3272 = vunpack.c.l.b16 %v3235
      %v3273 = vunpack.c.l.b16 %v3236
      %v3274 = vunpack.c.l.b16 %v3237
      %v3275 = vunpack.c.l.b16 %v3238
      %v3276 = vunpack.c.l.b16 %v3239
      %v3277 = vunpack.c.l.b16 %v3240
      %v3278 = vpack.c.b16 %v3263, %v3262
      %v3279 = vpack.c.b16 %v3265, %v3264
      %v3280 = vpack.c.b16 %v3267, %v3266
      %v3281 = vpack.c.b16 %v3269, %v3268
      %v3282 = vpack.c.b16 %v3271, %v3270
      %v3283 = vpack.c.b16 %v3273, %v3272
      %v3284 = vpack.c.b16 %v3275, %v3274
      %v3285 = vpack.c.b16 %v3277, %v3276
      %3294 = vmatpush.bf16.msra.mxu0 %v3285
      %3295 = vmatpush.bf16.msra.mxu0 %v3284
      %3296 = vmatpush.bf16.msra.mxu0 %v3283
      %3297 = vmatpush.bf16.msra.mxu0 %v3282
      %3298 = vmatpush.bf16.msra.mxu0 %v3281
      %3299 = vmatpush.bf16.msra.mxu0 %v3280
      %3300 = vmatpush.bf16.msra.mxu0 %v3279
      %3301 = vmatpush.bf16.msra.mxu0 %v3278
      %3302 = vmatmul.bf16.gmra.mxu0 %v3241
      %v3303 = vpop.f32.mrf.mxu0
      %v3304 = vadd.f32 %v3244, %v3303
      %v3305 = vpop.f32.mrf.mxu0
      %v3306 = vadd.f32 %v3244, %v3305
      %3307 = vdwg.mxu0
      %v3308 = vld [vmem:[%s57] sm:$0xff]
      %v3309 = vld [vmem:[%s57 + $0x8] sm:$0xff]
      %v3310 = vld [vmem:[%s57 + $0x10] sm:$0xff]
      %v3311 = vld [vmem:[%s57 + $0x18] sm:$0xff]
      %v3312 = vld [vmem:[%s57 + $0x20] sm:$0xff]
      %v3313 = vld [vmem:[%s57 + $0x28] sm:$0xff]
      %v3314 = vld [vmem:[%s57 + $0x30] sm:$0xff]
      %v3315 = vld [vmem:[%s57 + $0x38] sm:$0xff]
      %v3316 = vld [vmem:[%s57 + $0x40] sm:$0xff]
      %v3317 = vld [vmem:[%s57 + $0x48] sm:$0xff]
      %v3318 = vld [vmem:[%s57 + $0x50] sm:$0xff]
      %v3319 = vld [vmem:[%s57 + $0x58] sm:$0xff]
      %v3320 = vld [vmem:[%s57 + $0x60] sm:$0xff]
      %v3321 = vld [vmem:[%s57 + $0x68] sm:$0xff]
      %v3322 = vld [vmem:[%s57 + $0x70] sm:$0xff]
      %v3323 = vld [vmem:[%s57 + $0x78] sm:$0xff]
      %v3324 = vpack.c.bf16 %v2467, %v2466
      %v3325 = vld [vmem:[%s59] sm:$0x3]
      %v3327 = vperm.slane %v3325, 0
      %v3328 = vperm.slane %v3325, 1
      %v3347 = vunpack.c.l.b16 %v3308
      %v3348 = vunpack.c.h.b16 %v3308
      %v3349 = vunpack.c.l.b16 %v3309
      %v3350 = vunpack.c.h.b16 %v3309
      %v3351 = vunpack.c.l.b16 %v3310
      %v3352 = vunpack.c.h.b16 %v3310
      %v3353 = vunpack.c.l.b16 %v3311
      %v3354 = vunpack.c.h.b16 %v3311
      %v3355 = vunpack.c.l.b16 %v3312
      %v3356 = vunpack.c.h.b16 %v3312
      %v3357 = vunpack.c.l.b16 %v3313
      %v3358 = vunpack.c.h.b16 %v3313
      %v3359 = vunpack.c.l.b16 %v3314
      %v3360 = vunpack.c.h.b16 %v3314
      %v3361 = vunpack.c.l.b16 %v3315
      %v3362 = vunpack.c.h.b16 %v3315
      %v3363 = vunpack.c.l.b16 %v3316
      %v3364 = vunpack.c.h.b16 %v3316
      %v3365 = vunpack.c.l.b16 %v3317
      %v3366 = vunpack.c.h.b16 %v3317
      %v3367 = vunpack.c.l.b16 %v3318
      %v3368 = vunpack.c.h.b16 %v3318
      %v3369 = vunpack.c.l.b16 %v3319
      %v3370 = vunpack.c.h.b16 %v3319
      %v3371 = vunpack.c.l.b16 %v3320
      %v3372 = vunpack.c.h.b16 %v3320
      %v3373 = vunpack.c.l.b16 %v3321
      %v3374 = vunpack.c.h.b16 %v3321
      %v3375 = vunpack.c.l.b16 %v3322
      %v3376 = vunpack.c.h.b16 %v3322
      %v3377 = vunpack.c.l.b16 %v3323
      %v3378 = vunpack.c.h.b16 %v3323
      %v3379 = vpack.c.b16 %v3349, %v3347
      %v3380 = vpack.c.b16 %v3350, %v3348
      %v3381 = vpack.c.b16 %v3353, %v3351
      %v3382 = vpack.c.b16 %v3354, %v3352
      %v3383 = vpack.c.b16 %v3357, %v3355
      %v3384 = vpack.c.b16 %v3358, %v3356
      %v3385 = vpack.c.b16 %v3361, %v3359
      %v3386 = vpack.c.b16 %v3362, %v3360
      %v3387 = vpack.c.b16 %v3365, %v3363
      %v3388 = vpack.c.b16 %v3366, %v3364
      %v3389 = vpack.c.b16 %v3369, %v3367
      %v3390 = vpack.c.b16 %v3370, %v3368
      %v3391 = vpack.c.b16 %v3373, %v3371
      %v3392 = vpack.c.b16 %v3374, %v3372
      %v3393 = vpack.c.b16 %v3377, %v3375
      %v3394 = vpack.c.b16 %v3378, %v3376
      %3411 = vmatpush.bf16.msra.mxu0 %v3393
      %3412 = vmatpush.bf16.msra.mxu0 %v3391
      %3413 = vmatpush.bf16.msra.mxu0 %v3389
      %3414 = vmatpush.bf16.msra.mxu0 %v3387
      %3415 = vmatpush.bf16.msra.mxu0 %v3385
      %3416 = vmatpush.bf16.msra.mxu0 %v3383
      %3417 = vmatpush.bf16.msra.mxu0 %v3381
      %3418 = vmatpush.bf16.msra.mxu0 %v3379
      %3419 = vmatmul.bf16.gmra.mxu0 %v3324
      %v3420 = vpop.f32.mrf.mxu0
      %v3421 = vadd.f32 %v3327, %v3420
      %v3422 = vpop.f32.mrf.mxu0
      %v3423 = vadd.f32 %v3327, %v3422
      %3424 = vdwg.mxu0
      %3425 = vmatpush.bf16.msra.mxu0 %v3394
      %3426 = vmatpush.bf16.msra.mxu0 %v3392
      %3427 = vmatpush.bf16.msra.mxu0 %v3390
      %3428 = vmatpush.bf16.msra.mxu0 %v3388
      %3429 = vmatpush.bf16.msra.mxu0 %v3386
      %3430 = vmatpush.bf16.msra.mxu0 %v3384
      %3431 = vmatpush.bf16.msra.mxu0 %v3382
      %3432 = vmatpush.bf16.msra.mxu0 %v3380
      %3433 = vmatmul.bf16.gmra.mxu0 %v3324
      %v3434 = vpop.f32.mrf.mxu0
      %v3435 = vadd.f32 %v3328, %v3434
      %v3436 = vpop.f32.mrf.mxu0
      %v3437 = vadd.f32 %v3328, %v3436
      %3438 = vdwg.mxu0
      %v3439 = vld [vmem:[%s61] sm:$0xf]
      %v3440 = vld [vmem:[%s61 + $0x4] sm:$0xf]
      %v3441 = vld [vmem:[%s61 + $0x8] sm:$0xf]
      %v3442 = vld [vmem:[%s61 + $0xc] sm:$0xf]
      %v3443 = vld [vmem:[%s61 + $0x10] sm:$0xf]
      %v3444 = vld [vmem:[%s61 + $0x14] sm:$0xf]
      %v3445 = vld [vmem:[%s61 + $0x18] sm:$0xf]
      %v3446 = vld [vmem:[%s61 + $0x1c] sm:$0xf]
      %v3447 = vld [vmem:[%s61 + $0x20] sm:$0xf]
      %v3448 = vld [vmem:[%s61 + $0x24] sm:$0xf]
      %v3449 = vld [vmem:[%s61 + $0x28] sm:$0xf]
      %v3450 = vld [vmem:[%s61 + $0x2c] sm:$0xf]
      %v3451 = vld [vmem:[%s61 + $0x30] sm:$0xf]
      %v3452 = vld [vmem:[%s61 + $0x34] sm:$0xf]
      %v3453 = vld [vmem:[%s61 + $0x38] sm:$0xf]
      %v3454 = vld [vmem:[%s61 + $0x3c] sm:$0xf]
      %v3455 = vpack.c.bf16 %v3306, %v3304
      %v3456 = vpack.c.bf16 %v3423, %v3421
      %v3457 = vpack.c.bf16 %v3437, %v3435
      %v3459 = vsel %vm1616, %v3455, 0
      %v3462 = vsel %vm1616, %v3456, 0
      %3464 = vmatpush.bf16.xpose.msra.mxu0 0
      %3465 = vmatpush.bf16.xpose.msra.mxu0 0
      %3466 = vmatpush.bf16.xpose.msra.mxu0 0
      %3467 = vmatpush.bf16.xpose.msra.mxu0 0
      %3468 = vmatpush.bf16.xpose.msra.mxu0 0
      %3469 = vmatpush.bf16.xpose.msra.mxu0 0
      %3470 = vmatpush.bf16.xpose.msra.mxu0 0
      %3471 = vmatpush.bf16.xpose.msra.mxu0 %v3462
      %3472 = vmatmul.bf16.gmra.mxu0 %v3459
      %v3473 = vpop.f32.mrf.mxu0
      %v3474 = vadd.f32 0.0, %v3473
      %v3475 = vpop.f32.mrf.mxu0
      %v3476 = vadd.f32 0.0, %v3475
      %3477 = vdwg.mxu0
      %v3478 = vmul.f32 %v3474, 0.17677669
      %v3479 = vmul.f32 %v3476, 0.17677669
      %v3480 = vadd.f32 %v3478, %v1640
      %v3481 = vadd.f32 %v3479, %v1640
      %v3482 = vsel %vm1644, %v3480, -inf
      %3483 = vmax.xlane.f32.xlu0 %v3482
      %v3484 = vpop.xlane.xlu0 %3483
      %v3485 = vsel %vm1644, %v3481, -inf
      %3486 = vmax.xlane.f32.xlu0 %v3485
      %v3487 = vpop.xlane.xlu0 %3486
      %v3488 = vsub.f32 %v3480, %v3484
      %v3489 = vsub.f32 %v3481, %v3487
      %v3490 = vmul.f32 %v3488, 1.442695
      %v3491 = vpow.pop %v3490
      %v3492 = vmul.f32 %v3489, 1.442695
      %v3493 = vpow.pop %v3492
      %v3494 = vsel %vm1644, %v3491, 0.0
      %3495 = vadd.xlane.f32.xlu0 %v3494
      %v3496 = vpop.xlane.xlu0 %3495
      %v3497 = vsel %vm1644, %v3493, 0.0
      %3498 = vadd.xlane.f32.xlu0 %v3497
      %v3499 = vpop.xlane.xlu0 %3498
      %v3500 = vrcp.pop %v3496
      %v3501 = vrcp.pop %v3499
      %v3502 = vmul.f32 %v3491, %v3500
      %v3503 = vmul.f32 %v3493, %v3501
      %v3504 = vpack.c.bf16 %v3503, %v3502
      %v3506 = vsel %vm1644, %v3504, 0
      %3508 = vmatpush.bf16.msra.mxu0 0
      %3509 = vmatpush.bf16.msra.mxu0 0
      %3510 = vmatpush.bf16.msra.mxu0 0
      %3511 = vmatpush.bf16.msra.mxu0 0
      %3512 = vmatpush.bf16.msra.mxu0 0
      %3513 = vmatpush.bf16.msra.mxu0 0
      %3514 = vmatpush.bf16.msra.mxu0 0
      %3515 = vmatpush.bf16.msra.mxu0 %v3457
      %3516 = vmatmul.bf16.gmra.mxu0 %v3506
      %v3517 = vpop.f32.mrf.mxu0
      %v3518 = vadd.f32 0.0, %v3517
      %v3519 = vpop.f32.mrf.mxu0
      %v3520 = vadd.f32 0.0, %v3519
      %3521 = vdwg.mxu0
      %v3522 = vpack.c.bf16 %v3520, %v3518
      %3524 = vrot.lane.b32.xlu0 %v3455, 96
      %v3525 = vpop.permute.xlu0 %3524
      %3527 = vrot.lane.b32.xlu0 %v3456, 96
      %v3528 = vpop.permute.xlu0 %3527
      %v3530 = vsel %vm1616, %v3525, 0
      %v3533 = vsel %vm1616, %v3528, 0
      %3535 = vmatpush.bf16.xpose.msra.mxu0 0
      %3536 = vmatpush.bf16.xpose.msra.mxu0 0
      %3537 = vmatpush.bf16.xpose.msra.mxu0 0
      %3538 = vmatpush.bf16.xpose.msra.mxu0 0
      %3539 = vmatpush.bf16.xpose.msra.mxu0 0
      %3540 = vmatpush.bf16.xpose.msra.mxu0 0
      %3541 = vmatpush.bf16.xpose.msra.mxu0 0
      %3542 = vmatpush.bf16.xpose.msra.mxu0 %v3533
      %3543 = vmatmul.bf16.gmra.mxu0 %v3530
      %v3544 = vpop.f32.mrf.mxu0
      %v3545 = vadd.f32 0.0, %v3544
      %v3546 = vpop.f32.mrf.mxu0
      %v3547 = vadd.f32 0.0, %v3546
      %3548 = vdwg.mxu0
      %v3549 = vmul.f32 %v3545, 0.17677669
      %v3550 = vmul.f32 %v3547, 0.17677669
      %v3551 = vadd.f32 %v3549, %v1640
      %v3552 = vadd.f32 %v3550, %v1640
      %v3553 = vsel %vm1644, %v3551, -inf
      %3554 = vmax.xlane.f32.xlu0 %v3553
      %v3555 = vpop.xlane.xlu0 %3554
      %v3556 = vsel %vm1644, %v3552, -inf
      %3557 = vmax.xlane.f32.xlu0 %v3556
      %v3558 = vpop.xlane.xlu0 %3557
      %v3559 = vsub.f32 %v3551, %v3555
      %v3560 = vsub.f32 %v3552, %v3558
      %v3561 = vmul.f32 %v3559, 1.442695
      %v3562 = vpow.pop %v3561
      %v3563 = vmul.f32 %v3560, 1.442695
      %v3564 = vpow.pop %v3563
      %v3565 = vsel %vm1644, %v3562, 0.0
      %3566 = vadd.xlane.f32.xlu0 %v3565
      %v3567 = vpop.xlane.xlu0 %3566
      %v3568 = vsel %vm1644, %v3564, 0.0
      %3569 = vadd.xlane.f32.xlu0 %v3568
      %v3570 = vpop.xlane.xlu0 %3569
      %v3571 = vrcp.pop %v3567
      %v3572 = vrcp.pop %v3570
      %v3573 = vmul.f32 %v3562, %v3571
      %v3574 = vmul.f32 %v3564, %v3572
      %v3575 = vpack.c.bf16 %v3574, %v3573
      %3577 = vrot.lane.b32.xlu0 %v3457, 96
      %v3578 = vpop.permute.xlu0 %3577
      %v3581 = vsel %vm1644, %v3575, 0
      %3583 = vmatpush.bf16.msra.mxu0 0
      %3584 = vmatpush.bf16.msra.mxu0 0
      %3585 = vmatpush.bf16.msra.mxu0 0
      %3586 = vmatpush.bf16.msra.mxu0 0
      %3587 = vmatpush.bf16.msra.mxu0 0
      %3588 = vmatpush.bf16.msra.mxu0 0
      %3589 = vmatpush.bf16.msra.mxu0 0
      %3590 = vmatpush.bf16.msra.mxu0 %v3578
      %3591 = vmatmul.bf16.gmra.mxu0 %v3581
      %v3592 = vpop.f32.mrf.mxu0
      %v3593 = vadd.f32 0.0, %v3592
      %v3594 = vpop.f32.mrf.mxu0
      %v3595 = vadd.f32 0.0, %v3594
      %3596 = vdwg.mxu0
      %v3597 = vpack.c.bf16 %v3595, %v3593
      %v3602 = vunpack.c.l.b16 %v3443
      %v3603 = vunpack.c.l.b16 %v3444
      %v3604 = vunpack.c.l.b16 %v3445
      %v3605 = vunpack.c.l.b16 %v3446
      %v3606 = vpack.c.b16 %v3603, %v3602
      %v3607 = vpack.c.b16 %v3605, %v3604
      %v3611 = vsel %vm1616, %v3597, 0
      %3613 = vmatpush.bf16.msra.mxu0 0
      %3614 = vmatpush.bf16.msra.mxu0 0
      %3615 = vmatpush.bf16.msra.mxu0 0
      %3616 = vmatpush.bf16.msra.mxu0 0
      %3617 = vmatpush.bf16.msra.mxu0 0
      %3618 = vmatpush.bf16.msra.mxu0 0
      %3619 = vmatpush.bf16.msra.mxu0 %v3607
      %3620 = vmatpush.bf16.msra.mxu0 %v3606
      %3621 = vmatmul.bf16.gmra.mxu0 %v3611
      %v3622 = vpop.f32.mrf.mxu0
      %v3623 = vadd.f32 0.0, %v3622
      %v3624 = vpop.f32.mrf.mxu0
      %v3625 = vadd.f32 0.0, %v3624
      %3626 = vdwg.mxu0
      %v3631 = vunpack.c.l.b16 %v3439
      %v3632 = vunpack.c.l.b16 %v3440
      %v3633 = vunpack.c.l.b16 %v3441
      %v3634 = vunpack.c.l.b16 %v3442
      %v3635 = vpack.c.b16 %v3632, %v3631
      %v3636 = vpack.c.b16 %v3634, %v3633
      %v3640 = vsel %vm1616, %v3522, 0
      %3642 = vmatpush.bf16.msra.mxu0 0
      %3643 = vmatpush.bf16.msra.mxu0 0
      %3644 = vmatpush.bf16.msra.mxu0 0
      %3645 = vmatpush.bf16.msra.mxu0 0
      %3646 = vmatpush.bf16.msra.mxu0 0
      %3647 = vmatpush.bf16.msra.mxu0 0
      %3648 = vmatpush.bf16.msra.mxu0 %v3636
      %3649 = vmatpush.bf16.msra.mxu0 %v3635
      %3650 = vmatmul.bf16.gmra.mxu0 %v3640
      %v3651 = vpop.f32.mrf.mxu0
      %v3652 = vadd.f32 %v3623, %v3651
      %v3653 = vpop.f32.mrf.mxu0
      %v3654 = vadd.f32 %v3625, %v3653
      %3655 = vdwg.mxu0
      %3656 = vrot.lane.b32.xlu0 %v3455, 64
      %v3657 = vpop.permute.xlu0 %3656
      %3658 = vrot.lane.b32.xlu0 %v3456, 64
      %v3659 = vpop.permute.xlu0 %3658
      %v3661 = vsel %vm1616, %v3657, 0
      %v3664 = vsel %vm1616, %v3659, 0
      %3666 = vmatpush.bf16.xpose.msra.mxu0 0
      %3667 = vmatpush.bf16.xpose.msra.mxu0 0
      %3668 = vmatpush.bf16.xpose.msra.mxu0 0
      %3669 = vmatpush.bf16.xpose.msra.mxu0 0
      %3670 = vmatpush.bf16.xpose.msra.mxu0 0
      %3671 = vmatpush.bf16.xpose.msra.mxu0 0
      %3672 = vmatpush.bf16.xpose.msra.mxu0 0
      %3673 = vmatpush.bf16.xpose.msra.mxu0 %v3664
      %3674 = vmatmul.bf16.gmra.mxu0 %v3661
      %v3675 = vpop.f32.mrf.mxu0
      %v3676 = vadd.f32 0.0, %v3675
      %v3677 = vpop.f32.mrf.mxu0
      %v3678 = vadd.f32 0.0, %v3677
      %3679 = vdwg.mxu0
      %v3680 = vmul.f32 %v3676, 0.17677669
      %v3681 = vmul.f32 %v3678, 0.17677669
      %v3682 = vadd.f32 %v3680, %v1640
      %v3683 = vadd.f32 %v3681, %v1640
      %v3684 = vsel %vm1644, %v3682, -inf
      %3685 = vmax.xlane.f32.xlu0 %v3684
      %v3686 = vpop.xlane.xlu0 %3685
      %v3687 = vsel %vm1644, %v3683, -inf
      %3688 = vmax.xlane.f32.xlu0 %v3687
      %v3689 = vpop.xlane.xlu0 %3688
      %v3690 = vsub.f32 %v3682, %v3686
      %v3691 = vsub.f32 %v3683, %v3689
      %v3692 = vmul.f32 %v3690, 1.442695
      %v3693 = vpow.pop %v3692
      %v3694 = vmul.f32 %v3691, 1.442695
      %v3695 = vpow.pop %v3694
      %v3696 = vsel %vm1644, %v3693, 0.0
      %3697 = vadd.xlane.f32.xlu0 %v3696
      %v3698 = vpop.xlane.xlu0 %3697
      %v3699 = vsel %vm1644, %v3695, 0.0
      %3700 = vadd.xlane.f32.xlu0 %v3699
      %v3701 = vpop.xlane.xlu0 %3700
      %v3702 = vrcp.pop %v3698
      %v3703 = vrcp.pop %v3701
      %v3704 = vmul.f32 %v3693, %v3702
      %v3705 = vmul.f32 %v3695, %v3703
      %v3706 = vpack.c.bf16 %v3705, %v3704
      %3707 = vrot.lane.b32.xlu0 %v3457, 64
      %v3708 = vpop.permute.xlu0 %3707
      %v3711 = vsel %vm1644, %v3706, 0
      %3713 = vmatpush.bf16.msra.mxu0 0
      %3714 = vmatpush.bf16.msra.mxu0 0
      %3715 = vmatpush.bf16.msra.mxu0 0
      %3716 = vmatpush.bf16.msra.mxu0 0
      %3717 = vmatpush.bf16.msra.mxu0 0
      %3718 = vmatpush.bf16.msra.mxu0 0
      %3719 = vmatpush.bf16.msra.mxu0 0
      %3720 = vmatpush.bf16.msra.mxu0 %v3708
      %3721 = vmatmul.bf16.gmra.mxu0 %v3711
      %v3722 = vpop.f32.mrf.mxu0
      %v3723 = vadd.f32 0.0, %v3722
      %v3724 = vpop.f32.mrf.mxu0
      %v3725 = vadd.f32 0.0, %v3724
      %3726 = vdwg.mxu0
      %v3727 = vpack.c.bf16 %v3725, %v3723
      %v3732 = vunpack.c.l.b16 %v3447
      %v3733 = vunpack.c.l.b16 %v3448
      %v3734 = vunpack.c.l.b16 %v3449
      %v3735 = vunpack.c.l.b16 %v3450
      %v3736 = vpack.c.b16 %v3733, %v3732
      %v3737 = vpack.c.b16 %v3735, %v3734
      %v3741 = vsel %vm1616, %v3727, 0
      %3743 = vmatpush.bf16.msra.mxu0 0
      %3744 = vmatpush.bf16.msra.mxu0 0
      %3745 = vmatpush.bf16.msra.mxu0 0
      %3746 = vmatpush.bf16.msra.mxu0 0
      %3747 = vmatpush.bf16.msra.mxu0 0
      %3748 = vmatpush.bf16.msra.mxu0 0
      %3749 = vmatpush.bf16.msra.mxu0 %v3737
      %3750 = vmatpush.bf16.msra.mxu0 %v3736
      %3751 = vmatmul.bf16.gmra.mxu0 %v3741
      %v3752 = vpop.f32.mrf.mxu0
      %v3753 = vadd.f32 0.0, %v3752
      %v3754 = vpop.f32.mrf.mxu0
      %v3755 = vadd.f32 0.0, %v3754
      %3756 = vdwg.mxu0
      %v3757 = vadd.f32 %v3652, %v3753
      %v3758 = vadd.f32 %v3654, %v3755
      %3759 = vrot.lane.b32.xlu0 %v3455, 32
      %v3760 = vpop.permute.xlu0 %3759
      %3761 = vrot.lane.b32.xlu0 %v3456, 32
      %v3762 = vpop.permute.xlu0 %3761
      %v3764 = vsel %vm1616, %v3760, 0
      %v3767 = vsel %vm1616, %v3762, 0
      %3769 = vmatpush.bf16.xpose.msra.mxu0 0
      %3770 = vmatpush.bf16.xpose.msra.mxu0 0
      %3771 = vmatpush.bf16.xpose.msra.mxu0 0
      %3772 = vmatpush.bf16.xpose.msra.mxu0 0
      %3773 = vmatpush.bf16.xpose.msra.mxu0 0
      %3774 = vmatpush.bf16.xpose.msra.mxu0 0
      %3775 = vmatpush.bf16.xpose.msra.mxu0 0
      %3776 = vmatpush.bf16.xpose.msra.mxu0 %v3767
      %3777 = vmatmul.bf16.gmra.mxu0 %v3764
      %v3778 = vpop.f32.mrf.mxu0
      %v3779 = vadd.f32 0.0, %v3778
      %v3780 = vpop.f32.mrf.mxu0
      %v3781 = vadd.f32 0.0, %v3780
      %3782 = vdwg.mxu0
      %v3783 = vmul.f32 %v3779, 0.17677669
      %v3784 = vmul.f32 %v3781, 0.17677669
      %v3785 = vadd.f32 %v3783, %v1640
      %v3786 = vadd.f32 %v3784, %v1640
      %v3787 = vsel %vm1644, %v3785, -inf
      %3788 = vmax.xlane.f32.xlu0 %v3787
      %v3789 = vpop.xlane.xlu0 %3788
      %v3790 = vsel %vm1644, %v3786, -inf
      %3791 = vmax.xlane.f32.xlu0 %v3790
      %v3792 = vpop.xlane.xlu0 %3791
      %v3793 = vsub.f32 %v3785, %v3789
      %v3794 = vsub.f32 %v3786, %v3792
      %v3795 = vmul.f32 %v3793, 1.442695
      %v3796 = vpow.pop %v3795
      %v3797 = vmul.f32 %v3794, 1.442695
      %v3798 = vpow.pop %v3797
      %v3799 = vsel %vm1644, %v3796, 0.0
      %3800 = vadd.xlane.f32.xlu0 %v3799
      %v3801 = vpop.xlane.xlu0 %3800
      %v3802 = vsel %vm1644, %v3798, 0.0
      %3803 = vadd.xlane.f32.xlu0 %v3802
      %v3804 = vpop.xlane.xlu0 %3803
      %v3805 = vrcp.pop %v3801
      %v3806 = vrcp.pop %v3804
      %v3807 = vmul.f32 %v3796, %v3805
      %v3808 = vmul.f32 %v3798, %v3806
      %v3809 = vpack.c.bf16 %v3808, %v3807
      %3810 = vrot.lane.b32.xlu0 %v3457, 32
      %v3811 = vpop.permute.xlu0 %3810
      %v3814 = vsel %vm1644, %v3809, 0
      %3816 = vmatpush.bf16.msra.mxu0 0
      %3817 = vmatpush.bf16.msra.mxu0 0
      %3818 = vmatpush.bf16.msra.mxu0 0
      %3819 = vmatpush.bf16.msra.mxu0 0
      %3820 = vmatpush.bf16.msra.mxu0 0
      %3821 = vmatpush.bf16.msra.mxu0 0
      %3822 = vmatpush.bf16.msra.mxu0 0
      %3823 = vmatpush.bf16.msra.mxu0 %v3811
      %3824 = vmatmul.bf16.gmra.mxu0 %v3814
      %v3825 = vpop.f32.mrf.mxu0
      %v3826 = vadd.f32 0.0, %v3825
      %v3827 = vpop.f32.mrf.mxu0
      %v3828 = vadd.f32 0.0, %v3827
      %3829 = vdwg.mxu0
      %v3830 = vpack.c.bf16 %v3828, %v3826
      %v3835 = vunpack.c.l.b16 %v3451
      %v3836 = vunpack.c.l.b16 %v3452
      %v3837 = vunpack.c.l.b16 %v3453
      %v3838 = vunpack.c.l.b16 %v3454
      %v3839 = vpack.c.b16 %v3836, %v3835
      %v3840 = vpack.c.b16 %v3838, %v3837
      %v3844 = vsel %vm1616, %v3830, 0
      %3846 = vmatpush.bf16.msra.mxu0 0
      %3847 = vmatpush.bf16.msra.mxu0 0
      %3848 = vmatpush.bf16.msra.mxu0 0
      %3849 = vmatpush.bf16.msra.mxu0 0
      %3850 = vmatpush.bf16.msra.mxu0 0
      %3851 = vmatpush.bf16.msra.mxu0 0
      %3852 = vmatpush.bf16.msra.mxu0 %v3840
      %3853 = vmatpush.bf16.msra.mxu0 %v3839
      %3854 = vmatmul.bf16.gmra.mxu0 %v3844
      %v3855 = vpop.f32.mrf.mxu0
      %v3856 = vadd.f32 0.0, %v3855
      %v3857 = vpop.f32.mrf.mxu0
      %v3858 = vadd.f32 0.0, %v3857
      %3859 = vdwg.mxu0
      %v3860 = vadd.f32 %v3757, %v3856
      %v3861 = vadd.f32 %v3758, %v3858
      %v3862 = vld [vmem:[%s63] sm:$0x1]
      %v3864 = vperm.slane %v3862, 0
      %v3866 = vadd.f32 %v3860, %v3864
      %v3867 = vadd.f32 %v3861, %v3864
      %v3868 = vadd.f32 %v3223, %v3866
      %v3869 = vadd.f32 %v3224, %v3867
      %v3870 = vld [vmem:[%s65] sm:$0x1]
      %v3871 = vld [vmem:[%s67] sm:$0x1]
      %3872 = vadd.xlane.f32.xlu0 %v3868
      %v3873 = vpop.xlane.xlu0 %3872
      %3874 = vadd.xlane.f32.xlu0 %v3869
      %v3875 = vpop.xlane.xlu0 %3874
      %v3876 = vmul.f32 %v3873, %v1339
      %v3877 = vmul.f32 %v3875, %v1339
      %v3878 = vsub.f32 %v3868, %v3876
      %v3879 = vsub.f32 %v3869, %v3877
      %v3880 = vmul.f32 %v3878, %v3878
      %v3881 = vmul.f32 %v3879, %v3879
      %3882 = vadd.xlane.f32.xlu0 %v3880
      %v3883 = vpop.xlane.xlu0 %3882
      %3884 = vadd.xlane.f32.xlu0 %v3881
      %v3885 = vpop.xlane.xlu0 %3884
      %v3886 = vmul.f32 %v3883, %v1339
      %v3887 = vmul.f32 %v3885, %v1339
      %v3888 = vadd.f32 %v3886, 1e-05
      %v3889 = vadd.f32 %v3887, 1e-05
      %v3890 = vrsqrt.pop %v3888
      %v3891 = vmul.f32 %v3890, %v3888
      %v3892 = vmul.f32 %v3891, %v3890
      %v3893 = vmul.f32 0.5, %v3892
      %v3894 = vsub.f32 1.5, %v3893
      %v3895 = vmul.f32 %v3890, %v3894
      %vm3896 = vweird.f32 %v3888
      %vm3897 = vweird.f32 %v3890
      %vm3898 = vmor %vm3896, %vm3897
      %v3899 = vsel %vm3898, %v3890, %v3895
      %v3900 = vrsqrt.pop %v3889
      %v3901 = vmul.f32 %v3900, %v3889
      %v3902 = vmul.f32 %v3901, %v3900
      %v3903 = vmul.f32 0.5, %v3902
      %v3904 = vsub.f32 1.5, %v3903
      %v3905 = vmul.f32 %v3900, %v3904
      %vm3906 = vweird.f32 %v3889
      %vm3907 = vweird.f32 %v3900
      %vm3908 = vmor %vm3906, %vm3907
      %v3909 = vsel %vm3908, %v3900, %v3905
      %v3910 = vmul.f32 %v3878, %v3899
      %v3911 = vmul.f32 %v3879, %v3909
      %v3913 = vperm.slane %v3870, 0
      %v3915 = vmul.f32 %v3910, %v3913
      %v3916 = vmul.f32 %v3911, %v3913
      %v3918 = vperm.slane %v3871, 0
      %v3920 = vadd.f32 %v3915, %v3918
      %v3921 = vadd.f32 %v3916, %v3918
      %v3922 = vld [vmem:[%s69] sm:$0xff]
      %v3923 = vld [vmem:[%s69 + $0x8] sm:$0xff]
      %v3924 = vld [vmem:[%s69 + $0x10] sm:$0xff]
      %v3925 = vld [vmem:[%s69 + $0x18] sm:$0xff]
      %v3926 = vld [vmem:[%s69 + $0x20] sm:$0xff]
      %v3927 = vld [vmem:[%s69 + $0x28] sm:$0xff]
      %v3928 = vld [vmem:[%s69 + $0x30] sm:$0xff]
      %v3929 = vld [vmem:[%s69 + $0x38] sm:$0xff]
      %v3930 = vld [vmem:[%s69 + $0x40] sm:$0xff]
      %v3931 = vld [vmem:[%s69 + $0x48] sm:$0xff]
      %v3932 = vld [vmem:[%s69 + $0x50] sm:$0xff]
      %v3933 = vld [vmem:[%s69 + $0x58] sm:$0xff]
      %v3934 = vld [vmem:[%s69 + $0x60] sm:$0xff]
      %v3935 = vld [vmem:[%s69 + $0x68] sm:$0xff]
      %v3936 = vld [vmem:[%s69 + $0x70] sm:$0xff]
      %v3937 = vld [vmem:[%s69 + $0x78] sm:$0xff]
      %v3938 = vpack.c.bf16 %v3921, %v3920
      %v3939 = vld [vmem:[%s71] sm:$0x3]
      %v3941 = vperm.slane %v3939, 0
      %v3942 = vperm.slane %v3939, 1
      %v3961 = vunpack.c.l.b16 %v3922
      %v3962 = vunpack.c.h.b16 %v3922
      %v3963 = vunpack.c.l.b16 %v3923
      %v3964 = vunpack.c.h.b16 %v3923
      %v3965 = vunpack.c.l.b16 %v3924
      %v3966 = vunpack.c.h.b16 %v3924
      %v3967 = vunpack.c.l.b16 %v3925
      %v3968 = vunpack.c.h.b16 %v3925
      %v3969 = vunpack.c.l.b16 %v3926
      %v3970 = vunpack.c.h.b16 %v3926
      %v3971 = vunpack.c.l.b16 %v3927
      %v3972 = vunpack.c.h.b16 %v3927
      %v3973 = vunpack.c.l.b16 %v3928
      %v3974 = vunpack.c.h.b16 %v3928
      %v3975 = vunpack.c.l.b16 %v3929
      %v3976 = vunpack.c.h.b16 %v3929
      %v3977 = vunpack.c.l.b16 %v3930
      %v3978 = vunpack.c.h.b16 %v3930
      %v3979 = vunpack.c.l.b16 %v3931
      %v3980 = vunpack.c.h.b16 %v3931
      %v3981 = vunpack.c.l.b16 %v3932
      %v3982 = vunpack.c.h.b16 %v3932
      %v3983 = vunpack.c.l.b16 %v3933
      %v3984 = vunpack.c.h.b16 %v3933
      %v3985 = vunpack.c.l.b16 %v3934
      %v3986 = vunpack.c.h.b16 %v3934
      %v3987 = vunpack.c.l.b16 %v3935
      %v3988 = vunpack.c.h.b16 %v3935
      %v3989 = vunpack.c.l.b16 %v3936
      %v3990 = vunpack.c.h.b16 %v3936
      %v3991 = vunpack.c.l.b16 %v3937
      %v3992 = vunpack.c.h.b16 %v3937
      %v3993 = vpack.c.b16 %v3963, %v3961
      %v3994 = vpack.c.b16 %v3964, %v3962
      %v3995 = vpack.c.b16 %v3967, %v3965
      %v3996 = vpack.c.b16 %v3968, %v3966
      %v3997 = vpack.c.b16 %v3971, %v3969
      %v3998 = vpack.c.b16 %v3972, %v3970
      %v3999 = vpack.c.b16 %v3975, %v3973
      %v4000 = vpack.c.b16 %v3976, %v3974
      %v4001 = vpack.c.b16 %v3979, %v3977
      %v4002 = vpack.c.b16 %v3980, %v3978
      %v4003 = vpack.c.b16 %v3983, %v3981
      %v4004 = vpack.c.b16 %v3984, %v3982
      %v4005 = vpack.c.b16 %v3987, %v3985
      %v4006 = vpack.c.b16 %v3988, %v3986
      %v4007 = vpack.c.b16 %v3991, %v3989
      %v4008 = vpack.c.b16 %v3992, %v3990
      %4025 = vmatpush.bf16.msra.mxu0 %v4007
      %4026 = vmatpush.bf16.msra.mxu0 %v4005
      %4027 = vmatpush.bf16.msra.mxu0 %v4003
      %4028 = vmatpush.bf16.msra.mxu0 %v4001
      %4029 = vmatpush.bf16.msra.mxu0 %v3999
      %4030 = vmatpush.bf16.msra.mxu0 %v3997
      %4031 = vmatpush.bf16.msra.mxu0 %v3995
      %4032 = vmatpush.bf16.msra.mxu0 %v3993
      %4033 = vmatmul.bf16.gmra.mxu0 %v3938
      %v4034 = vpop.f32.mrf.mxu0
      %v4035 = vadd.f32 %v3941, %v4034
      %v4036 = vpop.f32.mrf.mxu0
      %v4037 = vadd.f32 %v3941, %v4036
      %4038 = vdwg.mxu0
      %4039 = vmatpush.bf16.msra.mxu0 %v4008
      %4040 = vmatpush.bf16.msra.mxu0 %v4006
      %4041 = vmatpush.bf16.msra.mxu0 %v4004
      %4042 = vmatpush.bf16.msra.mxu0 %v4002
      %4043 = vmatpush.bf16.msra.mxu0 %v4000
      %4044 = vmatpush.bf16.msra.mxu0 %v3998
      %4045 = vmatpush.bf16.msra.mxu0 %v3996
      %4046 = vmatpush.bf16.msra.mxu0 %v3994
      %4047 = vmatmul.bf16.gmra.mxu0 %v3938
      %v4048 = vpop.f32.mrf.mxu0
      %v4049 = vadd.f32 %v3942, %v4048
      %v4050 = vpop.f32.mrf.mxu0
      %v4051 = vadd.f32 %v3942, %v4050
      %4052 = vdwg.mxu0
      %v4053 = vmul.f32 %v4035, %v4035
      %v4054 = vmul.f32 %v4049, %v4049
      %v4055 = vmul.f32 %v4037, %v4037
      %v4056 = vmul.f32 %v4051, %v4051
      %v4057 = vmul.f32 %v4035, %v4053
      %v4058 = vmul.f32 %v4049, %v4054
      %v4059 = vmul.f32 %v4037, %v4055
      %v4060 = vmul.f32 %v4051, %v4056
      %v4061 = vmul.f32 %v4057, 0.044715
      %v4062 = vmul.f32 %v4058, 0.044715
      %v4063 = vmul.f32 %v4059, 0.044715
      %v4064 = vmul.f32 %v4060, 0.044715
      %v4065 = vadd.f32 %v4035, %v4061
      %v4066 = vadd.f32 %v4049, %v4062
      %v4067 = vadd.f32 %v4037, %v4063
      %v4068 = vadd.f32 %v4051, %v4064
      %v4069 = vmul.f32 %v4065, 0.7978846
      %v4070 = vmul.f32 %v4066, 0.7978846
      %v4071 = vmul.f32 %v4067, 0.7978846
      %v4072 = vmul.f32 %v4068, 0.7978846
      %v4073 = vtanh.pop %v4069
      %v4074 = vtanh.pop %v4070
      %v4075 = vtanh.pop %v4071
      %v4076 = vtanh.pop %v4072
      %v4077 = vadd.f32 %v4073, 1.0
      %v4078 = vadd.f32 %v4074, 1.0
      %v4079 = vadd.f32 %v4075, 1.0
      %v4080 = vadd.f32 %v4076, 1.0
      %v4081 = vmul.f32 %v4077, 0.5
      %v4082 = vmul.f32 %v4078, 0.5
      %v4083 = vmul.f32 %v4079, 0.5
      %v4084 = vmul.f32 %v4080, 0.5
      %v4085 = vmul.f32 %v4035, %v4081
      %v4086 = vmul.f32 %v4049, %v4082
      %v4087 = vmul.f32 %v4037, %v4083
      %v4088 = vmul.f32 %v4051, %v4084
      %v4089 = vld [vmem:[%s73] sm:$0xf]
      %v4090 = vld [vmem:[%s73 + $0x4] sm:$0xf]
      %v4091 = vld [vmem:[%s73 + $0x8] sm:$0xf]
      %v4092 = vld [vmem:[%s73 + $0xc] sm:$0xf]
      %v4093 = vld [vmem:[%s73 + $0x10] sm:$0xf]
      %v4094 = vld [vmem:[%s73 + $0x14] sm:$0xf]
      %v4095 = vld [vmem:[%s73 + $0x18] sm:$0xf]
      %v4096 = vld [vmem:[%s73 + $0x1c] sm:$0xf]
      %v4097 = vld [vmem:[%s73 + $0x20] sm:$0xf]
      %v4098 = vld [vmem:[%s73 + $0x24] sm:$0xf]
      %v4099 = vld [vmem:[%s73 + $0x28] sm:$0xf]
      %v4100 = vld [vmem:[%s73 + $0x2c] sm:$0xf]
      %v4101 = vld [vmem:[%s73 + $0x30] sm:$0xf]
      %v4102 = vld [vmem:[%s73 + $0x34] sm:$0xf]
      %v4103 = vld [vmem:[%s73 + $0x38] sm:$0xf]
      %v4104 = vld [vmem:[%s73 + $0x3c] sm:$0xf]
      %v4105 = vld [vmem:[%s73 + $0x40] sm:$0xf]
      %v4106 = vld [vmem:[%s73 + $0x44] sm:$0xf]
      %v4107 = vld [vmem:[%s73 + $0x48] sm:$0xf]
      %v4108 = vld [vmem:[%s73 + $0x4c] sm:$0xf]
      %v4109 = vld [vmem:[%s73 + $0x50] sm:$0xf]
      %v4110 = vld [vmem:[%s73 + $0x54] sm:$0xf]
      %v4111 = vld [vmem:[%s73 + $0x58] sm:$0xf]
      %v4112 = vld [vmem:[%s73 + $0x5c] sm:$0xf]
      %v4113 = vld [vmem:[%s73 + $0x60] sm:$0xf]
      %v4114 = vld [vmem:[%s73 + $0x64] sm:$0xf]
      %v4115 = vld [vmem:[%s73 + $0x68] sm:$0xf]
      %v4116 = vld [vmem:[%s73 + $0x6c] sm:$0xf]
      %v4117 = vld [vmem:[%s73 + $0x70] sm:$0xf]
      %v4118 = vld [vmem:[%s73 + $0x74] sm:$0xf]
      %v4119 = vld [vmem:[%s73 + $0x78] sm:$0xf]
      %v4120 = vld [vmem:[%s73 + $0x7c] sm:$0xf]
      %v4121 = vpack.c.bf16 %v4087, %v4085
      %v4122 = vpack.c.bf16 %v4088, %v4086
      %v4123 = vld [vmem:[%s75] sm:$0x1]
      %v4125 = vperm.slane %v4123, 0
      %v4159 = vunpack.c.l.b16 %v4089
      %v4160 = vunpack.c.l.b16 %v4090
      %v4161 = vunpack.c.l.b16 %v4091
      %v4162 = vunpack.c.l.b16 %v4092
      %v4163 = vunpack.c.l.b16 %v4093
      %v4164 = vunpack.c.l.b16 %v4094
      %v4165 = vunpack.c.l.b16 %v4095
      %v4166 = vunpack.c.l.b16 %v4096
      %v4167 = vunpack.c.l.b16 %v4097
      %v4168 = vunpack.c.l.b16 %v4098
      %v4169 = vunpack.c.l.b16 %v4099
      %v4170 = vunpack.c.l.b16 %v4100
      %v4171 = vunpack.c.l.b16 %v4101
      %v4172 = vunpack.c.l.b16 %v4102
      %v4173 = vunpack.c.l.b16 %v4103
      %v4174 = vunpack.c.l.b16 %v4104
      %v4175 = vunpack.c.l.b16 %v4105
      %v4176 = vunpack.c.l.b16 %v4106
      %v4177 = vunpack.c.l.b16 %v4107
      %v4178 = vunpack.c.l.b16 %v4108
      %v4179 = vunpack.c.l.b16 %v4109
      %v4180 = vunpack.c.l.b16 %v4110
      %v4181 = vunpack.c.l.b16 %v4111
      %v4182 = vunpack.c.l.b16 %v4112
      %v4183 = vunpack.c.l.b16 %v4113
      %v4184 = vunpack.c.l.b16 %v4114
      %v4185 = vunpack.c.l.b16 %v4115
      %v4186 = vunpack.c.l.b16 %v4116
      %v4187 = vunpack.c.l.b16 %v4117
      %v4188 = vunpack.c.l.b16 %v4118
      %v4189 = vunpack.c.l.b16 %v4119
      %v4190 = vunpack.c.l.b16 %v4120
      %v4191 = vpack.c.b16 %v4160, %v4159
      %v4192 = vpack.c.b16 %v4162, %v4161
      %v4193 = vpack.c.b16 %v4164, %v4163
      %v4194 = vpack.c.b16 %v4166, %v4165
      %v4195 = vpack.c.b16 %v4168, %v4167
      %v4196 = vpack.c.b16 %v4170, %v4169
      %v4197 = vpack.c.b16 %v4172, %v4171
      %v4198 = vpack.c.b16 %v4174, %v4173
      %v4199 = vpack.c.b16 %v4176, %v4175
      %v4200 = vpack.c.b16 %v4178, %v4177
      %v4201 = vpack.c.b16 %v4180, %v4179
      %v4202 = vpack.c.b16 %v4182, %v4181
      %v4203 = vpack.c.b16 %v4184, %v4183
      %v4204 = vpack.c.b16 %v4186, %v4185
      %v4205 = vpack.c.b16 %v4188, %v4187
      %v4206 = vpack.c.b16 %v4190, %v4189
      %4223 = vmatpush.bf16.msra.mxu0 %v4198
      %4224 = vmatpush.bf16.msra.mxu0 %v4197
      %4225 = vmatpush.bf16.msra.mxu0 %v4196
      %4226 = vmatpush.bf16.msra.mxu0 %v4195
      %4227 = vmatpush.bf16.msra.mxu0 %v4194
      %4228 = vmatpush.bf16.msra.mxu0 %v4193
      %4229 = vmatpush.bf16.msra.mxu0 %v4192
      %4230 = vmatpush.bf16.msra.mxu0 %v4191
      %4231 = vmatmul.bf16.gmra.mxu0 %v4121
      %v4232 = vpop.f32.mrf.mxu0
      %v4233 = vadd.f32 %v4125, %v4232
      %v4234 = vpop.f32.mrf.mxu0
      %v4235 = vadd.f32 %v4125, %v4234
      %4236 = vdwg.mxu0
      %4237 = vmatpush.bf16.msra.mxu0 %v4206
      %4238 = vmatpush.bf16.msra.mxu0 %v4205
      %4239 = vmatpush.bf16.msra.mxu0 %v4204
      %4240 = vmatpush.bf16.msra.mxu0 %v4203
      %4241 = vmatpush.bf16.msra.mxu0 %v4202
      %4242 = vmatpush.bf16.msra.mxu0 %v4201
      %4243 = vmatpush.bf16.msra.mxu0 %v4200
      %4244 = vmatpush.bf16.msra.mxu0 %v4199
      %4245 = vmatmul.bf16.gmra.mxu0 %v4122
      %v4246 = vpop.f32.mrf.mxu0
      %v4247 = vadd.f32 %v4233, %v4246
      %v4248 = vpop.f32.mrf.mxu0
      %v4249 = vadd.f32 %v4235, %v4248
      %4250 = vdwg.mxu0
      %v4251 = vadd.f32 %v3920, %v4247
      %v4252 = vadd.f32 %v3921, %v4249
      %v4253 = vld [vmem:[%s77] sm:$0x1]
      %v4254 = vld [vmem:[%s79] sm:$0x1]
      %4255 = vadd.xlane.f32.xlu0 %v4251
      %v4256 = vpop.xlane.xlu0 %4255
      %4257 = vadd.xlane.f32.xlu0 %v4252
      %v4258 = vpop.xlane.xlu0 %4257
      %v4259 = vmul.f32 %v4256, %v1339
      %v4260 = vmul.f32 %v4258, %v1339
      %v4261 = vsub.f32 %v4251, %v4259
      %v4262 = vsub.f32 %v4252, %v4260
      %v4263 = vmul.f32 %v4261, %v4261
      %v4264 = vmul.f32 %v4262, %v4262
      %4265 = vadd.xlane.f32.xlu0 %v4263
      %v4266 = vpop.xlane.xlu0 %4265
      %4267 = vadd.xlane.f32.xlu0 %v4264
      %v4268 = vpop.xlane.xlu0 %4267
      %v4269 = vmul.f32 %v4266, %v1339
      %v4270 = vmul.f32 %v4268, %v1339
      %v4271 = vadd.f32 %v4269, 1e-05
      %v4272 = vadd.f32 %v4270, 1e-05
      %v4273 = vrsqrt.pop %v4271
      %v4274 = vmul.f32 %v4273, %v4271
      %v4275 = vmul.f32 %v4274, %v4273
      %v4276 = vmul.f32 0.5, %v4275
      %v4277 = vsub.f32 1.5, %v4276
      %v4278 = vmul.f32 %v4273, %v4277
      %vm4279 = vweird.f32 %v4271
      %vm4280 = vweird.f32 %v4273
      %vm4281 = vmor %vm4279, %vm4280
      %v4282 = vsel %vm4281, %v4273, %v4278
      %v4283 = vrsqrt.pop %v4272
      %v4284 = vmul.f32 %v4283, %v4272
      %v4285 = vmul.f32 %v4284, %v4283
      %v4286 = vmul.f32 0.5, %v4285
      %v4287 = vsub.f32 1.5, %v4286
      %v4288 = vmul.f32 %v4283, %v4287
      %vm4289 = vweird.f32 %v4272
      %vm4290 = vweird.f32 %v4283
      %vm4291 = vmor %vm4289, %vm4290
      %v4292 = vsel %vm4291, %v4283, %v4288
      %v4293 = vmul.f32 %v4261, %v4282
      %v4294 = vmul.f32 %v4262, %v4292
      %v4296 = vperm.slane %v4253, 0
      %v4298 = vmul.f32 %v4293, %v4296
      %v4299 = vmul.f32 %v4294, %v4296
      %v4301 = vperm.slane %v4254, 0
      %v4303 = vadd.f32 %v4298, %v4301
      %v4304 = vadd.f32 %v4299, %v4301
      %v4305 = vpack.c.bf16 %v4304, %v4303
      %v4306 = vld [vmem:[%s81] sm:$0xf]
      %v4307 = vld [vmem:[%s81 + $0x4] sm:$0xf]
      %v4308 = vld [vmem:[%s81 + $0x8] sm:$0xf]
      %v4309 = vld [vmem:[%s81 + $0xc] sm:$0xf]
      %v4310 = vld [vmem:[%s81 + $0x10] sm:$0xf]
      %v4311 = vld [vmem:[%s81 + $0x14] sm:$0xf]
      %v4312 = vld [vmem:[%s81 + $0x18] sm:$0xf]
      %v4313 = vld [vmem:[%s81 + $0x1c] sm:$0xf]
      %v4314 = vld [vmem:[%s81 + $0x20] sm:$0xf]
      %v4315 = vld [vmem:[%s81 + $0x24] sm:$0xf]
      %v4316 = vld [vmem:[%s81 + $0x28] sm:$0xf]
      %v4317 = vld [vmem:[%s81 + $0x2c] sm:$0xf]
      %v4318 = vld [vmem:[%s81 + $0x30] sm:$0xf]
      %v4319 = vld [vmem:[%s81 + $0x34] sm:$0xf]
      %v4320 = vld [vmem:[%s81 + $0x38] sm:$0xf]
      %v4321 = vld [vmem:[%s81 + $0x3c] sm:$0xf]
      %v4322 = vld [vmem:[%s81 + $0x40] sm:$0xf]
      %v4323 = vld [vmem:[%s81 + $0x44] sm:$0xf]
      %v4324 = vld [vmem:[%s81 + $0x48] sm:$0xf]
      %v4325 = vld [vmem:[%s81 + $0x4c] sm:$0xf]
      %v4326 = vld [vmem:[%s81 + $0x50] sm:$0xf]
      %v4327 = vld [vmem:[%s81 + $0x54] sm:$0xf]
      %v4328 = vld [vmem:[%s81 + $0x58] sm:$0xf]
      %v4329 = vld [vmem:[%s81 + $0x5c] sm:$0xf]
      %v4330 = vld [vmem:[%s81 + $0x60] sm:$0xf]
      %v4331 = vld [vmem:[%s81 + $0x64] sm:$0xf]
      %v4332 = vld [vmem:[%s81 + $0x68] sm:$0xf]
      %v4333 = vld [vmem:[%s81 + $0x6c] sm:$0xf]
      %v4334 = vld [vmem:[%s81 + $0x70] sm:$0xf]
      %v4335 = vld [vmem:[%s81 + $0x74] sm:$0xf]
      %v4336 = vld [vmem:[%s81 + $0x78] sm:$0xf]
      %v4337 = vld [vmem:[%s81 + $0x7c] sm:$0xf]
      %v4338 = vld [vmem:[%s81 + $0x80] sm:$0xf]
      %v4339 = vld [vmem:[%s81 + $0x84] sm:$0xf]
      %v4340 = vld [vmem:[%s81 + $0x88] sm:$0xf]
      %v4341 = vld [vmem:[%s81 + $0x8c] sm:$0xf]
      %v4342 = vld [vmem:[%s81 + $0x90] sm:$0xf]
      %v4343 = vld [vmem:[%s81 + $0x94] sm:$0xf]
      %v4344 = vld [vmem:[%s81 + $0x98] sm:$0xf]
      %v4345 = vld [vmem:[%s81 + $0x9c] sm:$0xf]
      %v4346 = vld [vmem:[%s81 + $0xa0] sm:$0xf]
      %v4347 = vld [vmem:[%s81 + $0xa4] sm:$0xf]
      %v4348 = vld [vmem:[%s81 + $0xa8] sm:$0xf]
      %v4349 = vld [vmem:[%s81 + $0xac] sm:$0xf]
      %v4350 = vld [vmem:[%s81 + $0xb0] sm:$0xf]
      %v4351 = vld [vmem:[%s81 + $0xb4] sm:$0xf]
      %v4352 = vld [vmem:[%s81 + $0xb8] sm:$0xf]
      %v4353 = vld [vmem:[%s81 + $0xbc] sm:$0xf]
      %v4354 = vld [vmem:[%s81 + $0xc0] sm:$0xf]
      %v4355 = vld [vmem:[%s81 + $0xc4] sm:$0xf]
      %v4356 = vld [vmem:[%s81 + $0xc8] sm:$0xf]
      %v4357 = vld [vmem:[%s81 + $0xcc] sm:$0xf]
      %v4358 = vld [vmem:[%s81 + $0xd0] sm:$0xf]
      %v4359 = vld [vmem:[%s81 + $0xd4] sm:$0xf]
      %v4360 = vld [vmem:[%s81 + $0xd8] sm:$0xf]
      %v4361 = vld [vmem:[%s81 + $0xdc] sm:$0xf]
      %v4362 = vld [vmem:[%s81 + $0xe0] sm:$0xf]
      %v4363 = vld [vmem:[%s81 + $0xe4] sm:$0xf]
      %v4364 = vld [vmem:[%s81 + $0xe8] sm:$0xf]
      %v4365 = vld [vmem:[%s81 + $0xec] sm:$0xf]
      %v4366 = vld [vmem:[%s81 + $0xf0] sm:$0xf]
      %v4367 = vld [vmem:[%s81 + $0xf4] sm:$0xf]
      %v4368 = vld [vmem:[%s81 + $0xf8] sm:$0xf]
      %v4369 = vld [vmem:[%s81 + $0xfc] sm:$0xf]
      %v4370 = vld [vmem:[%s83] sm:$0xf]
      %v4372 = vperm.slane %v4370, 0
      %v4373 = vperm.slane %v4370, 1
      %v4374 = vperm.slane %v4370, 2
      %v4375 = vperm.slane %v4370, 3
      %v4444 = vunpack.c.l.b16 %v4306
      %v4445 = vunpack.c.l.b16 %v4307
      %v4446 = vunpack.c.l.b16 %v4308
      %v4447 = vunpack.c.l.b16 %v4309
      %v4448 = vunpack.c.l.b16 %v4310
      %v4449 = vunpack.c.l.b16 %v4311
      %v4450 = vunpack.c.l.b16 %v4312
      %v4451 = vunpack.c.l.b16 %v4313
      %v4452 = vunpack.c.l.b16 %v4314
      %v4453 = vunpack.c.l.b16 %v4315
      %v4454 = vunpack.c.l.b16 %v4316
      %v4455 = vunpack.c.l.b16 %v4317
      %v4456 = vunpack.c.l.b16 %v4318
      %v4457 = vunpack.c.l.b16 %v4319
      %v4458 = vunpack.c.l.b16 %v4320
      %v4459 = vunpack.c.l.b16 %v4321
      %v4460 = vunpack.c.l.b16 %v4322
      %v4461 = vunpack.c.l.b16 %v4323
      %v4462 = vunpack.c.l.b16 %v4324
      %v4463 = vunpack.c.l.b16 %v4325
      %v4464 = vunpack.c.l.b16 %v4326
      %v4465 = vunpack.c.l.b16 %v4327
      %v4466 = vunpack.c.l.b16 %v4328
      %v4467 = vunpack.c.l.b16 %v4329
      %v4468 = vunpack.c.l.b16 %v4330
      %v4469 = vunpack.c.l.b16 %v4331
      %v4470 = vunpack.c.l.b16 %v4332
      %v4471 = vunpack.c.l.b16 %v4333
      %v4472 = vunpack.c.l.b16 %v4334
      %v4473 = vunpack.c.l.b16 %v4335
      %v4474 = vunpack.c.l.b16 %v4336
      %v4475 = vunpack.c.l.b16 %v4337
      %v4476 = vunpack.c.l.b16 %v4338
      %v4477 = vunpack.c.l.b16 %v4339
      %v4478 = vunpack.c.l.b16 %v4340
      %v4479 = vunpack.c.l.b16 %v4341
      %v4480 = vunpack.c.l.b16 %v4342
      %v4481 = vunpack.c.l.b16 %v4343
      %v4482 = vunpack.c.l.b16 %v4344
      %v4483 = vunpack.c.l.b16 %v4345
      %v4484 = vunpack.c.l.b16 %v4346
      %v4485 = vunpack.c.l.b16 %v4347
      %v4486 = vunpack.c.l.b16 %v4348
      %v4487 = vunpack.c.l.b16 %v4349
      %v4488 = vunpack.c.l.b16 %v4350
      %v4489 = vunpack.c.l.b16 %v4351
      %v4490 = vunpack.c.l.b16 %v4352
      %v4491 = vunpack.c.l.b16 %v4353
      %v4492 = vunpack.c.l.b16 %v4354
      %v4493 = vunpack.c.l.b16 %v4355
      %v4494 = vunpack.c.l.b16 %v4356
      %v4495 = vunpack.c.l.b16 %v4357
      %v4496 = vunpack.c.l.b16 %v4358
      %v4497 = vunpack.c.l.b16 %v4359
      %v4498 = vunpack.c.l.b16 %v4360
      %v4499 = vunpack.c.l.b16 %v4361
      %v4500 = vunpack.c.l.b16 %v4362
      %v4501 = vunpack.c.l.b16 %v4363
      %v4502 = vunpack.c.l.b16 %v4364
      %v4503 = vunpack.c.l.b16 %v4365
      %v4504 = vunpack.c.l.b16 %v4366
      %v4505 = vunpack.c.l.b16 %v4367
      %v4506 = vunpack.c.l.b16 %v4368
      %v4507 = vunpack.c.l.b16 %v4369
      %v4508 = vpack.c.b16 %v4445, %v4444
      %v4509 = vpack.c.b16 %v4447, %v4446
      %v4510 = vpack.c.b16 %v4449, %v4448
      %v4511 = vpack.c.b16 %v4451, %v4450
      %v4512 = vpack.c.b16 %v4453, %v4452
      %v4513 = vpack.c.b16 %v4455, %v4454
      %v4514 = vpack.c.b16 %v4457, %v4456
      %v4515 = vpack.c.b16 %v4459, %v4458
      %v4516 = vpack.c.b16 %v4461, %v4460
      %v4517 = vpack.c.b16 %v4463, %v4462
      %v4518 = vpack.c.b16 %v4465, %v4464
      %v4519 = vpack.c.b16 %v4467, %v4466
      %v4520 = vpack.c.b16 %v4469, %v4468
      %v4521 = vpack.c.b16 %v4471, %v4470
      %v4522 = vpack.c.b16 %v4473, %v4472
      %v4523 = vpack.c.b16 %v4475, %v4474
      %v4524 = vpack.c.b16 %v4477, %v4476
      %v4525 = vpack.c.b16 %v4479, %v4478
      %v4526 = vpack.c.b16 %v4481, %v4480
      %v4527 = vpack.c.b16 %v4483, %v4482
      %v4528 = vpack.c.b16 %v4485, %v4484
      %v4529 = vpack.c.b16 %v4487, %v4486
      %v4530 = vpack.c.b16 %v4489, %v4488
      %v4531 = vpack.c.b16 %v4491, %v4490
      %v4532 = vpack.c.b16 %v4493, %v4492
      %v4533 = vpack.c.b16 %v4495, %v4494
      %v4534 = vpack.c.b16 %v4497, %v4496
      %v4535 = vpack.c.b16 %v4499, %v4498
      %v4536 = vpack.c.b16 %v4501, %v4500
      %v4537 = vpack.c.b16 %v4503, %v4502
      %v4538 = vpack.c.b16 %v4505, %v4504
      %v4539 = vpack.c.b16 %v4507, %v4506
      %4572 = vmatpush.bf16.xpose.msra.mxu0 %v4515
      %4573 = vmatpush.bf16.xpose.msra.mxu0 %v4514
      %4574 = vmatpush.bf16.xpose.msra.mxu0 %v4513
      %4575 = vmatpush.bf16.xpose.msra.mxu0 %v4512
      %4576 = vmatpush.bf16.xpose.msra.mxu0 %v4511
      %4577 = vmatpush.bf16.xpose.msra.mxu0 %v4510
      %4578 = vmatpush.bf16.xpose.msra.mxu0 %v4509
      %4579 = vmatpush.bf16.xpose.msra.mxu0 %v4508
      %4580 = vmatmul.bf16.gmra.mxu0 %v4305
      %v4581 = vpop.f32.mrf.mxu0
      %v4582 = vadd.f32 %v4372, %v4581
      %v4583 = vpop.f32.mrf.mxu0
      %v4584 = vadd.f32 %v4372, %v4583
      %4585 = vdwg.mxu0
      %4586 = vmatpush.bf16.xpose.msra.mxu0 %v4523
      %4587 = vmatpush.bf16.xpose.msra.mxu0 %v4522
      %4588 = vmatpush.bf16.xpose.msra.mxu0 %v4521
      %4589 = vmatpush.bf16.xpose.msra.mxu0 %v4520
      %4590 = vmatpush.bf16.xpose.msra.mxu0 %v4519
      %4591 = vmatpush.bf16.xpose.msra.mxu0 %v4518
      %4592 = vmatpush.bf16.xpose.msra.mxu0 %v4517
      %4593 = vmatpush.bf16.xpose.msra.mxu0 %v4516
      %4594 = vmatmul.bf16.gmra.mxu0 %v4305
      %v4595 = vpop.f32.mrf.mxu0
      %v4596 = vadd.f32 %v4373, %v4595
      %v4597 = vpop.f32.mrf.mxu0
      %v4598 = vadd.f32 %v4373, %v4597
      %4599 = vdwg.mxu0
      %4600 = vmatpush.bf16.xpose.msra.mxu0 %v4531
      %4601 = vmatpush.bf16.xpose.msra.mxu0 %v4530
      %4602 = vmatpush.bf16.xpose.msra.mxu0 %v4529
      %4603 = vmatpush.bf16.xpose.msra.mxu0 %v4528
      %4604 = vmatpush.bf16.xpose.msra.mxu0 %v4527
      %4605 = vmatpush.bf16.xpose.msra.mxu0 %v4526
      %4606 = vmatpush.bf16.xpose.msra.mxu0 %v4525
      %4607 = vmatpush.bf16.xpose.msra.mxu0 %v4524
      %4608 = vmatmul.bf16.gmra.mxu0 %v4305
      %v4609 = vpop.f32.mrf.mxu0
      %v4610 = vadd.f32 %v4374, %v4609
      %v4611 = vpop.f32.mrf.mxu0
      %v4612 = vadd.f32 %v4374, %v4611
      %4613 = vdwg.mxu0
      %4614 = vmatpush.bf16.xpose.msra.mxu0 %v4539
      %4615 = vmatpush.bf16.xpose.msra.mxu0 %v4538
      %4616 = vmatpush.bf16.xpose.msra.mxu0 %v4537
      %4617 = vmatpush.bf16.xpose.msra.mxu0 %v4536
      %4618 = vmatpush.bf16.xpose.msra.mxu0 %v4535
      %4619 = vmatpush.bf16.xpose.msra.mxu0 %v4534
      %4620 = vmatpush.bf16.xpose.msra.mxu0 %v4533
      %4621 = vmatpush.bf16.xpose.msra.mxu0 %v4532
      %4622 = vmatmul.bf16.gmra.mxu0 %v4305
      %v4623 = vpop.f32.mrf.mxu0
      %v4624 = vadd.f32 %v4375, %v4623
      %v4625 = vpop.f32.mrf.mxu0
      %v4626 = vadd.f32 %v4375, %v4625
      %4627 = vdwg.mxu0
      %v4628 = vmax.f32 %v4582, %v4610
      %v4629 = vmax.f32 %v4596, %v4624
      %v4630 = vmax.f32 %v4628, %v4629
      %4631 = vmax.xlane.f32.xlu0 %v4630
      %v4632 = vpop.xlane.xlu0 %4631
      %v4633 = vmax.f32 %v4584, %v4612
      %v4634 = vmax.f32 %v4598, %v4626
      %v4635 = vmax.f32 %v4633, %v4634
      %4636 = vmax.xlane.f32.xlu0 %v4635
      %v4637 = vpop.xlane.xlu0 %4636
      %v4638 = vsub.f32 %v4582, %v4632
      %v4639 = vsub.f32 %v4596, %v4632
      %v4640 = vsub.f32 %v4610, %v4632
      %v4641 = vsub.f32 %v4624, %v4632
      %v4642 = vsub.f32 %v4584, %v4637
      %v4643 = vsub.f32 %v4598, %v4637
      %v4644 = vsub.f32 %v4612, %v4637
      %v4645 = vsub.f32 %v4626, %v4637
      %v4646 = vmul.f32 %v4638, 1.442695
      %v4647 = vpow.pop %v4646
      %v4648 = vmul.f32 %v4639, 1.442695
      %v4649 = vpow.pop %v4648
      %v4650 = vmul.f32 %v4640, 1.442695
      %v4651 = vpow.pop %v4650
      %v4652 = vmul.f32 %v4641, 1.442695
      %v4653 = vpow.pop %v4652
      %v4654 = vmul.f32 %v4642, 1.442695
      %v4655 = vpow.pop %v4654
      %v4656 = vmul.f32 %v4643, 1.442695
      %v4657 = vpow.pop %v4656
      %v4658 = vmul.f32 %v4644, 1.442695
      %v4659 = vpow.pop %v4658
      %v4660 = vmul.f32 %v4645, 1.442695
      %v4661 = vpow.pop %v4660
      %v4662 = vadd.f32 %v4647, %v4649
      %v4663 = vadd.f32 %v4662, %v4651
      %v4664 = vadd.f32 %v4663, %v4653
      %4665 = vadd.xlane.f32.xlu0 %v4664
      %v4666 = vpop.xlane.xlu0 %4665
      %v4667 = vadd.f32 %v4655, %v4657
      %v4668 = vadd.f32 %v4667, %v4659
      %v4669 = vadd.f32 %v4668, %v4661
      %4670 = vadd.xlane.f32.xlu0 %v4669
      %v4671 = vpop.xlane.xlu0 %4670
      %v4672 = vlog2.pop %v4666
      %v4673 = vmul.f32 %v4672, 0.6931472
      %v4674 = vlog2.pop %v4671
      %v4675 = vmul.f32 %v4674, 0.6931472
      %v4676 = vadd.f32 %v4632, %v4673
      %v4677 = vadd.f32 %v4637, %v4675
      %v4678 = vld [vmem:[%s1315] sm:$0xff]
      %v4679 = vld [vmem:[%s1315 + $0x8] sm:$0xff]
      %v4680 = vadd.s32 %v2737, 128
      %v4681 = vadd.s32 %v2737, 256
      %v4682 = vadd.s32 %v2737, 384
      %4683 = vset.pattern.permute.xlu0 0
      %4684 = vperm.xlu0 %4683, %v4678
      %v4685 = vpop.permute.xlu0 %4684
      %4686 = vset.pattern.permute.xlu0 0
      %4687 = vperm.xlu0 %4686, %v4679
      %v4688 = vpop.permute.xlu0 %4687
      %vm4689 = vcmp.eq.s32.totalorder %v2737, %v4685
      %vm4690 = vcmp.eq.s32.totalorder %v4680, %v4685
      %vm4691 = vcmp.eq.s32.totalorder %v4681, %v4685
      %vm4692 = vcmp.eq.s32.totalorder %v4682, %v4685
      %vm4693 = vcmp.eq.s32.totalorder %v2737, %v4688
      %vm4694 = vcmp.eq.s32.totalorder %v4680, %v4688
      %vm4695 = vcmp.eq.s32.totalorder %v4681, %v4688
      %vm4696 = vcmp.eq.s32.totalorder %v4682, %v4688
      %v4697 = vsel %vm4689, %v4582, 0.0
      %v4698 = vsel %vm4690, %v4596, 0.0
      %v4699 = vsel %vm4691, %v4610, 0.0
      %v4700 = vsel %vm4692, %v4624, 0.0
      %v4701 = vsel %vm4693, %v4584, 0.0
      %v4702 = vsel %vm4694, %v4598, 0.0
      %v4703 = vsel %vm4695, %v4612, 0.0
      %v4704 = vsel %vm4696, %v4626, 0.0
      %v4705 = vadd.f32 %v4697, %v4698
      %v4706 = vadd.f32 %v4705, %v4699
      %v4707 = vadd.f32 %v4706, %v4700
      %4708 = vadd.xlane.f32.xlu0 %v4707
      %v4709 = vpop.xlane.xlu0 %4708
      %v4710 = vadd.f32 %v4701, %v4702
      %v4711 = vadd.f32 %v4710, %v4703
      %v4712 = vadd.f32 %v4711, %v4704
      %4713 = vadd.xlane.f32.xlu0 %v4712
      %v4714 = vpop.xlane.xlu0 %4713
      %vm4715 = vcmp.ne.s32.totalorder %v4678, 4294967196
      %vm4716 = vcmp.ne.s32.totalorder %v4679, 4294967196
      %v4717 = vsel %vm4715, 1, 0
      %v4718 = vsel %vm4716, 1, 0
      %v4719 = vcvt.s32.f32 %v4717
      %v4720 = vcvt.s32.f32 %v4718
      %v4721 = vsub.f32 %v4676, %v4709
      %v4722 = vsub.f32 %v4677, %v4714
      %v4723 = vmul.f32 %v4721, %v4719
      %v4724 = vmul.f32 %v4722, %v4720
      %vm4725 = vcmask 7168
      %4726 = vst.msk [vmem:[%s1320] sm:$0xff] %vm4725, %v4723
      %4727 = vst.msk [vmem:[%s1320 + $0x8] sm:$0xff] %vm4725, %v4724
      %p4728 = scmp.lt.s32.totalorder %s96, 1
      %s4729 = scalar_select %p4728, %s96, 1
      %s4730 = smul.addr %s4729, 2
      %s4731 = smul.addr %s4730, 8
      %s4732 = scalar_lea.vmem %s85, %s4731
      // Predicated region
      $region189: #{bart_forward_loss.1} parent=187 // pred_check
        %p4733 = pneg %p1016
      $region190: #{bart_forward_loss.1} parent=187 // pred_check_branch
        %4735 = sbr.rel (%p4733) target = $region192
      $region191: #{bart_forward_loss.1} parent=187 // pred_region
        _
      $region192: #{bart_forward_loss.1} parent=187 // pred_fallthru
        _
    $region188: #{bart_forward_loss.1} parent=5 // pred_fallthru
      _
    %p4736 = scmp.le.s32.totalorder 2, %s91
    // Predicated region
    $region193: #{bart_forward_loss.1} parent=5 // pred_check
      %p4737 = pneg %p4736
    $region194: #{bart_forward_loss.1} parent=5 // pred_check_branch
      %4739 = sbr.rel (%p4737) target = $region196
    $region195: #{bart_forward_loss.1} parent=5 // pred_region
      %s4740 = ssub.s32 %s91, 2
      // Predicated region
      $region197: #{bart_forward_loss.1} parent=195 // pred_check
        %p4741 = pneg %p1022
      $region198: #{bart_forward_loss.1} parent=195 // pred_check_branch
        %4743 = sbr.rel (%p4741) target = $region200
      $region199: #{bart_forward_loss.1} parent=195 // pred_region
        %p4744 = scmp.lt.s32.totalorder %s97, 1
        %s4745 = scalar_select %p4744, %s97, 1
        %s4746 = smul.addr %s4745, 2
        %s4747 = smul.addr %s4746, 8
        %s4748 = scalar_lea.vmem %s85, %s4747
      $region200: #{bart_forward_loss.1} parent=195 // pred_fallthru
        _
    $region196: #{bart_forward_loss.1} parent=5 // pred_fallthru
      _
  $region6: #{bart_forward_loss.1} parent=0 // loop_footer
    %s95 = sadd.s32 1, %s91
  $region7: #{bart_forward_loss.1} parent=0 // loop_footer_branch
    %90 = sbr.rel target = $region3
  $region8: #{bart_forward_loss.1} parent=0 // loop_exit
    _

</llo_original>
